<compile_context>
chip_gen: v7x
topology: tpu7x:2x2x1
jax: 0.10.0
libtpu: 0.0.40
codegen_flags: <defaults>
</compile_context>

<pallas_src>
import functools

import jax
import jax.numpy as jnp
from jax import lax
from jax.experimental import pallas as pl
from jax.experimental.pallas import tpu as pltpu


# -----------------------------------------------------------------------------
# Fused kernel: one (image, group) stream per grid step.
#   expansion 1x1 GPConv + BN + Swish
#   -> mixed depthwise KxK conv + BN + Swish      (K depends on the group)
#   -> SE (reference bug: x * global-average-pool(x))
#   -> projection 1x1 GPConv + BN + residual add
# -----------------------------------------------------------------------------
def _mixblock_kernel(x_ref, wexp_ref, b1s_ref, b1b_ref, wdw_ref, b2s_ref,
                     b2b_ref, wpoi_ref, b3s_ref, b3b_ref, o_ref,
                     hp_ref, dw_ref, *, kernel_sizes, H, W, pad_flat,
                     compute_dtype):
    HW = H * W
    sub_hid = hp_ref.shape[0]

    # ---- expansion GPConv(1x1) + folded BN + Swish --------------------------
    x = x_ref[0]                                              # (sub_in, HW) f32
    h = jnp.dot(wexp_ref[...], x.astype(compute_dtype),
                preferred_element_type=jnp.float32)           # (sub_hid, HW)
    h = h * b1s_ref[...] + b1b_ref[...]
    h = h * jax.nn.sigmoid(h)                                 # Swish

    # ---- zero-padded flat-spatial copy of h (padding folded in-kernel) ------
    hp_ref[:, :pad_flat] = jnp.zeros((sub_hid, pad_flat), jnp.float32)
    hp_ref[:, pad_flat + HW:] = jnp.zeros((sub_hid, pad_flat), jnp.float32)
    hp_ref[:, pad_flat:pad_flat + HW] = h

    # ---- mixed depthwise conv: exactly K*K taps for this group's K ----------
    xcoord = lax.broadcasted_iota(jnp.int32, (1, HW), 1) % W  # lane -> x coord

    def dw_accumulate(K):
        pad = (K - 1) // 2
        acc = jnp.zeros((sub_hid, HW), jnp.float32)
        for dy in range(K):
            for dx in range(K):
                ox = dx - pad
                s = (dy - pad) * W + ox
                v = hp_ref[:, pad_flat + s:pad_flat + s + HW]  # shifted slice
                if ox != 0:  # mask horizontal wrap into the neighbouring row
                    v = jnp.where((xcoord + ox >= 0) & (xcoord + ox < W),
                                  v, 0.0)
                t = dy * K + dx
                acc = acc + v * wdw_ref[:, t:t + 1]            # per-channel wt
        return acc

    g = pl.program_id(1)
    for gi, K in enumerate(kernel_sizes):
        def _branch(K=K):
            dw_ref[...] = dw_accumulate(K)
        pl.when(g == gi)(_branch)

    # ---- BN + Swish + SE -----------------------------------------------------
    y = dw_ref[...] * b2s_ref[...] + b2b_ref[...]
    y = y * jax.nn.sigmoid(y)
    # SELayer forward bug in the reference: the fc stack never runs, so SE is
    # simply x * global_avg_pool(x).
    y = y * jnp.mean(y, axis=1, keepdims=True)

    # ---- projection GPConv(1x1) + folded BN + residual ----------------------
    out = jnp.dot(wpoi_ref[...], y.astype(compute_dtype),
                  preferred_element_type=jnp.float32)         # (sub_out, HW)
    out = out * b3s_ref[...] + b3b_ref[...]
    out = out + x                                             # use_residual
    o_ref[...] = out[None].astype(o_ref.dtype)


# -----------------------------------------------------------------------------
# Wrapper: NCHW in / NCHW out (only free reshapes at the boundary).
# -----------------------------------------------------------------------------
def mixblock_forward(x_nchw, kp, *, mxu_dtype=jnp.bfloat16):
    N, Cin, H, W = x_nchw.shape
    kernel_sizes = tuple(kp["kernel_sizes"])
    G = len(kernel_sizes)
    Chid = kp["W_exp"].shape[0]
    Cout = kp["W_poi"].shape[0]
    assert Cin % G == 0 and Chid % G == 0 and Cout % G == 0
    sub_in, sub_hid, sub_out = Cin // G, Chid // G, Cout // G
    # residual path of this block config requires in_planes == out_planes
    assert Cin == Cout and sub_in == sub_out
    HW = H * W
    assert HW % 128 == 0 and sub_in % 8 == 0 and sub_hid % 8 == 0

    Kmax = max(kernel_sizes)
    max_pad = (Kmax - 1) // 2
    # lane-aligned flat-spatial margin (>= max_pad * (W + 1))
    pad_flat = ((max_pad * (W + 1) + 127) // 128) * 128

    x_flat = x_nchw.reshape(N, Cin, HW)

    # MXU operands in compute dtype (bf16 on v6e/v7x); everything else f32.
    wexp = kp["W_exp"].astype(mxu_dtype)                  # (Chid, sub_in)
    wpoi = kp["W_poi"].astype(mxu_dtype)                  # (Cout, sub_hid)
    wdw = kp["W_dw"].astype(jnp.float32)                  # (Chid, Kmax*Kmax)
    b1s = kp["bn1_scale"].reshape(Chid, 1)
    b1b = kp["bn1_bias"].reshape(Chid, 1)
    b2s = kp["bn2_scale"].reshape(Chid, 1)
    b2b = kp["bn2_bias"].reshape(Chid, 1)
    b3s = kp["bn3_scale"].reshape(Cout, 1)
    b3b = kp["bn3_bias"].reshape(Cout, 1)

    kernel = functools.partial(_mixblock_kernel, kernel_sizes=kernel_sizes,
                               H=H, W=W, pad_flat=pad_flat,
                               compute_dtype=mxu_dtype)

    out_flat = pl.pallas_call(
        kernel,
        out_shape=jax.ShapeDtypeStruct((N, Cout, HW), x_nchw.dtype),
        grid=(N, G),
        in_specs=[
            pl.BlockSpec((1, sub_in, HW), lambda n, g: (n, g, 0)),      # x / res
            pl.BlockSpec((sub_hid, sub_in), lambda n, g: (g, 0)),       # W_exp[g]
            pl.BlockSpec((sub_hid, 1), lambda n, g: (g, 0)),            # bn1 s[g]
            pl.BlockSpec((sub_hid, 1), lambda n, g: (g, 0)),            # bn1 b[g]
            pl.BlockSpec((sub_hid, Kmax * Kmax), lambda n, g: (g, 0)),  # W_dw[g]
            pl.BlockSpec((sub_hid, 1), lambda n, g: (g, 0)),            # bn2 s[g]
            pl.BlockSpec((sub_hid, 1), lambda n, g: (g, 0)),            # bn2 b[g]
            pl.BlockSpec((sub_out, sub_hid), lambda n, g: (g, 0)),      # W_poi[g]
            pl.BlockSpec((sub_out, 1), lambda n, g: (g, 0)),            # bn3 s[g]
            pl.BlockSpec((sub_out, 1), lambda n, g: (g, 0)),            # bn3 b[g]
        ],
        out_specs=pl.BlockSpec((1, sub_out, HW), lambda n, g: (n, g, 0)),
        scratch_shapes=[
            pltpu.VMEM((sub_hid, HW + 2 * pad_flat), jnp.float32),  # padded h
            pltpu.VMEM((sub_hid, HW), jnp.float32),                 # depthwise out
        ],
        compiler_params=pltpu.CompilerParams(
            dimension_semantics=("parallel", "parallel")),
    )(x_flat, wexp, b1s, b1b, wdw, b2s, b2b, wpoi, b3s, b3b)

    return out_flat.reshape(N, Cout, H, W)


# -----------------------------------------------------------------------------
# Pure-JAX reference (mirrors the PyTorch module op-for-op, NCHW, eval mode).
# -----------------------------------------------------------------------------
def _conv2d(x, w, stride=1, padding=0, groups=1, dilation=1):
    return lax.conv_general_dilated(
        x, w, window_strides=(stride, stride),
        padding=[(padding, padding), (padding, padding)],
        rhs_dilation=(dilation, dilation),
        feature_group_count=groups,
        dimension_numbers=("NCHW", "OIHW", "NCHW"))


def reference_forward(x, p, sub_in, sub_hid):
    eps = 1e-3
    swish = lambda v: v * jax.nn.sigmoid(v)

    def bn(v, g, b, m, var):
        s = (g / jnp.sqrt(var + eps))[None, :, None, None]
        return (v - m[None, :, None, None]) * s + b[None, :, None, None]

    res = x
    # expansion GPConv
    h = jnp.concatenate([_conv2d(x[:, :sub_in], p["w_exp0"]),
                         _conv2d(x[:, sub_in:], p["w_exp1"])], axis=1)
    h = swish(bn(h, p["bn1_g"], p["bn1_b"], p["bn1_m"], p["bn1_v"]))
    # MDConv: 3x3 depthwise on first half of channels, 5x5 on second half
    d0 = _conv2d(h[:, :sub_hid], p["w_dw3"], padding=1, groups=sub_hid)
    d1 = _conv2d(h[:, sub_hid:], p["w_dw5"], padding=2, groups=sub_hid)
    h = jnp.concatenate([d0, d1], axis=1)
    h = swish(bn(h, p["bn2_g"], p["bn2_b"], p["bn2_m"], p["bn2_v"]))
    # SELayer (fc comparison bug -> x * avg_pool(x))
    h = h * jnp.mean(h, axis=(2, 3), keepdims=True)
    # point-wise GPConv + BN
    o = jnp.concatenate([_conv2d(h[:, :sub_hid], p["w_poi0"]),
                         _conv2d(h[:, sub_hid:], p["w_poi1"])], axis=1)
    o = bn(o, p["bn3_g"], p["bn3_b"], p["bn3_m"], p["bn3_v"])
    return o + res


# -----------------------------------------------------------------------------
if __name__ == "__main__":
    # MixBlock(in=16, out=16, expand_ratio=2, exp_kernel_sizes=[1,1],
    #          kernel_sizes=[3,5], poi_kernel_sizes=[1,1], stride=1, dilate=1,
    #          reduction_ratio=4)   -> use_residual = True
    N, Cin, H, W = 2, 16, 16, 16
    expand_ratio = 2
    Chid = Cin * expand_ratio            # 32
    Cout = 16
    kernel_sizes = [3, 5]
    G = len(kernel_sizes)
    sub_in, sub_hid, sub_out = Cin // G, Chid // G, Cout // G
    eps = 1e-3

    key = jax.random.PRNGKey(0)
    ks = jax.random.split(key, 20)

    p = {
        "w_exp0": 0.2 * jax.random.normal(ks[0], (sub_hid, sub_in, 1, 1), jnp.float32),
        "w_exp1": 0.2 * jax.random.normal(ks[1], (sub_hid, sub_in, 1, 1), jnp.float32),
        "w_dw3":  0.2 * jax.random.normal(ks[2], (sub_hid, 1, 3, 3), jnp.float32),
        "w_dw5":  0.2 * jax.random.normal(ks[3], (sub_hid, 1, 5, 5), jnp.float32),
        "w_poi0": 0.2 * jax.random.normal(ks[4], (sub_out, sub_hid, 1, 1), jnp.float32),
        "w_poi1": 0.2 * jax.random.normal(ks[5], (sub_out, sub_hid, 1, 1), jnp.float32),
    }
    for i, (name, c) in enumerate([("bn1", Chid), ("bn2", Chid), ("bn3", Cout)]):
        p[f"{name}_g"] = 1.0 + 0.1 * jax.random.normal(ks[6 + 4 * i], (c,), jnp.float32)
        p[f"{name}_b"] = 0.1 * jax.random.normal(ks[7 + 4 * i], (c,), jnp.float32)
        p[f"{name}_m"] = 0.1 * jax.random.normal(ks[8 + 4 * i], (c,), jnp.float32)
        p[f"{name}_v"] = 0.5 + jax.random.uniform(ks[9 + 4 * i], (c,), jnp.float32)
    # TODO(synk): SELayer fc weights (Linear 32->8->32) are dead in the original
    # forward (module-vs-bool comparison bug), so they are not materialized.
    # TODO(synk): stride=2 / dilation>1 MixBlock variants are not implemented
    # (this configuration uses stride=1, dilate=1).

    # ---- fold BN / pack per-group weights for the fused kernel (glue) -------
    def fold_bn(g_, b_, m_, v_):
        s = g_ / jnp.sqrt(v_ + eps)
        return s, b_ - m_ * s

    W_exp = jnp.concatenate([p["w_exp0"][:, :, 0, 0],
                             p["w_exp1"][:, :, 0, 0]], axis=0)      # (Chid, sub_in)
    W_poi = jnp.concatenate([p["w_poi0"][:, :, 0, 0],
                             p["w_poi1"][:, :, 0, 0]], axis=0)      # (Cout, sub_hid)
    Kmax = max(kernel_sizes)
    W_dw = jnp.zeros((Chid, Kmax * Kmax), jnp.float32)
    W_dw = W_dw.at[:sub_hid, :9].set(p["w_dw3"][:, 0].reshape(sub_hid, 9))
    W_dw = W_dw.at[sub_hid:, :25].set(p["w_dw5"][:, 0].reshape(sub_hid, 25))

    bn1_scale, bn1_bias = fold_bn(p["bn1_g"], p["bn1_b"], p["bn1_m"], p["bn1_v"])
    bn2_scale, bn2_bias = fold_bn(p["bn2_g"], p["bn2_b"], p["bn2_m"], p["bn2_v"])
    bn3_scale, bn3_bias = fold_bn(p["bn3_g"], p["bn3_b"], p["bn3_m"], p["bn3_v"])

    kp = dict(W_exp=W_exp, W_poi=W_poi, W_dw=W_dw, kernel_sizes=kernel_sizes,
              bn1_scale=bn1_scale, bn1_bias=bn1_bias,
              bn2_scale=bn2_scale, bn2_bias=bn2_bias,
              bn3_scale=bn3_scale, bn3_bias=bn3_bias)

    x = jax.random.normal(ks[19], (N, Cin, H, W), jnp.float32)
    ref = reference_forward(x, p, sub_in, sub_hid)

    # f32 MXU operands (v5e-friendly path): tight check.
    out_f32 = jax.block_until_ready(
        jax.jit(lambda xx: mixblock_forward(xx, kp, mxu_dtype=jnp.float32))(x))
    assert out_f32.shape == (N, Cout, H, W), out_f32.shape
    err_f32 = float(jnp.max(jnp.abs(out_f32 - ref)))
    if err_f32 > 2e-2:
        raise RuntimeError(f"f32 path mismatch vs reference: max abs err = {err_f32}")

    # bf16 MXU operands (v6e/v7x fast path): looser tolerance (bf16 mantissa).
    out_bf16 = jax.block_until_ready(
        jax.jit(lambda xx: mixblock_forward(xx, kp, mxu_dtype=jnp.bfloat16))(x))
    err_bf16 = float(jnp.max(jnp.abs(out_bf16 - ref)))
    if err_bf16 > 1e-1:
        raise RuntimeError(f"bf16 path mismatch vs reference: max abs err = {err_bf16}")

    print("KERNEL_OK")
</pallas_src>

<mosaic_0001>
module attributes {stable_mosaic.version = 11 : i64} {
  func.func @_mixblock_kernel(%arg0: i32, %arg1: i32, %arg2: memref<1x8x256xf32, #tpu.memory_space<vmem>>, %arg3: memref<16x8xf32, #tpu.memory_space<vmem>>, %arg4: memref<16x1xf32, #tpu.memory_space<vmem>>, %arg5: memref<16x1xf32, #tpu.memory_space<vmem>>, %arg6: memref<16x25xf32, #tpu.memory_space<vmem>>, %arg7: memref<16x1xf32, #tpu.memory_space<vmem>>, %arg8: memref<16x1xf32, #tpu.memory_space<vmem>>, %arg9: memref<8x16xf32, #tpu.memory_space<vmem>>, %arg10: memref<8x1xf32, #tpu.memory_space<vmem>>, %arg11: memref<8x1xf32, #tpu.memory_space<vmem>>, %arg12: memref<1x8x256xf32, #tpu.memory_space<vmem>>, %arg13: memref<16x512xf32, #tpu.memory_space<vmem>>, %arg14: memref<16x256xf32, #tpu.memory_space<vmem>>) attributes {dimension_semantics = [#tpu.dimension_semantics<parallel>, #tpu.dimension_semantics<parallel>], iteration_bounds = array<i64: 2, 2>, scalar_prefetch = 0 : i64, scratch_operands = 2 : i64, tpu.core_type = #tpu.core_type<tc>, window_params = [{transform_indices = @transform_0, window_bounds = array<i64: 1, 8, 256>}, {transform_indices = @transform_1, window_bounds = array<i64: 16, 8>}, {transform_indices = @transform_2, window_bounds = array<i64: 16, 1>}, {transform_indices = @transform_3, window_bounds = array<i64: 16, 1>}, {transform_indices = @transform_4, window_bounds = array<i64: 16, 25>}, {transform_indices = @transform_5, window_bounds = array<i64: 16, 1>}, {transform_indices = @transform_6, window_bounds = array<i64: 16, 1>}, {transform_indices = @transform_7, window_bounds = array<i64: 8, 16>}, {transform_indices = @transform_8, window_bounds = array<i64: 8, 1>}, {transform_indices = @transform_9, window_bounds = array<i64: 8, 1>}, {transform_indices = @transform_10, window_bounds = array<i64: 1, 8, 256>}]} {
    %c0 = arith.constant 0 : index
    %c0_0 = arith.constant 0 : index
    %c0_1 = arith.constant 0 : index
    %0 = vector.load %arg2[%c0, %c0_0, %c0_1] : memref<1x8x256xf32, #tpu.memory_space<vmem>>, vector<1x8x256xf32>
    %1 = vector.shape_cast %0 : vector<1x8x256xf32> to vector<8x256xf32>
    %c0_2 = arith.constant 0 : index
    %c0_3 = arith.constant 0 : index
    %2 = vector.load %arg3[%c0_2, %c0_3] : memref<16x8xf32, #tpu.memory_space<vmem>>, vector<16x8xf32>
    %cst = arith.constant dense<0.000000e+00> : vector<16x256xf32>
    %3 = tpu.matmul %2, %1, %cst {dimension_numbers = #tpu.dot_dimension_numbers<[1], [0], [0], [1], [0, 0, 1, 1], [], []>} : vector<16x8xf32>, vector<8x256xf32>, vector<16x256xf32> -> vector<16x256xf32>
    %c0_4 = arith.constant 0 : index
    %c0_5 = arith.constant 0 : index
    %4 = vector.load %arg4[%c0_4, %c0_5] : memref<16x1xf32, #tpu.memory_space<vmem>>, vector<16x1xf32>
    %5 = vector.broadcast %4 : vector<16x1xf32> to vector<16x256xf32>
    %6 = arith.mulf %3, %5 : vector<16x256xf32>
    %c0_6 = arith.constant 0 : index
    %c0_7 = arith.constant 0 : index
    %7 = vector.load %arg5[%c0_6, %c0_7] : memref<16x1xf32, #tpu.memory_space<vmem>>, vector<16x1xf32>
    %8 = vector.broadcast %7 : vector<16x1xf32> to vector<16x256xf32>
    %9 = arith.addf %6, %8 : vector<16x256xf32>
    %10 = arith.negf %9 : vector<16x256xf32>
    %11 = math.exp %10 : vector<16x256xf32>
    %cst_8 = arith.constant 1.000000e+00 : f32
    %12 = vector.broadcast %cst_8 : f32 to vector<16x256xf32>
    %13 = arith.addf %12, %11 : vector<16x256xf32>
    %14 = arith.divf %12, %13 : vector<16x256xf32>
    %15 = arith.mulf %9, %14 : vector<16x256xf32>
    %cst_9 = arith.constant 0.000000e+00 : f32
    %16 = vector.broadcast %cst_9 : f32 to vector<16x128xf32>
    %c0_10 = arith.constant 0 : index
    %c0_11 = arith.constant 0 : index
    %17 = vector.load %arg13[%c0_10, %c0_11] : memref<16x512xf32, #tpu.memory_space<vmem>>, vector<16x128xf32>
    tpu.vector_store %arg13[%c0_10, %c0_11], %16 {strides = array<i32>} : memref<16x512xf32, #tpu.memory_space<vmem>>, vector<16x128xf32>,
    %cst_12 = arith.constant 0.000000e+00 : f32
    %18 = vector.broadcast %cst_12 : f32 to vector<16x128xf32>
    %c0_13 = arith.constant 0 : index
    %c384 = arith.constant 384 : index
    %19 = vector.load %arg13[%c0_13, %c384] : memref<16x512xf32, #tpu.memory_space<vmem>>, vector<16x128xf32>
    tpu.vector_store %arg13[%c0_13, %c384], %18 {strides = array<i32>} : memref<16x512xf32, #tpu.memory_space<vmem>>, vector<16x128xf32>,
    %c0_14 = arith.constant 0 : index
    %c128 = arith.constant 128 : index
    %20 = vector.load %arg13[%c0_14, %c128] : memref<16x512xf32, #tpu.memory_space<vmem>>, vector<16x256xf32>
    tpu.vector_store %arg13[%c0_14, %c128], %15 {strides = array<i32>} : memref<16x512xf32, #tpu.memory_space<vmem>>, vector<16x256xf32>,
    %21 = tpu.iota {dimensions = array<i32: 1>} : vector<1x256xi32>
    %c16_i32 = arith.constant 16 : i32
    %c0_i32 = arith.constant 0 : i32
    %22 = arith.cmpi eq, %c16_i32, %c0_i32 : i32
    %c1_i32 = arith.constant 1 : i32
    %23 = arith.select %22, %c1_i32, %c16_i32 : i32
    %24 = vector.broadcast %23 : i32 to vector<1x256xi32>
    %25 = arith.remsi %21, %24 : vector<1x256xi32>
    %c0_i32_15 = arith.constant 0 : i32
    %26 = vector.broadcast %c0_i32_15 : i32 to vector<1x256xi32>
    %27 = arith.cmpi ne, %25, %26 : vector<1x256xi32>
    %c0_i32_16 = arith.constant 0 : i32
    %28 = vector.broadcast %c0_i32_16 : i32 to vector<1x256xi32>
    %29 = arith.cmpi slt, %25, %28 : vector<1x256xi32>
    %c0_i32_17 = arith.constant 0 : i32
    %30 = arith.cmpi slt, %23, %c0_i32_17 : i32
    %31 = vector.broadcast %30 : i1 to vector<1x256xi1>
    %32 = vector.broadcast %31 : vector<1x256xi1> to vector<1x256xi1>
    %33 = arith.xori %29, %32 : vector<1x256xi1>
    %34 = arith.andi %33, %27 : vector<1x256xi1>
    %35 = vector.broadcast %23 : i32 to vector<1x256xi32>
    %36 = arith.addi %25, %35 : vector<1x256xi32>
    %37 = arith.select %34, %36, %25 : vector<1x256xi1>, vector<1x256xi32>
    %c0_i32_18 = arith.constant 0 : i32
    %38 = arith.cmpi eq, %arg1, %c0_i32_18 : i32
    %39 = arith.extui %38 : i1 to i32
    %c0_i32_19 = arith.constant 0 : i32
    %40 = arith.cmpi ne, %39, %c0_i32_19 : i32
    scf.if %40 {
      %cst_41 = arith.constant 0.000000e+00 : f32
      %74 = vector.broadcast %cst_41 : f32 to vector<16x256xf32>
      %c0_42 = arith.constant 0 : index
      %c111 = arith.constant 111 : index
      %75 = vector.load %arg13[%c0_42, %c111] : memref<16x512xf32, #tpu.memory_space<vmem>>, vector<16x256xf32>
      %c-1_i32 = arith.constant -1 : i32
      %76 = vector.broadcast %c-1_i32 : i32 to vector<1x256xi32>
      %77 = arith.addi %37, %76 : vector<1x256xi32>
      %c0_i32_43 = arith.constant 0 : i32
      %78 = vector.broadcast %c0_i32_43 : i32 to vector<1x256xi32>
      %79 = arith.cmpi sge, %77, %78 : vector<1x256xi32>
      %c-1_i32_44 = arith.constant -1 : i32
      %80 = vector.broadcast %c-1_i32_44 : i32 to vector<1x256xi32>
      %81 = arith.addi %37, %80 : vector<1x256xi32>
      %c16_i32_45 = arith.constant 16 : i32
      %82 = vector.broadcast %c16_i32_45 : i32 to vector<1x256xi32>
      %83 = arith.cmpi slt, %81, %82 : vector<1x256xi32>
      %84 = arith.andi %79, %83 : vector<1x256xi1>
      %cst_46 = arith.constant 0.000000e+00 : f32
      %85 = vector.shape_cast %84 : vector<1x256xi1> to vector<1x256xi1>
      %86 = vector.broadcast %85 : vector<1x256xi1> to vector<16x256xi1>
      %87 = vector.broadcast %cst_46 : f32 to vector<16x256xf32>
      %88 = arith.select %86, %75, %87 : vector<16x256xi1>, vector<16x256xf32>
      %c0_47 = arith.constant 0 : index
      %c0_48 = arith.constant 0 : index
      %89 = vector.load %arg6[%c0_47, %c0_48] : memref<16x25xf32, #tpu.memory_space<vmem>>, vector<16x1xf32>
      %90 = vector.broadcast %89 : vector<16x1xf32> to vector<16x256xf32>
      %91 = arith.mulf %88, %90 : vector<16x256xf32>
      %92 = arith.addf %74, %91 : vector<16x256xf32>
      %c0_49 = arith.constant 0 : index
      %c112 = arith.constant 112 : index
      %93 = vector.load %arg13[%c0_49, %c112] : memref<16x512xf32, #tpu.memory_space<vmem>>, vector<16x256xf32>
      %c0_50 = arith.constant 0 : index
      %c1 = arith.constant 1 : index
      %94 = vector.load %arg6[%c0_50, %c1] : memref<16x25xf32, #tpu.memory_space<vmem>>, vector<16x1xf32>
      %95 = vector.broadcast %94 : vector<16x1xf32> to vector<16x256xf32>
      %96 = arith.mulf %93, %95 : vector<16x256xf32>
      %97 = arith.addf %92, %96 : vector<16x256xf32>
      %c0_51 = arith.constant 0 : index
      %c113 = arith.constant 113 : index
      %98 = vector.load %arg13[%c0_51, %c113] : memref<16x512xf32, #tpu.memory_space<vmem>>, vector<16x256xf32>
      %c1_i32_52 = arith.constant 1 : i32
      %99 = vector.broadcast %c1_i32_52 : i32 to vector<1x256xi32>
      %100 = arith.addi %37, %99 : vector<1x256xi32>
      %c0_i32_53 = arith.constant 0 : i32
      %101 = vector.broadcast %c0_i32_53 : i32 to vector<1x256xi32>
      %102 = arith.cmpi sge, %100, %101 : vector<1x256xi32>
      %c1_i32_54 = arith.constant 1 : i32
      %103 = vector.broadcast %c1_i32_54 : i32 to vector<1x256xi32>
      %104 = arith.addi %37, %103 : vector<1x256xi32>
      %c16_i32_55 = arith.constant 16 : i32
      %105 = vector.broadcast %c16_i32_55 : i32 to vector<1x256xi32>
      %106 = arith.cmpi slt, %104, %105 : vector<1x256xi32>
      %107 = arith.andi %102, %106 : vector<1x256xi1>
      %cst_56 = arith.constant 0.000000e+00 : f32
      %108 = vector.shape_cast %107 : vector<1x256xi1> to vector<1x256xi1>
      %109 = vector.broadcast %108 : vector<1x256xi1> to vector<16x256xi1>
      %110 = vector.broadcast %cst_56 : f32 to vector<16x256xf32>
      %111 = arith.select %109, %98, %110 : vector<16x256xi1>, vector<16x256xf32>
      %c0_57 = arith.constant 0 : index
      %c2 = arith.constant 2 : index
      %112 = vector.load %arg6[%c0_57, %c2] : memref<16x25xf32, #tpu.memory_space<vmem>>, vector<16x1xf32>
      %113 = vector.broadcast %112 : vector<16x1xf32> to vector<16x256xf32>
      %114 = arith.mulf %111, %113 : vector<16x256xf32>
      %115 = arith.addf %97, %114 : vector<16x256xf32>
      %c0_58 = arith.constant 0 : index
      %c127 = arith.constant 127 : index
      %116 = vector.load %arg13[%c0_58, %c127] : memref<16x512xf32, #tpu.memory_space<vmem>>, vector<16x256xf32>
      %c-1_i32_59 = arith.constant -1 : i32
      %117 = vector.broadcast %c-1_i32_59 : i32 to vector<1x256xi32>
      %118 = arith.addi %37, %117 : vector<1x256xi32>
      %c0_i32_60 = arith.constant 0 : i32
      %119 = vector.broadcast %c0_i32_60 : i32 to vector<1x256xi32>
      %120 = arith.cmpi sge, %118, %119 : vector<1x256xi32>
      %c-1_i32_61 = arith.constant -1 : i32
      %121 = vector.broadcast %c-1_i32_61 : i32 to vector<1x256xi32>
      %122 = arith.addi %37, %121 : vector<1x256xi32>
      %c16_i32_62 = arith.constant 16 : i32
      %123 = vector.broadcast %c16_i32_62 : i32 to vector<1x256xi32>
      %124 = arith.cmpi slt, %122, %123 : vector<1x256xi32>
      %125 = arith.andi %120, %124 : vector<1x256xi1>
      %cst_63 = arith.constant 0.000000e+00 : f32
      %126 = vector.shape_cast %125 : vector<1x256xi1> to vector<1x256xi1>
      %127 = vector.broadcast %126 : vector<1x256xi1> to vector<16x256xi1>
      %128 = vector.broadcast %cst_63 : f32 to vector<16x256xf32>
      %129 = arith.select %127, %116, %128 : vector<16x256xi1>, vector<16x256xf32>
      %c0_64 = arith.constant 0 : index
      %c3 = arith.constant 3 : index
      %130 = vector.load %arg6[%c0_64, %c3] : memref<16x25xf32, #tpu.memory_space<vmem>>, vector<16x1xf32>
      %131 = vector.broadcast %130 : vector<16x1xf32> to vector<16x256xf32>
      %132 = arith.mulf %129, %131 : vector<16x256xf32>
      %133 = arith.addf %115, %132 : vector<16x256xf32>
      %c0_65 = arith.constant 0 : index
      %c128_66 = arith.constant 128 : index
      %134 = vector.load %arg13[%c0_65, %c128_66] : memref<16x512xf32, #tpu.memory_space<vmem>>, vector<16x256xf32>
      %c0_67 = arith.constant 0 : index
      %c4 = arith.constant 4 : index
      %135 = vector.load %arg6[%c0_67, %c4] : memref<16x25xf32, #tpu.memory_space<vmem>>, vector<16x1xf32>
      %136 = vector.broadcast %135 : vector<16x1xf32> to vector<16x256xf32>
      %137 = arith.mulf %134, %136 : vector<16x256xf32>
      %138 = arith.addf %133, %137 : vector<16x256xf32>
      %c0_68 = arith.constant 0 : index
      %c129 = arith.constant 129 : index
      %139 = vector.load %arg13[%c0_68, %c129] : memref<16x512xf32, #tpu.memory_space<vmem>>, vector<16x256xf32>
      %c1_i32_69 = arith.constant 1 : i32
      %140 = vector.broadcast %c1_i32_69 : i32 to vector<1x256xi32>
      %141 = arith.addi %37, %140 : vector<1x256xi32>
      %c0_i32_70 = arith.constant 0 : i32
      %142 = vector.broadcast %c0_i32_70 : i32 to vector<1x256xi32>
      %143 = arith.cmpi sge, %141, %142 : vector<1x256xi32>
      %c1_i32_71 = arith.constant 1 : i32
      %144 = vector.broadcast %c1_i32_71 : i32 to vector<1x256xi32>
      %145 = arith.addi %37, %144 : vector<1x256xi32>
      %c16_i32_72 = arith.constant 16 : i32
      %146 = vector.broadcast %c16_i32_72 : i32 to vector<1x256xi32>
      %147 = arith.cmpi slt, %145, %146 : vector<1x256xi32>
      %148 = arith.andi %143, %147 : vector<1x256xi1>
      %cst_73 = arith.constant 0.000000e+00 : f32
      %149 = vector.shape_cast %148 : vector<1x256xi1> to vector<1x256xi1>
      %150 = vector.broadcast %149 : vector<1x256xi1> to vector<16x256xi1>
      %151 = vector.broadcast %cst_73 : f32 to vector<16x256xf32>
      %152 = arith.select %150, %139, %151 : vector<16x256xi1>, vector<16x256xf32>
      %c0_74 = arith.constant 0 : index
      %c5 = arith.constant 5 : index
      %153 = vector.load %arg6[%c0_74, %c5] : memref<16x25xf32, #tpu.memory_space<vmem>>, vector<16x1xf32>
      %154 = vector.broadcast %153 : vector<16x1xf32> to vector<16x256xf32>
      %155 = arith.mulf %152, %154 : vector<16x256xf32>
      %156 = arith.addf %138, %155 : vector<16x256xf32>
      %c0_75 = arith.constant 0 : index
      %c143 = arith.constant 143 : index
      %157 = vector.load %arg13[%c0_75, %c143] : memref<16x512xf32, #tpu.memory_space<vmem>>, vector<16x256xf32>
      %c-1_i32_76 = arith.constant -1 : i32
      %158 = vector.broadcast %c-1_i32_76 : i32 to vector<1x256xi32>
      %159 = arith.addi %37, %158 : vector<1x256xi32>
      %c0_i32_77 = arith.constant 0 : i32
      %160 = vector.broadcast %c0_i32_77 : i32 to vector<1x256xi32>
      %161 = arith.cmpi sge, %159, %160 : vector<1x256xi32>
      %c-1_i32_78 = arith.constant -1 : i32
      %162 = vector.broadcast %c-1_i32_78 : i32 to vector<1x256xi32>
      %163 = arith.addi %37, %162 : vector<1x256xi32>
      %c16_i32_79 = arith.constant 16 : i32
      %164 = vector.broadcast %c16_i32_79 : i32 to vector<1x256xi32>
      %165 = arith.cmpi slt, %163, %164 : vector<1x256xi32>
      %166 = arith.andi %161, %165 : vector<1x256xi1>
      %cst_80 = arith.constant 0.000000e+00 : f32
      %167 = vector.shape_cast %166 : vector<1x256xi1> to vector<1x256xi1>
      %168 = vector.broadcast %167 : vector<1x256xi1> to vector<16x256xi1>
      %169 = vector.broadcast %cst_80 : f32 to vector<16x256xf32>
      %170 = arith.select %168, %157, %169 : vector<16x256xi1>, vector<16x256xf32>
      %c0_81 = arith.constant 0 : index
      %c6 = arith.constant 6 : index
      %171 = vector.load %arg6[%c0_81, %c6] : memref<16x25xf32, #tpu.memory_space<vmem>>, vector<16x1xf32>
      %172 = vector.broadcast %171 : vector<16x1xf32> to vector<16x256xf32>
      %173 = arith.mulf %170, %172 : vector<16x256xf32>
      %174 = arith.addf %156, %173 : vector<16x256xf32>
      %c0_82 = arith.constant 0 : index
      %c144 = arith.constant 144 : index
      %175 = vector.load %arg13[%c0_82, %c144] : memref<16x512xf32, #tpu.memory_space<vmem>>, vector<16x256xf32>
      %c0_83 = arith.constant 0 : index
      %c7 = arith.constant 7 : index
      %176 = vector.load %arg6[%c0_83, %c7] : memref<16x25xf32, #tpu.memory_space<vmem>>, vector<16x1xf32>
      %177 = vector.broadcast %176 : vector<16x1xf32> to vector<16x256xf32>
      %178 = arith.mulf %175, %177 : vector<16x256xf32>
      %179 = arith.addf %174, %178 : vector<16x256xf32>
      %c0_84 = arith.constant 0 : index
      %c145 = arith.constant 145 : index
      %180 = vector.load %arg13[%c0_84, %c145] : memref<16x512xf32, #tpu.memory_space<vmem>>, vector<16x256xf32>
      %c1_i32_85 = arith.constant 1 : i32
      %181 = vector.broadcast %c1_i32_85 : i32 to vector<1x256xi32>
      %182 = arith.addi %37, %181 : vector<1x256xi32>
      %c0_i32_86 = arith.constant 0 : i32
      %183 = vector.broadcast %c0_i32_86 : i32 to vector<1x256xi32>
      %184 = arith.cmpi sge, %182, %183 : vector<1x256xi32>
      %c1_i32_87 = arith.constant 1 : i32
      %185 = vector.broadcast %c1_i32_87 : i32 to vector<1x256xi32>
      %186 = arith.addi %37, %185 : vector<1x256xi32>
      %c16_i32_88 = arith.constant 16 : i32
      %187 = vector.broadcast %c16_i32_88 : i32 to vector<1x256xi32>
      %188 = arith.cmpi slt, %186, %187 : vector<1x256xi32>
      %189 = arith.andi %184, %188 : vector<1x256xi1>
      %cst_89 = arith.constant 0.000000e+00 : f32
      %190 = vector.shape_cast %189 : vector<1x256xi1> to vector<1x256xi1>
      %191 = vector.broadcast %190 : vector<1x256xi1> to vector<16x256xi1>
      %192 = vector.broadcast %cst_89 : f32 to vector<16x256xf32>
      %193 = arith.select %191, %180, %192 : vector<16x256xi1>, vector<16x256xf32>
      %c0_90 = arith.constant 0 : index
      %c8 = arith.constant 8 : index
      %194 = vector.load %arg6[%c0_90, %c8] : memref<16x25xf32, #tpu.memory_space<vmem>>, vector<16x1xf32>
      %195 = vector.broadcast %194 : vector<16x1xf32> to vector<16x256xf32>
      %196 = arith.mulf %193, %195 : vector<16x256xf32>
      %197 = arith.addf %179, %196 : vector<16x256xf32>
      %c0_91 = arith.constant 0 : index
      %c0_92 = arith.constant 0 : index
      %198 = vector.load %arg14[%c0_91, %c0_92] : memref<16x256xf32, #tpu.memory_space<vmem>>, vector<16x256xf32>
      tpu.vector_store %arg14[%c0_91, %c0_92], %197 {strides = array<i32>} : memref<16x256xf32, #tpu.memory_space<vmem>>, vector<16x256xf32>,
    } else {
    }
    %c1_i32_20 = arith.constant 1 : i32
    %41 = arith.cmpi eq, %arg1, %c1_i32_20 : i32
    %42 = arith.extui %41 : i1 to i32
    %c0_i32_21 = arith.constant 0 : i32
    %43 = arith.cmpi ne, %42, %c0_i32_21 : i32
    scf.if %43 {
      %cst_41 = arith.constant 0.000000e+00 : f32
      %74 = vector.broadcast %cst_41 : f32 to vector<16x256xf32>
      %c0_42 = arith.constant 0 : index
      %c94 = arith.constant 94 : index
      %75 = vector.load %arg13[%c0_42, %c94] : memref<16x512xf32, #tpu.memory_space<vmem>>, vector<16x256xf32>
      %c-2_i32 = arith.constant -2 : i32
      %76 = vector.broadcast %c-2_i32 : i32 to vector<1x256xi32>
      %77 = arith.addi %37, %76 : vector<1x256xi32>
      %c0_i32_43 = arith.constant 0 : i32
      %78 = vector.broadcast %c0_i32_43 : i32 to vector<1x256xi32>
      %79 = arith.cmpi sge, %77, %78 : vector<1x256xi32>
      %c-2_i32_44 = arith.constant -2 : i32
      %80 = vector.broadcast %c-2_i32_44 : i32 to vector<1x256xi32>
      %81 = arith.addi %37, %80 : vector<1x256xi32>
      %c16_i32_45 = arith.constant 16 : i32
      %82 = vector.broadcast %c16_i32_45 : i32 to vector<1x256xi32>
      %83 = arith.cmpi slt, %81, %82 : vector<1x256xi32>
      %84 = arith.andi %79, %83 : vector<1x256xi1>
      %cst_46 = arith.constant 0.000000e+00 : f32
      %85 = vector.shape_cast %84 : vector<1x256xi1> to vector<1x256xi1>
      %86 = vector.broadcast %85 : vector<1x256xi1> to vector<16x256xi1>
      %87 = vector.broadcast %cst_46 : f32 to vector<16x256xf32>
      %88 = arith.select %86, %75, %87 : vector<16x256xi1>, vector<16x256xf32>
      %c0_47 = arith.constant 0 : index
      %c0_48 = arith.constant 0 : index
      %89 = vector.load %arg6[%c0_47, %c0_48] : memref<16x25xf32, #tpu.memory_space<vmem>>, vector<16x1xf32>
      %90 = vector.broadcast %89 : vector<16x1xf32> to vector<16x256xf32>
      %91 = arith.mulf %88, %90 : vector<16x256xf32>
      %92 = arith.addf %74, %91 : vector<16x256xf32>
      %c0_49 = arith.constant 0 : index
      %c95 = arith.constant 95 : index
      %93 = vector.load %arg13[%c0_49, %c95] : memref<16x512xf32, #tpu.memory_space<vmem>>, vector<16x256xf32>
      %c-1_i32 = arith.constant -1 : i32
      %94 = vector.broadcast %c-1_i32 : i32 to vector<1x256xi32>
      %95 = arith.addi %37, %94 : vector<1x256xi32>
      %c0_i32_50 = arith.constant 0 : i32
      %96 = vector.broadcast %c0_i32_50 : i32 to vector<1x256xi32>
      %97 = arith.cmpi sge, %95, %96 : vector<1x256xi32>
      %c-1_i32_51 = arith.constant -1 : i32
      %98 = vector.broadcast %c-1_i32_51 : i32 to vector<1x256xi32>
      %99 = arith.addi %37, %98 : vector<1x256xi32>
      %c16_i32_52 = arith.constant 16 : i32
      %100 = vector.broadcast %c16_i32_52 : i32 to vector<1x256xi32>
      %101 = arith.cmpi slt, %99, %100 : vector<1x256xi32>
      %102 = arith.andi %97, %101 : vector<1x256xi1>
      %cst_53 = arith.constant 0.000000e+00 : f32
      %103 = vector.shape_cast %102 : vector<1x256xi1> to vector<1x256xi1>
      %104 = vector.broadcast %103 : vector<1x256xi1> to vector<16x256xi1>
      %105 = vector.broadcast %cst_53 : f32 to vector<16x256xf32>
      %106 = arith.select %104, %93, %105 : vector<16x256xi1>, vector<16x256xf32>
      %c0_54 = arith.constant 0 : index
      %c1 = arith.constant 1 : index
      %107 = vector.load %arg6[%c0_54, %c1] : memref<16x25xf32, #tpu.memory_space<vmem>>, vector<16x1xf32>
      %108 = vector.broadcast %107 : vector<16x1xf32> to vector<16x256xf32>
      %109 = arith.mulf %106, %108 : vector<16x256xf32>
      %110 = arith.addf %92, %109 : vector<16x256xf32>
      %c0_55 = arith.constant 0 : index
      %c96 = arith.constant 96 : index
      %111 = vector.load %arg13[%c0_55, %c96] : memref<16x512xf32, #tpu.memory_space<vmem>>, vector<16x256xf32>
      %c0_56 = arith.constant 0 : index
      %c2 = arith.constant 2 : index
      %112 = vector.load %arg6[%c0_56, %c2] : memref<16x25xf32, #tpu.memory_space<vmem>>, vector<16x1xf32>
      %113 = vector.broadcast %112 : vector<16x1xf32> to vector<16x256xf32>
      %114 = arith.mulf %111, %113 : vector<16x256xf32>
      %115 = arith.addf %110, %114 : vector<16x256xf32>
      %c0_57 = arith.constant 0 : index
      %c97 = arith.constant 97 : index
      %116 = vector.load %arg13[%c0_57, %c97] : memref<16x512xf32, #tpu.memory_space<vmem>>, vector<16x256xf32>
      %c1_i32_58 = arith.constant 1 : i32
      %117 = vector.broadcast %c1_i32_58 : i32 to vector<1x256xi32>
      %118 = arith.addi %37, %117 : vector<1x256xi32>
      %c0_i32_59 = arith.constant 0 : i32
      %119 = vector.broadcast %c0_i32_59 : i32 to vector<1x256xi32>
      %120 = arith.cmpi sge, %118, %119 : vector<1x256xi32>
      %c1_i32_60 = arith.constant 1 : i32
      %121 = vector.broadcast %c1_i32_60 : i32 to vector<1x256xi32>
      %122 = arith.addi %37, %121 : vector<1x256xi32>
      %c16_i32_61 = arith.constant 16 : i32
      %123 = vector.broadcast %c16_i32_61 : i32 to vector<1x256xi32>
      %124 = arith.cmpi slt, %122, %123 : vector<1x256xi32>
      %125 = arith.andi %120, %124 : vector<1x256xi1>
      %cst_62 = arith.constant 0.000000e+00 : f32
      %126 = vector.shape_cast %125 : vector<1x256xi1> to vector<1x256xi1>
      %127 = vector.broadcast %126 : vector<1x256xi1> to vector<16x256xi1>
      %128 = vector.broadcast %cst_62 : f32 to vector<16x256xf32>
      %129 = arith.select %127, %116, %128 : vector<16x256xi1>, vector<16x256xf32>
      %c0_63 = arith.constant 0 : index
      %c3 = arith.constant 3 : index
      %130 = vector.load %arg6[%c0_63, %c3] : memref<16x25xf32, #tpu.memory_space<vmem>>, vector<16x1xf32>
      %131 = vector.broadcast %130 : vector<16x1xf32> to vector<16x256xf32>
      %132 = arith.mulf %129, %131 : vector<16x256xf32>
      %133 = arith.addf %115, %132 : vector<16x256xf32>
      %c0_64 = arith.constant 0 : index
      %c98 = arith.constant 98 : index
      %134 = vector.load %arg13[%c0_64, %c98] : memref<16x512xf32, #tpu.memory_space<vmem>>, vector<16x256xf32>
      %c2_i32 = arith.constant 2 : i32
      %135 = vector.broadcast %c2_i32 : i32 to vector<1x256xi32>
      %136 = arith.addi %37, %135 : vector<1x256xi32>
      %c0_i32_65 = arith.constant 0 : i32
      %137 = vector.broadcast %c0_i32_65 : i32 to vector<1x256xi32>
      %138 = arith.cmpi sge, %136, %137 : vector<1x256xi32>
      %c2_i32_66 = arith.constant 2 : i32
      %139 = vector.broadcast %c2_i32_66 : i32 to vector<1x256xi32>
      %140 = arith.addi %37, %139 : vector<1x256xi32>
      %c16_i32_67 = arith.constant 16 : i32
      %141 = vector.broadcast %c16_i32_67 : i32 to vector<1x256xi32>
      %142 = arith.cmpi slt, %140, %141 : vector<1x256xi32>
      %143 = arith.andi %138, %142 : vector<1x256xi1>
      %cst_68 = arith.constant 0.000000e+00 : f32
      %144 = vector.shape_cast %143 : vector<1x256xi1> to vector<1x256xi1>
      %145 = vector.broadcast %144 : vector<1x256xi1> to vector<16x256xi1>
      %146 = vector.broadcast %cst_68 : f32 to vector<16x256xf32>
      %147 = arith.select %145, %134, %146 : vector<16x256xi1>, vector<16x256xf32>
      %c0_69 = arith.constant 0 : index
      %c4 = arith.constant 4 : index
      %148 = vector.load %arg6[%c0_69, %c4] : memref<16x25xf32, #tpu.memory_space<vmem>>, vector<16x1xf32>
      %149 = vector.broadcast %148 : vector<16x1xf32> to vector<16x256xf32>
      %150 = arith.mulf %147, %149 : vector<16x256xf32>
      %151 = arith.addf %133, %150 : vector<16x256xf32>
      %c0_70 = arith.constant 0 : index
      %c110 = arith.constant 110 : index
      %152 = vector.load %arg13[%c0_70, %c110] : memref<16x512xf32, #tpu.memory_space<vmem>>, vector<16x256xf32>
      %c-2_i32_71 = arith.constant -2 : i32
      %153 = vector.broadcast %c-2_i32_71 : i32 to vector<1x256xi32>
      %154 = arith.addi %37, %153 : vector<1x256xi32>
      %c0_i32_72 = arith.constant 0 : i32
      %155 = vector.broadcast %c0_i32_72 : i32 to vector<1x256xi32>
      %156 = arith.cmpi sge, %154, %155 : vector<1x256xi32>
      %c-2_i32_73 = arith.constant -2 : i32
      %157 = vector.broadcast %c-2_i32_73 : i32 to vector<1x256xi32>
      %158 = arith.addi %37, %157 : vector<1x256xi32>
      %c16_i32_74 = arith.constant 16 : i32
      %159 = vector.broadcast %c16_i32_74 : i32 to vector<1x256xi32>
      %160 = arith.cmpi slt, %158, %159 : vector<1x256xi32>
      %161 = arith.andi %156, %160 : vector<1x256xi1>
      %cst_75 = arith.constant 0.000000e+00 : f32
      %162 = vector.shape_cast %161 : vector<1x256xi1> to vector<1x256xi1>
      %163 = vector.broadcast %162 : vector<1x256xi1> to vector<16x256xi1>
      %164 = vector.broadcast %cst_75 : f32 to vector<16x256xf32>
      %165 = arith.select %163, %152, %164 : vector<16x256xi1>, vector<16x256xf32>
      %c0_76 = arith.constant 0 : index
      %c5 = arith.constant 5 : index
      %166 = vector.load %arg6[%c0_76, %c5] : memref<16x25xf32, #tpu.memory_space<vmem>>, vector<16x1xf32>
      %167 = vector.broadcast %166 : vector<16x1xf32> to vector<16x256xf32>
      %168 = arith.mulf %165, %167 : vector<16x256xf32>
      %169 = arith.addf %151, %168 : vector<16x256xf32>
      %c0_77 = arith.constant 0 : index
      %c111 = arith.constant 111 : index
      %170 = vector.load %arg13[%c0_77, %c111] : memref<16x512xf32, #tpu.memory_space<vmem>>, vector<16x256xf32>
      %c-1_i32_78 = arith.constant -1 : i32
      %171 = vector.broadcast %c-1_i32_78 : i32 to vector<1x256xi32>
      %172 = arith.addi %37, %171 : vector<1x256xi32>
      %c0_i32_79 = arith.constant 0 : i32
      %173 = vector.broadcast %c0_i32_79 : i32 to vector<1x256xi32>
      %174 = arith.cmpi sge, %172, %173 : vector<1x256xi32>
      %c-1_i32_80 = arith.constant -1 : i32
      %175 = vector.broadcast %c-1_i32_80 : i32 to vector<1x256xi32>
      %176 = arith.addi %37, %175 : vector<1x256xi32>
      %c16_i32_81 = arith.constant 16 : i32
      %177 = vector.broadcast %c16_i32_81 : i32 to vector<1x256xi32>
      %178 = arith.cmpi slt, %176, %177 : vector<1x256xi32>
      %179 = arith.andi %174, %178 : vector<1x256xi1>
      %cst_82 = arith.constant 0.000000e+00 : f32
      %180 = vector.shape_cast %179 : vector<1x256xi1> to vector<1x256xi1>
      %181 = vector.broadcast %180 : vector<1x256xi1> to vector<16x256xi1>
      %182 = vector.broadcast %cst_82 : f32 to vector<16x256xf32>
      %183 = arith.select %181, %170, %182 : vector<16x256xi1>, vector<16x256xf32>
      %c0_83 = arith.constant 0 : index
      %c6 = arith.constant 6 : index
      %184 = vector.load %arg6[%c0_83, %c6] : memref<16x25xf32, #tpu.memory_space<vmem>>, vector<16x1xf32>
      %185 = vector.broadcast %184 : vector<16x1xf32> to vector<16x256xf32>
      %186 = arith.mulf %183, %185 : vector<16x256xf32>
      %187 = arith.addf %169, %186 : vector<16x256xf32>
      %c0_84 = arith.constant 0 : index
      %c112 = arith.constant 112 : index
      %188 = vector.load %arg13[%c0_84, %c112] : memref<16x512xf32, #tpu.memory_space<vmem>>, vector<16x256xf32>
      %c0_85 = arith.constant 0 : index
      %c7 = arith.constant 7 : index
      %189 = vector.load %arg6[%c0_85, %c7] : memref<16x25xf32, #tpu.memory_space<vmem>>, vector<16x1xf32>
      %190 = vector.broadcast %189 : vector<16x1xf32> to vector<16x256xf32>
      %191 = arith.mulf %188, %190 : vector<16x256xf32>
      %192 = arith.addf %187, %191 : vector<16x256xf32>
      %c0_86 = arith.constant 0 : index
      %c113 = arith.constant 113 : index
      %193 = vector.load %arg13[%c0_86, %c113] : memref<16x512xf32, #tpu.memory_space<vmem>>, vector<16x256xf32>
      %c1_i32_87 = arith.constant 1 : i32
      %194 = vector.broadcast %c1_i32_87 : i32 to vector<1x256xi32>
      %195 = arith.addi %37, %194 : vector<1x256xi32>
      %c0_i32_88 = arith.constant 0 : i32
      %196 = vector.broadcast %c0_i32_88 : i32 to vector<1x256xi32>
      %197 = arith.cmpi sge, %195, %196 : vector<1x256xi32>
      %c1_i32_89 = arith.constant 1 : i32
      %198 = vector.broadcast %c1_i32_89 : i32 to vector<1x256xi32>
      %199 = arith.addi %37, %198 : vector<1x256xi32>
      %c16_i32_90 = arith.constant 16 : i32
      %200 = vector.broadcast %c16_i32_90 : i32 to vector<1x256xi32>
      %201 = arith.cmpi slt, %199, %200 : vector<1x256xi32>
      %202 = arith.andi %197, %201 : vector<1x256xi1>
      %cst_91 = arith.constant 0.000000e+00 : f32
      %203 = vector.shape_cast %202 : vector<1x256xi1> to vector<1x256xi1>
      %204 = vector.broadcast %203 : vector<1x256xi1> to vector<16x256xi1>
      %205 = vector.broadcast %cst_91 : f32 to vector<16x256xf32>
      %206 = arith.select %204, %193, %205 : vector<16x256xi1>, vector<16x256xf32>
      %c0_92 = arith.constant 0 : index
      %c8 = arith.constant 8 : index
      %207 = vector.load %arg6[%c0_92, %c8] : memref<16x25xf32, #tpu.memory_space<vmem>>, vector<16x1xf32>
      %208 = vector.broadcast %207 : vector<16x1xf32> to vector<16x256xf32>
      %209 = arith.mulf %206, %208 : vector<16x256xf32>
      %210 = arith.addf %192, %209 : vector<16x256xf32>
      %c0_93 = arith.constant 0 : index
      %c114 = arith.constant 114 : index
      %211 = vector.load %arg13[%c0_93, %c114] : memref<16x512xf32, #tpu.memory_space<vmem>>, vector<16x256xf32>
      %c2_i32_94 = arith.constant 2 : i32
      %212 = vector.broadcast %c2_i32_94 : i32 to vector<1x256xi32>
      %213 = arith.addi %37, %212 : vector<1x256xi32>
      %c0_i32_95 = arith.constant 0 : i32
      %214 = vector.broadcast %c0_i32_95 : i32 to vector<1x256xi32>
      %215 = arith.cmpi sge, %213, %214 : vector<1x256xi32>
      %c2_i32_96 = arith.constant 2 : i32
      %216 = vector.broadcast %c2_i32_96 : i32 to vector<1x256xi32>
      %217 = arith.addi %37, %216 : vector<1x256xi32>
      %c16_i32_97 = arith.constant 16 : i32
      %218 = vector.broadcast %c16_i32_97 : i32 to vector<1x256xi32>
      %219 = arith.cmpi slt, %217, %218 : vector<1x256xi32>
      %220 = arith.andi %215, %219 : vector<1x256xi1>
      %cst_98 = arith.constant 0.000000e+00 : f32
      %221 = vector.shape_cast %220 : vector<1x256xi1> to vector<1x256xi1>
      %222 = vector.broadcast %221 : vector<1x256xi1> to vector<16x256xi1>
      %223 = vector.broadcast %cst_98 : f32 to vector<16x256xf32>
      %224 = arith.select %222, %211, %223 : vector<16x256xi1>, vector<16x256xf32>
      %c0_99 = arith.constant 0 : index
      %c9 = arith.constant 9 : index
      %225 = vector.load %arg6[%c0_99, %c9] : memref<16x25xf32, #tpu.memory_space<vmem>>, vector<16x1xf32>
      %226 = vector.broadcast %225 : vector<16x1xf32> to vector<16x256xf32>
      %227 = arith.mulf %224, %226 : vector<16x256xf32>
      %228 = arith.addf %210, %227 : vector<16x256xf32>
      %c0_100 = arith.constant 0 : index
      %c126 = arith.constant 126 : index
      %229 = vector.load %arg13[%c0_100, %c126] : memref<16x512xf32, #tpu.memory_space<vmem>>, vector<16x256xf32>
      %c-2_i32_101 = arith.constant -2 : i32
      %230 = vector.broadcast %c-2_i32_101 : i32 to vector<1x256xi32>
      %231 = arith.addi %37, %230 : vector<1x256xi32>
      %c0_i32_102 = arith.constant 0 : i32
      %232 = vector.broadcast %c0_i32_102 : i32 to vector<1x256xi32>
      %233 = arith.cmpi sge, %231, %232 : vector<1x256xi32>
      %c-2_i32_103 = arith.constant -2 : i32
      %234 = vector.broadcast %c-2_i32_103 : i32 to vector<1x256xi32>
      %235 = arith.addi %37, %234 : vector<1x256xi32>
      %c16_i32_104 = arith.constant 16 : i32
      %236 = vector.broadcast %c16_i32_104 : i32 to vector<1x256xi32>
      %237 = arith.cmpi slt, %235, %236 : vector<1x256xi32>
      %238 = arith.andi %233, %237 : vector<1x256xi1>
      %cst_105 = arith.constant 0.000000e+00 : f32
      %239 = vector.shape_cast %238 : vector<1x256xi1> to vector<1x256xi1>
      %240 = vector.broadcast %239 : vector<1x256xi1> to vector<16x256xi1>
      %241 = vector.broadcast %cst_105 : f32 to vector<16x256xf32>
      %242 = arith.select %240, %229, %241 : vector<16x256xi1>, vector<16x256xf32>
      %c0_106 = arith.constant 0 : index
      %c10 = arith.constant 10 : index
      %243 = vector.load %arg6[%c0_106, %c10] : memref<16x25xf32, #tpu.memory_space<vmem>>, vector<16x1xf32>
      %244 = vector.broadcast %243 : vector<16x1xf32> to vector<16x256xf32>
      %245 = arith.mulf %242, %244 : vector<16x256xf32>
      %246 = arith.addf %228, %245 : vector<16x256xf32>
      %c0_107 = arith.constant 0 : index
      %c127 = arith.constant 127 : index
      %247 = vector.load %arg13[%c0_107, %c127] : memref<16x512xf32, #tpu.memory_space<vmem>>, vector<16x256xf32>
      %c-1_i32_108 = arith.constant -1 : i32
      %248 = vector.broadcast %c-1_i32_108 : i32 to vector<1x256xi32>
      %249 = arith.addi %37, %248 : vector<1x256xi32>
      %c0_i32_109 = arith.constant 0 : i32
      %250 = vector.broadcast %c0_i32_109 : i32 to vector<1x256xi32>
      %251 = arith.cmpi sge, %249, %250 : vector<1x256xi32>
      %c-1_i32_110 = arith.constant -1 : i32
      %252 = vector.broadcast %c-1_i32_110 : i32 to vector<1x256xi32>
      %253 = arith.addi %37, %252 : vector<1x256xi32>
      %c16_i32_111 = arith.constant 16 : i32
      %254 = vector.broadcast %c16_i32_111 : i32 to vector<1x256xi32>
      %255 = arith.cmpi slt, %253, %254 : vector<1x256xi32>
      %256 = arith.andi %251, %255 : vector<1x256xi1>
      %cst_112 = arith.constant 0.000000e+00 : f32
      %257 = vector.shape_cast %256 : vector<1x256xi1> to vector<1x256xi1>
      %258 = vector.broadcast %257 : vector<1x256xi1> to vector<16x256xi1>
      %259 = vector.broadcast %cst_112 : f32 to vector<16x256xf32>
      %260 = arith.select %258, %247, %259 : vector<16x256xi1>, vector<16x256xf32>
      %c0_113 = arith.constant 0 : index
      %c11 = arith.constant 11 : index
      %261 = vector.load %arg6[%c0_113, %c11] : memref<16x25xf32, #tpu.memory_space<vmem>>, vector<16x1xf32>
      %262 = vector.broadcast %261 : vector<16x1xf32> to vector<16x256xf32>
      %263 = arith.mulf %260, %262 : vector<16x256xf32>
      %264 = arith.addf %246, %263 : vector<16x256xf32>
      %c0_114 = arith.constant 0 : index
      %c128_115 = arith.constant 128 : index
      %265 = vector.load %arg13[%c0_114, %c128_115] : memref<16x512xf32, #tpu.memory_space<vmem>>, vector<16x256xf32>
      %c0_116 = arith.constant 0 : index
      %c12 = arith.constant 12 : index
      %266 = vector.load %arg6[%c0_116, %c12] : memref<16x25xf32, #tpu.memory_space<vmem>>, vector<16x1xf32>
      %267 = vector.broadcast %266 : vector<16x1xf32> to vector<16x256xf32>
      %268 = arith.mulf %265, %267 : vector<16x256xf32>
      %269 = arith.addf %264, %268 : vector<16x256xf32>
      %c0_117 = arith.constant 0 : index
      %c129 = arith.constant 129 : index
      %270 = vector.load %arg13[%c0_117, %c129] : memref<16x512xf32, #tpu.memory_space<vmem>>, vector<16x256xf32>
      %c1_i32_118 = arith.constant 1 : i32
      %271 = vector.broadcast %c1_i32_118 : i32 to vector<1x256xi32>
      %272 = arith.addi %37, %271 : vector<1x256xi32>
      %c0_i32_119 = arith.constant 0 : i32
      %273 = vector.broadcast %c0_i32_119 : i32 to vector<1x256xi32>
      %274 = arith.cmpi sge, %272, %273 : vector<1x256xi32>
      %c1_i32_120 = arith.constant 1 : i32
      %275 = vector.broadcast %c1_i32_120 : i32 to vector<1x256xi32>
      %276 = arith.addi %37, %275 : vector<1x256xi32>
      %c16_i32_121 = arith.constant 16 : i32
      %277 = vector.broadcast %c16_i32_121 : i32 to vector<1x256xi32>
      %278 = arith.cmpi slt, %276, %277 : vector<1x256xi32>
      %279 = arith.andi %274, %278 : vector<1x256xi1>
      %cst_122 = arith.constant 0.000000e+00 : f32
      %280 = vector.shape_cast %279 : vector<1x256xi1> to vector<1x256xi1>
      %281 = vector.broadcast %280 : vector<1x256xi1> to vector<16x256xi1>
      %282 = vector.broadcast %cst_122 : f32 to vector<16x256xf32>
      %283 = arith.select %281, %270, %282 : vector<16x256xi1>, vector<16x256xf32>
      %c0_123 = arith.constant 0 : index
      %c13 = arith.constant 13 : index
      %284 = vector.load %arg6[%c0_123, %c13] : memref<16x25xf32, #tpu.memory_space<vmem>>, vector<16x1xf32>
      %285 = vector.broadcast %284 : vector<16x1xf32> to vector<16x256xf32>
      %286 = arith.mulf %283, %285 : vector<16x256xf32>
      %287 = arith.addf %269, %286 : vector<16x256xf32>
      %c0_124 = arith.constant 0 : index
      %c130 = arith.constant 130 : index
      %288 = vector.load %arg13[%c0_124, %c130] : memref<16x512xf32, #tpu.memory_space<vmem>>, vector<16x256xf32>
      %c2_i32_125 = arith.constant 2 : i32
      %289 = vector.broadcast %c2_i32_125 : i32 to vector<1x256xi32>
      %290 = arith.addi %37, %289 : vector<1x256xi32>
      %c0_i32_126 = arith.constant 0 : i32
      %291 = vector.broadcast %c0_i32_126 : i32 to vector<1x256xi32>
      %292 = arith.cmpi sge, %290, %291 : vector<1x256xi32>
      %c2_i32_127 = arith.constant 2 : i32
      %293 = vector.broadcast %c2_i32_127 : i32 to vector<1x256xi32>
      %294 = arith.addi %37, %293 : vector<1x256xi32>
      %c16_i32_128 = arith.constant 16 : i32
      %295 = vector.broadcast %c16_i32_128 : i32 to vector<1x256xi32>
      %296 = arith.cmpi slt, %294, %295 : vector<1x256xi32>
      %297 = arith.andi %292, %296 : vector<1x256xi1>
      %cst_129 = arith.constant 0.000000e+00 : f32
      %298 = vector.shape_cast %297 : vector<1x256xi1> to vector<1x256xi1>
      %299 = vector.broadcast %298 : vector<1x256xi1> to vector<16x256xi1>
      %300 = vector.broadcast %cst_129 : f32 to vector<16x256xf32>
      %301 = arith.select %299, %288, %300 : vector<16x256xi1>, vector<16x256xf32>
      %c0_130 = arith.constant 0 : index
      %c14 = arith.constant 14 : index
      %302 = vector.load %arg6[%c0_130, %c14] : memref<16x25xf32, #tpu.memory_space<vmem>>, vector<16x1xf32>
      %303 = vector.broadcast %302 : vector<16x1xf32> to vector<16x256xf32>
      %304 = arith.mulf %301, %303 : vector<16x256xf32>
      %305 = arith.addf %287, %304 : vector<16x256xf32>
      %c0_131 = arith.constant 0 : index
      %c142 = arith.constant 142 : index
      %306 = vector.load %arg13[%c0_131, %c142] : memref<16x512xf32, #tpu.memory_space<vmem>>, vector<16x256xf32>
      %c-2_i32_132 = arith.constant -2 : i32
      %307 = vector.broadcast %c-2_i32_132 : i32 to vector<1x256xi32>
      %308 = arith.addi %37, %307 : vector<1x256xi32>
      %c0_i32_133 = arith.constant 0 : i32
      %309 = vector.broadcast %c0_i32_133 : i32 to vector<1x256xi32>
      %310 = arith.cmpi sge, %308, %309 : vector<1x256xi32>
      %c-2_i32_134 = arith.constant -2 : i32
      %311 = vector.broadcast %c-2_i32_134 : i32 to vector<1x256xi32>
      %312 = arith.addi %37, %311 : vector<1x256xi32>
      %c16_i32_135 = arith.constant 16 : i32
      %313 = vector.broadcast %c16_i32_135 : i32 to vector<1x256xi32>
      %314 = arith.cmpi slt, %312, %313 : vector<1x256xi32>
      %315 = arith.andi %310, %314 : vector<1x256xi1>
      %cst_136 = arith.constant 0.000000e+00 : f32
      %316 = vector.shape_cast %315 : vector<1x256xi1> to vector<1x256xi1>
      %317 = vector.broadcast %316 : vector<1x256xi1> to vector<16x256xi1>
      %318 = vector.broadcast %cst_136 : f32 to vector<16x256xf32>
      %319 = arith.select %317, %306, %318 : vector<16x256xi1>, vector<16x256xf32>
      %c0_137 = arith.constant 0 : index
      %c15 = arith.constant 15 : index
      %320 = vector.load %arg6[%c0_137, %c15] : memref<16x25xf32, #tpu.memory_space<vmem>>, vector<16x1xf32>
      %321 = vector.broadcast %320 : vector<16x1xf32> to vector<16x256xf32>
      %322 = arith.mulf %319, %321 : vector<16x256xf32>
      %323 = arith.addf %305, %322 : vector<16x256xf32>
      %c0_138 = arith.constant 0 : index
      %c143 = arith.constant 143 : index
      %324 = vector.load %arg13[%c0_138, %c143] : memref<16x512xf32, #tpu.memory_space<vmem>>, vector<16x256xf32>
      %c-1_i32_139 = arith.constant -1 : i32
      %325 = vector.broadcast %c-1_i32_139 : i32 to vector<1x256xi32>
      %326 = arith.addi %37, %325 : vector<1x256xi32>
      %c0_i32_140 = arith.constant 0 : i32
      %327 = vector.broadcast %c0_i32_140 : i32 to vector<1x256xi32>
      %328 = arith.cmpi sge, %326, %327 : vector<1x256xi32>
      %c-1_i32_141 = arith.constant -1 : i32
      %329 = vector.broadcast %c-1_i32_141 : i32 to vector<1x256xi32>
      %330 = arith.addi %37, %329 : vector<1x256xi32>
      %c16_i32_142 = arith.constant 16 : i32
      %331 = vector.broadcast %c16_i32_142 : i32 to vector<1x256xi32>
      %332 = arith.cmpi slt, %330, %331 : vector<1x256xi32>
      %333 = arith.andi %328, %332 : vector<1x256xi1>
      %cst_143 = arith.constant 0.000000e+00 : f32
      %334 = vector.shape_cast %333 : vector<1x256xi1> to vector<1x256xi1>
      %335 = vector.broadcast %334 : vector<1x256xi1> to vector<16x256xi1>
      %336 = vector.broadcast %cst_143 : f32 to vector<16x256xf32>
      %337 = arith.select %335, %324, %336 : vector<16x256xi1>, vector<16x256xf32>
      %c0_144 = arith.constant 0 : index
      %c16 = arith.constant 16 : index
      %338 = vector.load %arg6[%c0_144, %c16] : memref<16x25xf32, #tpu.memory_space<vmem>>, vector<16x1xf32>
      %339 = vector.broadcast %338 : vector<16x1xf32> to vector<16x256xf32>
      %340 = arith.mulf %337, %339 : vector<16x256xf32>
      %341 = arith.addf %323, %340 : vector<16x256xf32>
      %c0_145 = arith.constant 0 : index
      %c144 = arith.constant 144 : index
      %342 = vector.load %arg13[%c0_145, %c144] : memref<16x512xf32, #tpu.memory_space<vmem>>, vector<16x256xf32>
      %c0_146 = arith.constant 0 : index
      %c17 = arith.constant 17 : index
      %343 = vector.load %arg6[%c0_146, %c17] : memref<16x25xf32, #tpu.memory_space<vmem>>, vector<16x1xf32>
      %344 = vector.broadcast %343 : vector<16x1xf32> to vector<16x256xf32>
      %345 = arith.mulf %342, %344 : vector<16x256xf32>
      %346 = arith.addf %341, %345 : vector<16x256xf32>
      %c0_147 = arith.constant 0 : index
      %c145 = arith.constant 145 : index
      %347 = vector.load %arg13[%c0_147, %c145] : memref<16x512xf32, #tpu.memory_space<vmem>>, vector<16x256xf32>
      %c1_i32_148 = arith.constant 1 : i32
      %348 = vector.broadcast %c1_i32_148 : i32 to vector<1x256xi32>
      %349 = arith.addi %37, %348 : vector<1x256xi32>
      %c0_i32_149 = arith.constant 0 : i32
      %350 = vector.broadcast %c0_i32_149 : i32 to vector<1x256xi32>
      %351 = arith.cmpi sge, %349, %350 : vector<1x256xi32>
      %c1_i32_150 = arith.constant 1 : i32
      %352 = vector.broadcast %c1_i32_150 : i32 to vector<1x256xi32>
      %353 = arith.addi %37, %352 : vector<1x256xi32>
      %c16_i32_151 = arith.constant 16 : i32
      %354 = vector.broadcast %c16_i32_151 : i32 to vector<1x256xi32>
      %355 = arith.cmpi slt, %353, %354 : vector<1x256xi32>
      %356 = arith.andi %351, %355 : vector<1x256xi1>
      %cst_152 = arith.constant 0.000000e+00 : f32
      %357 = vector.shape_cast %356 : vector<1x256xi1> to vector<1x256xi1>
      %358 = vector.broadcast %357 : vector<1x256xi1> to vector<16x256xi1>
      %359 = vector.broadcast %cst_152 : f32 to vector<16x256xf32>
      %360 = arith.select %358, %347, %359 : vector<16x256xi1>, vector<16x256xf32>
      %c0_153 = arith.constant 0 : index
      %c18 = arith.constant 18 : index
      %361 = vector.load %arg6[%c0_153, %c18] : memref<16x25xf32, #tpu.memory_space<vmem>>, vector<16x1xf32>
      %362 = vector.broadcast %361 : vector<16x1xf32> to vector<16x256xf32>
      %363 = arith.mulf %360, %362 : vector<16x256xf32>
      %364 = arith.addf %346, %363 : vector<16x256xf32>
      %c0_154 = arith.constant 0 : index
      %c146 = arith.constant 146 : index
      %365 = vector.load %arg13[%c0_154, %c146] : memref<16x512xf32, #tpu.memory_space<vmem>>, vector<16x256xf32>
      %c2_i32_155 = arith.constant 2 : i32
      %366 = vector.broadcast %c2_i32_155 : i32 to vector<1x256xi32>
      %367 = arith.addi %37, %366 : vector<1x256xi32>
      %c0_i32_156 = arith.constant 0 : i32
      %368 = vector.broadcast %c0_i32_156 : i32 to vector<1x256xi32>
      %369 = arith.cmpi sge, %367, %368 : vector<1x256xi32>
      %c2_i32_157 = arith.constant 2 : i32
      %370 = vector.broadcast %c2_i32_157 : i32 to vector<1x256xi32>
      %371 = arith.addi %37, %370 : vector<1x256xi32>
      %c16_i32_158 = arith.constant 16 : i32
      %372 = vector.broadcast %c16_i32_158 : i32 to vector<1x256xi32>
      %373 = arith.cmpi slt, %371, %372 : vector<1x256xi32>
      %374 = arith.andi %369, %373 : vector<1x256xi1>
      %cst_159 = arith.constant 0.000000e+00 : f32
      %375 = vector.shape_cast %374 : vector<1x256xi1> to vector<1x256xi1>
      %376 = vector.broadcast %375 : vector<1x256xi1> to vector<16x256xi1>
      %377 = vector.broadcast %cst_159 : f32 to vector<16x256xf32>
      %378 = arith.select %376, %365, %377 : vector<16x256xi1>, vector<16x256xf32>
      %c0_160 = arith.constant 0 : index
      %c19 = arith.constant 19 : index
      %379 = vector.load %arg6[%c0_160, %c19] : memref<16x25xf32, #tpu.memory_space<vmem>>, vector<16x1xf32>
      %380 = vector.broadcast %379 : vector<16x1xf32> to vector<16x256xf32>
      %381 = arith.mulf %378, %380 : vector<16x256xf32>
      %382 = arith.addf %364, %381 : vector<16x256xf32>
      %c0_161 = arith.constant 0 : index
      %c158 = arith.constant 158 : index
      %383 = vector.load %arg13[%c0_161, %c158] : memref<16x512xf32, #tpu.memory_space<vmem>>, vector<16x256xf32>
      %c-2_i32_162 = arith.constant -2 : i32
      %384 = vector.broadcast %c-2_i32_162 : i32 to vector<1x256xi32>
      %385 = arith.addi %37, %384 : vector<1x256xi32>
      %c0_i32_163 = arith.constant 0 : i32
      %386 = vector.broadcast %c0_i32_163 : i32 to vector<1x256xi32>
      %387 = arith.cmpi sge, %385, %386 : vector<1x256xi32>
      %c-2_i32_164 = arith.constant -2 : i32
      %388 = vector.broadcast %c-2_i32_164 : i32 to vector<1x256xi32>
      %389 = arith.addi %37, %388 : vector<1x256xi32>
      %c16_i32_165 = arith.constant 16 : i32
      %390 = vector.broadcast %c16_i32_165 : i32 to vector<1x256xi32>
      %391 = arith.cmpi slt, %389, %390 : vector<1x256xi32>
      %392 = arith.andi %387, %391 : vector<1x256xi1>
      %cst_166 = arith.constant 0.000000e+00 : f32
      %393 = vector.shape_cast %392 : vector<1x256xi1> to vector<1x256xi1>
      %394 = vector.broadcast %393 : vector<1x256xi1> to vector<16x256xi1>
      %395 = vector.broadcast %cst_166 : f32 to vector<16x256xf32>
      %396 = arith.select %394, %383, %395 : vector<16x256xi1>, vector<16x256xf32>
      %c0_167 = arith.constant 0 : index
      %c20 = arith.constant 20 : index
      %397 = vector.load %arg6[%c0_167, %c20] : memref<16x25xf32, #tpu.memory_space<vmem>>, vector<16x1xf32>
      %398 = vector.broadcast %397 : vector<16x1xf32> to vector<16x256xf32>
      %399 = arith.mulf %396, %398 : vector<16x256xf32>
      %400 = arith.addf %382, %399 : vector<16x256xf32>
      %c0_168 = arith.constant 0 : index
      %c159 = arith.constant 159 : index
      %401 = vector.load %arg13[%c0_168, %c159] : memref<16x512xf32, #tpu.memory_space<vmem>>, vector<16x256xf32>
      %c-1_i32_169 = arith.constant -1 : i32
      %402 = vector.broadcast %c-1_i32_169 : i32 to vector<1x256xi32>
      %403 = arith.addi %37, %402 : vector<1x256xi32>
      %c0_i32_170 = arith.constant 0 : i32
      %404 = vector.broadcast %c0_i32_170 : i32 to vector<1x256xi32>
      %405 = arith.cmpi sge, %403, %404 : vector<1x256xi32>
      %c-1_i32_171 = arith.constant -1 : i32
      %406 = vector.broadcast %c-1_i32_171 : i32 to vector<1x256xi32>
      %407 = arith.addi %37, %406 : vector<1x256xi32>
      %c16_i32_172 = arith.constant 16 : i32
      %408 = vector.broadcast %c16_i32_172 : i32 to vector<1x256xi32>
      %409 = arith.cmpi slt, %407, %408 : vector<1x256xi32>
      %410 = arith.andi %405, %409 : vector<1x256xi1>
      %cst_173 = arith.constant 0.000000e+00 : f32
      %411 = vector.shape_cast %410 : vector<1x256xi1> to vector<1x256xi1>
      %412 = vector.broadcast %411 : vector<1x256xi1> to vector<16x256xi1>
      %413 = vector.broadcast %cst_173 : f32 to vector<16x256xf32>
      %414 = arith.select %412, %401, %413 : vector<16x256xi1>, vector<16x256xf32>
      %c0_174 = arith.constant 0 : index
      %c21 = arith.constant 21 : index
      %415 = vector.load %arg6[%c0_174, %c21] : memref<16x25xf32, #tpu.memory_space<vmem>>, vector<16x1xf32>
      %416 = vector.broadcast %415 : vector<16x1xf32> to vector<16x256xf32>
      %417 = arith.mulf %414, %416 : vector<16x256xf32>
      %418 = arith.addf %400, %417 : vector<16x256xf32>
      %c0_175 = arith.constant 0 : index
      %c160 = arith.constant 160 : index
      %419 = vector.load %arg13[%c0_175, %c160] : memref<16x512xf32, #tpu.memory_space<vmem>>, vector<16x256xf32>
      %c0_176 = arith.constant 0 : index
      %c22 = arith.constant 22 : index
      %420 = vector.load %arg6[%c0_176, %c22] : memref<16x25xf32, #tpu.memory_space<vmem>>, vector<16x1xf32>
      %421 = vector.broadcast %420 : vector<16x1xf32> to vector<16x256xf32>
      %422 = arith.mulf %419, %421 : vector<16x256xf32>
      %423 = arith.addf %418, %422 : vector<16x256xf32>
      %c0_177 = arith.constant 0 : index
      %c161 = arith.constant 161 : index
      %424 = vector.load %arg13[%c0_177, %c161] : memref<16x512xf32, #tpu.memory_space<vmem>>, vector<16x256xf32>
      %c1_i32_178 = arith.constant 1 : i32
      %425 = vector.broadcast %c1_i32_178 : i32 to vector<1x256xi32>
      %426 = arith.addi %37, %425 : vector<1x256xi32>
      %c0_i32_179 = arith.constant 0 : i32
      %427 = vector.broadcast %c0_i32_179 : i32 to vector<1x256xi32>
      %428 = arith.cmpi sge, %426, %427 : vector<1x256xi32>
      %c1_i32_180 = arith.constant 1 : i32
      %429 = vector.broadcast %c1_i32_180 : i32 to vector<1x256xi32>
      %430 = arith.addi %37, %429 : vector<1x256xi32>
      %c16_i32_181 = arith.constant 16 : i32
      %431 = vector.broadcast %c16_i32_181 : i32 to vector<1x256xi32>
      %432 = arith.cmpi slt, %430, %431 : vector<1x256xi32>
      %433 = arith.andi %428, %432 : vector<1x256xi1>
      %cst_182 = arith.constant 0.000000e+00 : f32
      %434 = vector.shape_cast %433 : vector<1x256xi1> to vector<1x256xi1>
      %435 = vector.broadcast %434 : vector<1x256xi1> to vector<16x256xi1>
      %436 = vector.broadcast %cst_182 : f32 to vector<16x256xf32>
      %437 = arith.select %435, %424, %436 : vector<16x256xi1>, vector<16x256xf32>
      %c0_183 = arith.constant 0 : index
      %c23 = arith.constant 23 : index
      %438 = vector.load %arg6[%c0_183, %c23] : memref<16x25xf32, #tpu.memory_space<vmem>>, vector<16x1xf32>
      %439 = vector.broadcast %438 : vector<16x1xf32> to vector<16x256xf32>
      %440 = arith.mulf %437, %439 : vector<16x256xf32>
      %441 = arith.addf %423, %440 : vector<16x256xf32>
      %c0_184 = arith.constant 0 : index
      %c162 = arith.constant 162 : index
      %442 = vector.load %arg13[%c0_184, %c162] : memref<16x512xf32, #tpu.memory_space<vmem>>, vector<16x256xf32>
      %c2_i32_185 = arith.constant 2 : i32
      %443 = vector.broadcast %c2_i32_185 : i32 to vector<1x256xi32>
      %444 = arith.addi %37, %443 : vector<1x256xi32>
      %c0_i32_186 = arith.constant 0 : i32
      %445 = vector.broadcast %c0_i32_186 : i32 to vector<1x256xi32>
      %446 = arith.cmpi sge, %444, %445 : vector<1x256xi32>
      %c2_i32_187 = arith.constant 2 : i32
      %447 = vector.broadcast %c2_i32_187 : i32 to vector<1x256xi32>
      %448 = arith.addi %37, %447 : vector<1x256xi32>
      %c16_i32_188 = arith.constant 16 : i32
      %449 = vector.broadcast %c16_i32_188 : i32 to vector<1x256xi32>
      %450 = arith.cmpi slt, %448, %449 : vector<1x256xi32>
      %451 = arith.andi %446, %450 : vector<1x256xi1>
      %cst_189 = arith.constant 0.000000e+00 : f32
      %452 = vector.shape_cast %451 : vector<1x256xi1> to vector<1x256xi1>
      %453 = vector.broadcast %452 : vector<1x256xi1> to vector<16x256xi1>
      %454 = vector.broadcast %cst_189 : f32 to vector<16x256xf32>
      %455 = arith.select %453, %442, %454 : vector<16x256xi1>, vector<16x256xf32>
      %c0_190 = arith.constant 0 : index
      %c24 = arith.constant 24 : index
      %456 = vector.load %arg6[%c0_190, %c24] : memref<16x25xf32, #tpu.memory_space<vmem>>, vector<16x1xf32>
      %457 = vector.broadcast %456 : vector<16x1xf32> to vector<16x256xf32>
      %458 = arith.mulf %455, %457 : vector<16x256xf32>
      %459 = arith.addf %441, %458 : vector<16x256xf32>
      %c0_191 = arith.constant 0 : index
      %c0_192 = arith.constant 0 : index
      %460 = vector.load %arg14[%c0_191, %c0_192] : memref<16x256xf32, #tpu.memory_space<vmem>>, vector<16x256xf32>
      tpu.vector_store %arg14[%c0_191, %c0_192], %459 {strides = array<i32>} : memref<16x256xf32, #tpu.memory_space<vmem>>, vector<16x256xf32>,
    } else {
    }
    %c0_22 = arith.constant 0 : index
    %c0_23 = arith.constant 0 : index
    %44 = vector.load %arg14[%c0_22, %c0_23] : memref<16x256xf32, #tpu.memory_space<vmem>>, vector<16x256xf32>
    %c0_24 = arith.constant 0 : index
    %c0_25 = arith.constant 0 : index
    %45 = vector.load %arg7[%c0_24, %c0_25] : memref<16x1xf32, #tpu.memory_space<vmem>>, vector<16x1xf32>
    %46 = vector.broadcast %45 : vector<16x1xf32> to vector<16x256xf32>
    %47 = arith.mulf %44, %46 : vector<16x256xf32>
    %c0_26 = arith.constant 0 : index
    %c0_27 = arith.constant 0 : index
    %48 = vector.load %arg8[%c0_26, %c0_27] : memref<16x1xf32, #tpu.memory_space<vmem>>, vector<16x1xf32>
    %49 = vector.broadcast %48 : vector<16x1xf32> to vector<16x256xf32>
    %50 = arith.addf %47, %49 : vector<16x256xf32>
    %51 = arith.negf %50 : vector<16x256xf32>
    %52 = math.exp %51 : vector<16x256xf32>
    %cst_28 = arith.constant 1.000000e+00 : f32
    %53 = vector.broadcast %cst_28 : f32 to vector<16x256xf32>
    %54 = arith.addf %53, %52 : vector<16x256xf32>
    %55 = arith.divf %53, %54 : vector<16x256xf32>
    %56 = arith.mulf %50, %55 : vector<16x256xf32>
    %cst_29 = arith.constant dense<0.000000e+00> : vector<16xf32>
    %57 = vector.multi_reduction <add>, %56, %cst_29 [1] : vector<16x256xf32> to vector<16xf32>
    %58 = vector.shape_cast %57 : vector<16xf32> to vector<16x1xf32>
    %cst_30 = arith.constant 2.560000e+02 : f32
    %59 = vector.broadcast %cst_30 : f32 to vector<16x1xf32>
    %60 = arith.divf %58, %59 : vector<16x1xf32>
    %61 = vector.broadcast %60 : vector<16x1xf32> to vector<16x256xf32>
    %62 = arith.mulf %56, %61 : vector<16x256xf32>
    %c0_31 = arith.constant 0 : index
    %c0_32 = arith.constant 0 : index
    %63 = vector.load %arg9[%c0_31, %c0_32] : memref<8x16xf32, #tpu.memory_space<vmem>>, vector<8x16xf32>
    %cst_33 = arith.constant dense<0.000000e+00> : vector<8x256xf32>
    %64 = tpu.matmul %63, %62, %cst_33 {dimension_numbers = #tpu.dot_dimension_numbers<[1], [0], [0], [1], [0, 0, 1, 1], [], []>} : vector<8x16xf32>, vector<16x256xf32>, vector<8x256xf32> -> vector<8x256xf32>
    %c0_34 = arith.constant 0 : index
    %c0_35 = arith.constant 0 : index
    %65 = vector.load %arg10[%c0_34, %c0_35] : memref<8x1xf32, #tpu.memory_space<vmem>>, vector<8x1xf32>
    %66 = vector.broadcast %65 : vector<8x1xf32> to vector<8x256xf32>
    %67 = arith.mulf %64, %66 : vector<8x256xf32>
    %c0_36 = arith.constant 0 : index
    %c0_37 = arith.constant 0 : index
    %68 = vector.load %arg11[%c0_36, %c0_37] : memref<8x1xf32, #tpu.memory_space<vmem>>, vector<8x1xf32>
    %69 = vector.broadcast %68 : vector<8x1xf32> to vector<8x256xf32>
    %70 = arith.addf %67, %69 : vector<8x256xf32>
    %71 = arith.addf %70, %1 : vector<8x256xf32>
    %72 = vector.shape_cast %71 : vector<8x256xf32> to vector<1x8x256xf32>
    %c0_38 = arith.constant 0 : index
    %c0_39 = arith.constant 0 : index
    %c0_40 = arith.constant 0 : index
    %73 = vector.load %arg12[%c0_38, %c0_39, %c0_40] : memref<1x8x256xf32, #tpu.memory_space<vmem>>, vector<1x8x256xf32>
    tpu.vector_store %arg12[%c0_38, %c0_39, %c0_40], %72 {strides = array<i32>} : memref<1x8x256xf32, #tpu.memory_space<vmem>>, vector<1x8x256xf32>,
    return
  }
  func.func @transform_0(%arg0: i32, %arg1: i32) -> (i32, i32, i32) {
    %c0_i32 = arith.constant 0 : i32
    %c0_i32_0 = arith.constant 0 : i32
    return %arg0, %arg1, %c0_i32 : i32, i32, i32
  }
  func.func @transform_1(%arg0: i32, %arg1: i32) -> (i32, i32) {
    %c0_i32 = arith.constant 0 : i32
    %c0_i32_0 = arith.constant 0 : i32
    return %arg1, %c0_i32 : i32, i32
  }
  func.func @transform_2(%arg0: i32, %arg1: i32) -> (i32, i32) {
    %c0_i32 = arith.constant 0 : i32
    %c0_i32_0 = arith.constant 0 : i32
    return %arg1, %c0_i32 : i32, i32
  }
  func.func @transform_3(%arg0: i32, %arg1: i32) -> (i32, i32) {
    %c0_i32 = arith.constant 0 : i32
    %c0_i32_0 = arith.constant 0 : i32
    return %arg1, %c0_i32 : i32, i32
  }
  func.func @transform_4(%arg0: i32, %arg1: i32) -> (i32, i32) {
    %c0_i32 = arith.constant 0 : i32
    %c0_i32_0 = arith.constant 0 : i32
    return %arg1, %c0_i32 : i32, i32
  }
  func.func @transform_5(%arg0: i32, %arg1: i32) -> (i32, i32) {
    %c0_i32 = arith.constant 0 : i32
    %c0_i32_0 = arith.constant 0 : i32
    return %arg1, %c0_i32 : i32, i32
  }
  func.func @transform_6(%arg0: i32, %arg1: i32) -> (i32, i32) {
    %c0_i32 = arith.constant 0 : i32
    %c0_i32_0 = arith.constant 0 : i32
    return %arg1, %c0_i32 : i32, i32
  }
  func.func @transform_7(%arg0: i32, %arg1: i32) -> (i32, i32) {
    %c0_i32 = arith.constant 0 : i32
    %c0_i32_0 = arith.constant 0 : i32
    return %arg1, %c0_i32 : i32, i32
  }
  func.func @transform_8(%arg0: i32, %arg1: i32) -> (i32, i32) {
    %c0_i32 = arith.constant 0 : i32
    %c0_i32_0 = arith.constant 0 : i32
    return %arg1, %c0_i32 : i32, i32
  }
  func.func @transform_9(%arg0: i32, %arg1: i32) -> (i32, i32) {
    %c0_i32 = arith.constant 0 : i32
    %c0_i32_0 = arith.constant 0 : i32
    return %arg1, %c0_i32 : i32, i32
  }
  func.func @transform_10(%arg0: i32, %arg1: i32) -> (i32, i32, i32) {
    %c0_i32 = arith.constant 0 : i32
    %c0_i32_0 = arith.constant 0 : i32
    return %arg0, %arg1, %c0_i32 : i32, i32, i32
  }
}

</mosaic_0001>

<llo_original>
// kernel: _lambda_.1
$region0: #{_lambda_.1}
  #allocation0 [shape = 'u32[]', space=smem, size = 0x4, offset = 0x4, fixed_abs, tag = 'smem constant byte address 0x4 - core index']
  #allocation1 [shape = 'u32[144,128]{1,0:T(1,128)}', space=vmem, size = 0x12000, scoped, tag = 'internal scratch']
  #allocation2 [shape = 'f32[16,512]{1,0:T(8,128)}', space=vmem, size = 0x8000, scoped, tag = 'scratch operand']
  #allocation3 [shape = 'f32[16,256]{1,0:T(8,128)}', space=vmem, size = 0x4000, scoped, tag = 'scratch operand']
  %s0 = inlined_call_operand.vmem [shape: f32[2,16,256], index: 0, kind: input, shape index: {}]
  %s1 = inlined_call_operand.vmem [shape: f32[32,8], index: 1, kind: input, shape index: {}]
  %s2 = inlined_call_operand.vmem [shape: f32[32,1], index: 2, kind: input, shape index: {}]
  %s3 = inlined_call_operand.vmem [shape: f32[32,1], index: 3, kind: input, shape index: {}]
  %s4 = inlined_call_operand.vmem [shape: f32[32,25], index: 4, kind: input, shape index: {}]
  %s5 = inlined_call_operand.vmem [shape: f32[32,1], index: 5, kind: input, shape index: {}]
  %s6 = inlined_call_operand.vmem [shape: f32[32,1], index: 6, kind: input, shape index: {}]
  %s7 = inlined_call_operand.vmem [shape: f32[16,16], index: 7, kind: input, shape index: {}]
  %s8 = inlined_call_operand.vmem [shape: f32[16,1], index: 8, kind: input, shape index: {}]
  %s9 = inlined_call_operand.vmem [shape: f32[16,1], index: 9, kind: input, shape index: {}]
  %s10 = inlined_call_operand.vmem [shape: f32[2,16,256], index: 10, kind: output, shape index: {}]
  %s11 = sld [smem:[#allocation0]]
  $region81: #{_lambda_.1} parent=0
    _
  %s13 = ssub.s32 1, %s11
  %s14 = scalar_select 0, %s13, %s11
  loop: start=0, step=1, limit=6
  $region2: #{_lambda_.1} parent=0 // loop_pre_header
    _
  $region3: #{_lambda_.1} parent=0 // loop_header
    %s16 = sphi 0, %s20
    %p17 = scmp.ge.s32.totalorder %s16, 6
    %s23 = sphi 0, %s35
    %s24 = sphi 0, %s31
    %s25 = sphi 0, %s23
    %s26 = sphi 0, %s24
    %s27 = sphi 0, %s25
    %s28 = sphi 0, %s26
    %s40 = sphi 0, %s42
    %s43 = sphi 0, %s40
    %s44 = sphi 0, %s43
    %s60 = sphi 0, %s44
    %s66 = sphi 0, %s68
    %s69 = sphi 0, %s66
    %s70 = sphi 0, %s69
    %s86 = sphi 0, %s70
    %s92 = sphi 0, %s94
    %s95 = sphi 0, %s92
    %s96 = sphi 0, %s95
    %s112 = sphi 0, %s96
    %s118 = sphi 0, %s120
    %s121 = sphi 0, %s118
    %s122 = sphi 0, %s121
    %s138 = sphi 0, %s122
    %s144 = sphi 0, %s146
    %s147 = sphi 0, %s144
    %s148 = sphi 0, %s147
    %s164 = sphi 0, %s148
    %s170 = sphi 0, %s172
    %s173 = sphi 0, %s170
    %s174 = sphi 0, %s173
    %s190 = sphi 0, %s174
    %s196 = sphi 0, %s198
    %s199 = sphi 0, %s196
    %s200 = sphi 0, %s199
    %s216 = sphi 0, %s200
    %s222 = sphi 0, %s224
    %s225 = sphi 0, %s222
    %s226 = sphi 0, %s225
    %s242 = sphi 0, %s226
    %s248 = sphi 0, %s250
    %s251 = sphi 0, %s248
    %s252 = sphi 0, %s251
    %s268 = sphi 0, %s252
    %s274 = sphi 0, %s276
    %s277 = sphi 0, %s274
    %s278 = sphi 0, %s277
    %s294 = sphi 0, %s278
    %s302 = sphi 0, %s304
    %s305 = sphi 0, %s302
    %s306 = sphi 0, %s305
    %s322 = sphi 0, %s306
  $region4: #{_lambda_.1} parent=0 // loop_header_branch
    %19 = sbr.rel (%p17) target = $region8
  $region5: #{_lambda_.1} parent=0 // loop_body
    %s21 = ssub.s32 %s16, 1
    %s22 = ssub.s32 %s16, 2
    %s29 = sadd.s32 1, %s24
    %p30 = scmp.ge.s32.totalorder %s29, 2
    %s31 = scalar_select %p30, 0, %s29
    %s32 = sadd.s32 1, %s23
    %s33 = scalar_select %p30, %s32, %s23
    %p34 = scmp.ge.s32.totalorder %s33, 2
    %s35 = scalar_select %p34, 0, %s33
    %s36 = ssub.s32 %s23, %s35
    %s37 = ssub.s32 %s24, %s31
    %s38 = sor.u32 %s36, %s37
    %p39 = scmp.eq.s32.totalorder %s38, 0
    %s41 = sadd.s32 %s40, 1
    %s42 = scalar_select %p39, %s40, %s41
    %p45 = pneg %p39
    %p46 = scmp.eq.s32.totalorder %s16, 3
    %p47 = por %p45, %p46
    %p48 = scmp.ne.s32.totalorder %s40, %s43
    %p49 = scmp.eq.s32.totalorder %s16, 0
    %p50 = por %p48, %p49
    %p51 = scmp.ne.s32.totalorder %s40, %s43
    %p52 = scmp.eq.s32.totalorder %s21, 3
    %p53 = por %p51, %p52
    %p54 = scmp.ne.s32.totalorder %s43, %s44
    %p55 = scmp.eq.s32.totalorder %s21, 0
    %p56 = por %p54, %p55
    %p57 = scmp.ne.s32.totalorder %s43, %s44
    %p58 = scmp.eq.s32.totalorder %s22, 3
    %p59 = por %p57, %p58
    %p61 = scmp.ne.s32.totalorder %s44, %s60
    %p62 = scmp.eq.s32.totalorder %s22, 0
    %p63 = por %p61, %p62
    %s64 = ssub.s32 %s24, %s31
    %p65 = scmp.eq.s32.totalorder %s64, 0
    %s67 = sadd.s32 %s66, 1
    %s68 = scalar_select %p65, %s66, %s67
    %p71 = pneg %p65
    %p72 = scmp.eq.s32.totalorder %s16, 3
    %p73 = por %p71, %p72
    %p74 = scmp.ne.s32.totalorder %s66, %s69
    %p75 = scmp.eq.s32.totalorder %s16, 0
    %p76 = por %p74, %p75
    %p77 = scmp.ne.s32.totalorder %s66, %s69
    %p78 = scmp.eq.s32.totalorder %s21, 3
    %p79 = por %p77, %p78
    %p80 = scmp.ne.s32.totalorder %s69, %s70
    %p81 = scmp.eq.s32.totalorder %s21, 0
    %p82 = por %p80, %p81
    %p83 = scmp.ne.s32.totalorder %s69, %s70
    %p84 = scmp.eq.s32.totalorder %s22, 3
    %p85 = por %p83, %p84
    %p87 = scmp.ne.s32.totalorder %s70, %s86
    %p88 = scmp.eq.s32.totalorder %s22, 0
    %p89 = por %p87, %p88
    %s90 = ssub.s32 %s24, %s31
    %p91 = scmp.eq.s32.totalorder %s90, 0
    %s93 = sadd.s32 %s92, 1
    %s94 = scalar_select %p91, %s92, %s93
    %p97 = pneg %p91
    %p98 = scmp.eq.s32.totalorder %s16, 3
    %p99 = por %p97, %p98
    %p100 = scmp.ne.s32.totalorder %s92, %s95
    %p101 = scmp.eq.s32.totalorder %s16, 0
    %p102 = por %p100, %p101
    %p103 = scmp.ne.s32.totalorder %s92, %s95
    %p104 = scmp.eq.s32.totalorder %s21, 3
    %p105 = por %p103, %p104
    %p106 = scmp.ne.s32.totalorder %s95, %s96
    %p107 = scmp.eq.s32.totalorder %s21, 0
    %p108 = por %p106, %p107
    %p109 = scmp.ne.s32.totalorder %s95, %s96
    %p110 = scmp.eq.s32.totalorder %s22, 3
    %p111 = por %p109, %p110
    %p113 = scmp.ne.s32.totalorder %s96, %s112
    %p114 = scmp.eq.s32.totalorder %s22, 0
    %p115 = por %p113, %p114
    %s116 = ssub.s32 %s24, %s31
    %p117 = scmp.eq.s32.totalorder %s116, 0
    %s119 = sadd.s32 %s118, 1
    %s120 = scalar_select %p117, %s118, %s119
    %p123 = pneg %p117
    %p124 = scmp.eq.s32.totalorder %s16, 3
    %p125 = por %p123, %p124
    %p126 = scmp.ne.s32.totalorder %s118, %s121
    %p127 = scmp.eq.s32.totalorder %s16, 0
    %p128 = por %p126, %p127
    %p129 = scmp.ne.s32.totalorder %s118, %s121
    %p130 = scmp.eq.s32.totalorder %s21, 3
    %p131 = por %p129, %p130
    %p132 = scmp.ne.s32.totalorder %s121, %s122
    %p133 = scmp.eq.s32.totalorder %s21, 0
    %p134 = por %p132, %p133
    %p135 = scmp.ne.s32.totalorder %s121, %s122
    %p136 = scmp.eq.s32.totalorder %s22, 3
    %p137 = por %p135, %p136
    %p139 = scmp.ne.s32.totalorder %s122, %s138
    %p140 = scmp.eq.s32.totalorder %s22, 0
    %p141 = por %p139, %p140
    %s142 = ssub.s32 %s24, %s31
    %p143 = scmp.eq.s32.totalorder %s142, 0
    %s145 = sadd.s32 %s144, 1
    %s146 = scalar_select %p143, %s144, %s145
    %p149 = pneg %p143
    %p150 = scmp.eq.s32.totalorder %s16, 3
    %p151 = por %p149, %p150
    %p152 = scmp.ne.s32.totalorder %s144, %s147
    %p153 = scmp.eq.s32.totalorder %s16, 0
    %p154 = por %p152, %p153
    %p155 = scmp.ne.s32.totalorder %s144, %s147
    %p156 = scmp.eq.s32.totalorder %s21, 3
    %p157 = por %p155, %p156
    %p158 = scmp.ne.s32.totalorder %s147, %s148
    %p159 = scmp.eq.s32.totalorder %s21, 0
    %p160 = por %p158, %p159
    %p161 = scmp.ne.s32.totalorder %s147, %s148
    %p162 = scmp.eq.s32.totalorder %s22, 3
    %p163 = por %p161, %p162
    %p165 = scmp.ne.s32.totalorder %s148, %s164
    %p166 = scmp.eq.s32.totalorder %s22, 0
    %p167 = por %p165, %p166
    %s168 = ssub.s32 %s24, %s31
    %p169 = scmp.eq.s32.totalorder %s168, 0
    %s171 = sadd.s32 %s170, 1
    %s172 = scalar_select %p169, %s170, %s171
    %p175 = pneg %p169
    %p176 = scmp.eq.s32.totalorder %s16, 3
    %p177 = por %p175, %p176
    %p178 = scmp.ne.s32.totalorder %s170, %s173
    %p179 = scmp.eq.s32.totalorder %s16, 0
    %p180 = por %p178, %p179
    %p181 = scmp.ne.s32.totalorder %s170, %s173
    %p182 = scmp.eq.s32.totalorder %s21, 3
    %p183 = por %p181, %p182
    %p184 = scmp.ne.s32.totalorder %s173, %s174
    %p185 = scmp.eq.s32.totalorder %s21, 0
    %p186 = por %p184, %p185
    %p187 = scmp.ne.s32.totalorder %s173, %s174
    %p188 = scmp.eq.s32.totalorder %s22, 3
    %p189 = por %p187, %p188
    %p191 = scmp.ne.s32.totalorder %s174, %s190
    %p192 = scmp.eq.s32.totalorder %s22, 0
    %p193 = por %p191, %p192
    %s194 = ssub.s32 %s24, %s31
    %p195 = scmp.eq.s32.totalorder %s194, 0
    %s197 = sadd.s32 %s196, 1
    %s198 = scalar_select %p195, %s196, %s197
    %p201 = pneg %p195
    %p202 = scmp.eq.s32.totalorder %s16, 3
    %p203 = por %p201, %p202
    %p204 = scmp.ne.s32.totalorder %s196, %s199
    %p205 = scmp.eq.s32.totalorder %s16, 0
    %p206 = por %p204, %p205
    %p207 = scmp.ne.s32.totalorder %s196, %s199
    %p208 = scmp.eq.s32.totalorder %s21, 3
    %p209 = por %p207, %p208
    %p210 = scmp.ne.s32.totalorder %s199, %s200
    %p211 = scmp.eq.s32.totalorder %s21, 0
    %p212 = por %p210, %p211
    %p213 = scmp.ne.s32.totalorder %s199, %s200
    %p214 = scmp.eq.s32.totalorder %s22, 3
    %p215 = por %p213, %p214
    %p217 = scmp.ne.s32.totalorder %s200, %s216
    %p218 = scmp.eq.s32.totalorder %s22, 0
    %p219 = por %p217, %p218
    %s220 = ssub.s32 %s24, %s31
    %p221 = scmp.eq.s32.totalorder %s220, 0
    %s223 = sadd.s32 %s222, 1
    %s224 = scalar_select %p221, %s222, %s223
    %p227 = pneg %p221
    %p228 = scmp.eq.s32.totalorder %s16, 3
    %p229 = por %p227, %p228
    %p230 = scmp.ne.s32.totalorder %s222, %s225
    %p231 = scmp.eq.s32.totalorder %s16, 0
    %p232 = por %p230, %p231
    %p233 = scmp.ne.s32.totalorder %s222, %s225
    %p234 = scmp.eq.s32.totalorder %s21, 3
    %p235 = por %p233, %p234
    %p236 = scmp.ne.s32.totalorder %s225, %s226
    %p237 = scmp.eq.s32.totalorder %s21, 0
    %p238 = por %p236, %p237
    %p239 = scmp.ne.s32.totalorder %s225, %s226
    %p240 = scmp.eq.s32.totalorder %s22, 3
    %p241 = por %p239, %p240
    %p243 = scmp.ne.s32.totalorder %s226, %s242
    %p244 = scmp.eq.s32.totalorder %s22, 0
    %p245 = por %p243, %p244
    %s246 = ssub.s32 %s24, %s31
    %p247 = scmp.eq.s32.totalorder %s246, 0
    %s249 = sadd.s32 %s248, 1
    %s250 = scalar_select %p247, %s248, %s249
    %p253 = pneg %p247
    %p254 = scmp.eq.s32.totalorder %s16, 3
    %p255 = por %p253, %p254
    %p256 = scmp.ne.s32.totalorder %s248, %s251
    %p257 = scmp.eq.s32.totalorder %s16, 0
    %p258 = por %p256, %p257
    %p259 = scmp.ne.s32.totalorder %s248, %s251
    %p260 = scmp.eq.s32.totalorder %s21, 3
    %p261 = por %p259, %p260
    %p262 = scmp.ne.s32.totalorder %s251, %s252
    %p263 = scmp.eq.s32.totalorder %s21, 0
    %p264 = por %p262, %p263
    %p265 = scmp.ne.s32.totalorder %s251, %s252
    %p266 = scmp.eq.s32.totalorder %s22, 3
    %p267 = por %p265, %p266
    %p269 = scmp.ne.s32.totalorder %s252, %s268
    %p270 = scmp.eq.s32.totalorder %s22, 0
    %p271 = por %p269, %p270
    %s272 = ssub.s32 %s24, %s31
    %p273 = scmp.eq.s32.totalorder %s272, 0
    %s275 = sadd.s32 %s274, 1
    %s276 = scalar_select %p273, %s274, %s275
    %p279 = pneg %p273
    %p280 = scmp.eq.s32.totalorder %s16, 3
    %p281 = por %p279, %p280
    %p282 = scmp.ne.s32.totalorder %s274, %s277
    %p283 = scmp.eq.s32.totalorder %s16, 0
    %p284 = por %p282, %p283
    %p285 = scmp.ne.s32.totalorder %s274, %s277
    %p286 = scmp.eq.s32.totalorder %s21, 3
    %p287 = por %p285, %p286
    %p288 = scmp.ne.s32.totalorder %s277, %s278
    %p289 = scmp.eq.s32.totalorder %s21, 0
    %p290 = por %p288, %p289
    %p291 = scmp.ne.s32.totalorder %s277, %s278
    %p292 = scmp.eq.s32.totalorder %s22, 3
    %p293 = por %p291, %p292
    %p295 = scmp.ne.s32.totalorder %s278, %s294
    %p296 = scmp.eq.s32.totalorder %s22, 0
    %p297 = por %p295, %p296
    %s298 = ssub.s32 %s23, %s35
    %s299 = ssub.s32 %s24, %s31
    %s300 = sor.u32 %s298, %s299
    %p301 = scmp.eq.s32.totalorder %s300, 0
    %s303 = sadd.s32 %s302, 1
    %s304 = scalar_select %p301, %s302, %s303
    %p307 = pneg %p301
    %p308 = scmp.eq.s32.totalorder %s16, 3
    %p309 = por %p307, %p308
    %p310 = scmp.ne.s32.totalorder %s302, %s305
    %p311 = scmp.eq.s32.totalorder %s16, 0
    %p312 = por %p310, %p311
    %p313 = scmp.ne.s32.totalorder %s302, %s305
    %p314 = scmp.eq.s32.totalorder %s21, 3
    %p315 = por %p313, %p314
    %p316 = scmp.ne.s32.totalorder %s305, %s306
    %p317 = scmp.eq.s32.totalorder %s21, 0
    %p318 = por %p316, %p317
    %p319 = scmp.ne.s32.totalorder %s305, %s306
    %p320 = scmp.eq.s32.totalorder %s22, 3
    %p321 = por %p319, %p320
    %p323 = scmp.ne.s32.totalorder %s306, %s322
    %p324 = scmp.eq.s32.totalorder %s22, 0
    %p325 = por %p323, %p324
    %p326 = scmp.le.s32.totalorder 1, %s16
    %p327 = scmp.lt.s32.totalorder %s16, 5
    %p328 = pnand %p326, %p327
    %p329 = pneg %p328
    // Predicated region
    $region9: #{_lambda_.1} parent=5 // pred_check
      _
    $region10: #{_lambda_.1} parent=5 // pred_check_branch
      %331 = sbr.rel (%p328) target = $region12
    $region11: #{_lambda_.1} parent=5 // pred_region
      %s332 = ssub.s32 %s16, 1
    $region12: #{_lambda_.1} parent=5 // pred_fallthru
      _
    %p333 = scmp.lt.s32.totalorder %s16, 4
    // Predicated region
    $region13: #{_lambda_.1} parent=5 // pred_check
      %p334 = pneg %p333
    $region14: #{_lambda_.1} parent=5 // pred_check_branch
      %336 = sbr.rel (%p334) target = $region16
    $region15: #{_lambda_.1} parent=5 // pred_region
      // Predicated region
      $region17: #{_lambda_.1} parent=15 // pred_check
        %p337 = pneg %p50
      $region18: #{_lambda_.1} parent=15 // pred_check_branch
        %339 = sbr.rel (%p337) target = $region20
      $region19: #{_lambda_.1} parent=15 // pred_region
        %p340 = scmp.lt.s32.totalorder %s23, 1
        %s341 = scalar_select %p340, %s23, 1
        %p342 = scmp.lt.s32.totalorder %s24, 1
        %s343 = scalar_select %p342, %s24, 1
        %s344 = smul.addr %s343, 2
        %s345 = smul.addr %s341, 4
        %s346 = sadd.s32 %s344, %s345
        %s347 = smul.addr %s346, 8
        %s348 = scalar_lea.vmem %s0, %s347
      $region20: #{_lambda_.1} parent=15 // pred_fallthru
        _
      // Predicated region
      $region21: #{_lambda_.1} parent=15 // pred_check
        %p349 = pneg %p76
      $region22: #{_lambda_.1} parent=15 // pred_check_branch
        %351 = sbr.rel (%p349) target = $region24
      $region23: #{_lambda_.1} parent=15 // pred_region
        %s352 = smul.u32 2, %s24
        %p353 = scmp.lt.s32.totalorder %s352, 3
        %s354 = scalar_select %p353, %s352, 3
        %s355 = smul.addr %s354, 8
        %s356 = scalar_lea.vmem %s1, %s355
        %s357 = smul.u32 2, %s24
      $region24: #{_lambda_.1} parent=15 // pred_fallthru
        _
      // Predicated region
      $region25: #{_lambda_.1} parent=15 // pred_check
        %p358 = pneg %p102
      $region26: #{_lambda_.1} parent=15 // pred_check_branch
        %360 = sbr.rel (%p358) target = $region28
      $region27: #{_lambda_.1} parent=15 // pred_region
        %s361 = smul.u32 2, %s24
        %p362 = scmp.lt.s32.totalorder %s361, 3
        %s363 = scalar_select %p362, %s361, 3
        %s364 = smul.addr %s363, 8
        %s365 = scalar_lea.vmem %s2, %s364
        %s366 = smul.u32 2, %s24
      $region28: #{_lambda_.1} parent=15 // pred_fallthru
        _
      // Predicated region
      $region29: #{_lambda_.1} parent=15 // pred_check
        %p367 = pneg %p128
      $region30: #{_lambda_.1} parent=15 // pred_check_branch
        %369 = sbr.rel (%p367) target = $region32
      $region31: #{_lambda_.1} parent=15 // pred_region
        %s370 = smul.u32 2, %s24
        %p371 = scmp.lt.s32.totalorder %s370, 3
        %s372 = scalar_select %p371, %s370, 3
        %s373 = smul.addr %s372, 8
        %s374 = scalar_lea.vmem %s3, %s373
        %s375 = smul.u32 2, %s24
      $region32: #{_lambda_.1} parent=15 // pred_fallthru
        _
      // Predicated region
      $region33: #{_lambda_.1} parent=15 // pred_check
        %p376 = pneg %p154
      $region34: #{_lambda_.1} parent=15 // pred_check_branch
        %378 = sbr.rel (%p376) target = $region36
      $region35: #{_lambda_.1} parent=15 // pred_region
        %s379 = smul.u32 2, %s24
        %p380 = scmp.lt.s32.totalorder %s379, 3
        %s381 = scalar_select %p380, %s379, 3
        %s382 = smul.addr %s381, 8
        %s383 = scalar_lea.vmem %s4, %s382
        %s384 = smul.u32 2, %s24
      $region36: #{_lambda_.1} parent=15 // pred_fallthru
        _
      // Predicated region
      $region37: #{_lambda_.1} parent=15 // pred_check
        %p385 = pneg %p180
      $region38: #{_lambda_.1} parent=15 // pred_check_branch
        %387 = sbr.rel (%p385) target = $region40
      $region39: #{_lambda_.1} parent=15 // pred_region
        %s388 = smul.u32 2, %s24
        %p389 = scmp.lt.s32.totalorder %s388, 3
        %s390 = scalar_select %p389, %s388, 3
        %s391 = smul.addr %s390, 8
        %s392 = scalar_lea.vmem %s5, %s391
        %s393 = smul.u32 2, %s24
      $region40: #{_lambda_.1} parent=15 // pred_fallthru
        _
      // Predicated region
      $region41: #{_lambda_.1} parent=15 // pred_check
        %p394 = pneg %p206
      $region42: #{_lambda_.1} parent=15 // pred_check_branch
        %396 = sbr.rel (%p394) target = $region44
      $region43: #{_lambda_.1} parent=15 // pred_region
        %s397 = smul.u32 2, %s24
        %p398 = scmp.lt.s32.totalorder %s397, 3
        %s399 = scalar_select %p398, %s397, 3
        %s400 = smul.addr %s399, 8
        %s401 = scalar_lea.vmem %s6, %s400
        %s402 = smul.u32 2, %s24
      $region44: #{_lambda_.1} parent=15 // pred_fallthru
        _
      // Predicated region
      $region45: #{_lambda_.1} parent=15 // pred_check
        %p403 = pneg %p232
      $region46: #{_lambda_.1} parent=15 // pred_check_branch
        %405 = sbr.rel (%p403) target = $region48
      $region47: #{_lambda_.1} parent=15 // pred_region
        %p406 = scmp.lt.s32.totalorder %s24, 1
        %s407 = scalar_select %p406, %s24, 1
        %s408 = smul.addr %s407, 8
        %s409 = scalar_lea.vmem %s7, %s408
      $region48: #{_lambda_.1} parent=15 // pred_fallthru
        _
      // Predicated region
      $region49: #{_lambda_.1} parent=15 // pred_check
        %p410 = pneg %p258
      $region50: #{_lambda_.1} parent=15 // pred_check_branch
        %412 = sbr.rel (%p410) target = $region52
      $region51: #{_lambda_.1} parent=15 // pred_region
        %p413 = scmp.lt.s32.totalorder %s24, 1
        %s414 = scalar_select %p413, %s24, 1
        %s415 = smul.addr %s414, 8
        %s416 = scalar_lea.vmem %s8, %s415
      $region52: #{_lambda_.1} parent=15 // pred_fallthru
        _
      // Predicated region
      $region53: #{_lambda_.1} parent=15 // pred_check
        %p417 = pneg %p284
      $region54: #{_lambda_.1} parent=15 // pred_check_branch
        %419 = sbr.rel (%p417) target = $region56
      $region55: #{_lambda_.1} parent=15 // pred_region
        %p420 = scmp.lt.s32.totalorder %s24, 1
        %s421 = scalar_select %p420, %s24, 1
        %s422 = smul.addr %s421, 8
        %s423 = scalar_lea.vmem %s9, %s422
      $region56: #{_lambda_.1} parent=15 // pred_fallthru
        _
    $region16: #{_lambda_.1} parent=5 // pred_fallthru
      _
    %p424 = scmp.le.s32.totalorder 1, %s16
    %p425 = scmp.lt.s32.totalorder %s16, 5
    %p426 = pnand %p424, %p425
    %p427 = pneg %p426
    // Predicated region
    $region57: #{_lambda_.1} parent=5 // pred_check
      _
    $region58: #{_lambda_.1} parent=5 // pred_check_branch
      %429 = sbr.rel (%p426) target = $region60
    $region59: #{_lambda_.1} parent=5 // pred_region
      %s430 = ssub.s32 %s16, 1
      %p431 = scmp.lt.s32.totalorder %s25, 1
      %s432 = scalar_select %p431, %s25, 1
      %p433 = scmp.lt.s32.totalorder %s26, 1
      %s434 = scalar_select %p433, %s26, 1
      %s435 = smul.addr %s434, 2
      %s436 = smul.addr %s432, 4
      %s437 = sadd.s32 %s435, %s436
      %s438 = smul.addr %s437, 8
      %s439 = scalar_lea.vmem %s0, %s438
      %p440 = pneg %p56
      %p441 = pneg %p53
      %s442 = smul.u32 2, %s26
      %p443 = scmp.lt.s32.totalorder %s442, 3
      %s444 = scalar_select %p443, %s442, 3
      %s445 = smul.addr %s444, 8
      %s446 = scalar_lea.vmem %s1, %s445
      %p447 = pneg %p82
      %p448 = pneg %p79
      %s449 = smul.u32 2, %s26
      %p450 = scmp.lt.s32.totalorder %s449, 3
      %s451 = scalar_select %p450, %s449, 3
      %s452 = smul.addr %s451, 8
      %s453 = scalar_lea.vmem %s2, %s452
      %p454 = pneg %p108
      %p455 = pneg %p105
      %s456 = smul.u32 2, %s26
      %p457 = scmp.lt.s32.totalorder %s456, 3
      %s458 = scalar_select %p457, %s456, 3
      %s459 = smul.addr %s458, 8
      %s460 = scalar_lea.vmem %s3, %s459
      %p461 = pneg %p134
      %p462 = pneg %p131
      %s463 = smul.u32 2, %s26
      %p464 = scmp.lt.s32.totalorder %s463, 3
      %s465 = scalar_select %p464, %s463, 3
      %s466 = smul.addr %s465, 8
      %s467 = scalar_lea.vmem %s4, %s466
      %p468 = pneg %p160
      %p469 = pneg %p157
      %s470 = smul.u32 2, %s26
      %p471 = scmp.lt.s32.totalorder %s470, 3
      %s472 = scalar_select %p471, %s470, 3
      %s473 = smul.addr %s472, 8
      %s474 = scalar_lea.vmem %s5, %s473
      %p475 = pneg %p186
      %p476 = pneg %p183
      %s477 = smul.u32 2, %s26
      %p478 = scmp.lt.s32.totalorder %s477, 3
      %s479 = scalar_select %p478, %s477, 3
      %s480 = smul.addr %s479, 8
      %s481 = scalar_lea.vmem %s6, %s480
      %p482 = pneg %p212
      %p483 = pneg %p209
      %p484 = scmp.lt.s32.totalorder %s26, 1
      %s485 = scalar_select %p484, %s26, 1
      %s486 = smul.addr %s485, 8
      %s487 = scalar_lea.vmem %s7, %s486
      %p488 = pneg %p238
      %p489 = pneg %p235
      %p490 = scmp.lt.s32.totalorder %s26, 1
      %s491 = scalar_select %p490, %s26, 1
      %s492 = smul.addr %s491, 8
      %s493 = scalar_lea.vmem %s8, %s492
      %p494 = pneg %p264
      %p495 = pneg %p261
      %p496 = scmp.lt.s32.totalorder %s26, 1
      %s497 = scalar_select %p496, %s26, 1
      %s498 = smul.addr %s497, 8
      %s499 = scalar_lea.vmem %s9, %s498
      %p500 = pneg %p290
      %p501 = pneg %p287
      %p502 = pneg %p318
      %p503 = pneg %p315
      %p504 = scmp.lt.s32.totalorder %s25, 1
      %s505 = scalar_select %p504, %s25, 1
      %p506 = scmp.lt.s32.totalorder %s26, 1
      %s507 = scalar_select %p506, %s26, 1
      %s508 = smul.addr %s507, 2
      %s509 = smul.addr %s505, 4
      %s510 = sadd.s32 %s508, %s509
      %s511 = smul.addr %s510, 8
      %s512 = scalar_lea.vmem %s10, %s511
      %p513 = scmp.lt.s32.totalorder %s25, 1
      %s514 = scalar_select %p513, %s25, 1
      %p515 = scmp.lt.s32.totalorder %s26, 1
      %s516 = scalar_select %p515, %s26, 1
      %s517 = smul.addr %s516, 2
      %s518 = smul.addr %s514, 4
      %s519 = sadd.s32 %s517, %s518
      %s520 = smul.addr %s519, 8
      %s521 = scalar_lea.vmem %s0, %s520
      %s522 = smul.u32 2, %s26
      %p523 = scmp.lt.s32.totalorder %s522, 3
      %s524 = scalar_select %p523, %s522, 3
      %s525 = smul.addr %s524, 8
      %s526 = scalar_lea.vmem %s1, %s525
      %s527 = smul.u32 2, %s26
      %s528 = smul.u32 2, %s26
      %p529 = scmp.lt.s32.totalorder %s528, 3
      %s530 = scalar_select %p529, %s528, 3
      %s531 = smul.addr %s530, 8
      %s532 = scalar_lea.vmem %s2, %s531
      %s533 = smul.u32 2, %s26
      %s534 = smul.u32 2, %s26
      %p535 = scmp.lt.s32.totalorder %s534, 3
      %s536 = scalar_select %p535, %s534, 3
      %s537 = smul.addr %s536, 8
      %s538 = scalar_lea.vmem %s3, %s537
      %s539 = smul.u32 2, %s26
      %s540 = smul.u32 2, %s26
      %p541 = scmp.lt.s32.totalorder %s540, 3
      %s542 = scalar_select %p541, %s540, 3
      %s543 = smul.addr %s542, 8
      %s544 = scalar_lea.vmem %s4, %s543
      %s545 = smul.u32 2, %s26
      %s546 = smul.u32 2, %s26
      %p547 = scmp.lt.s32.totalorder %s546, 3
      %s548 = scalar_select %p547, %s546, 3
      %s549 = smul.addr %s548, 8
      %s550 = scalar_lea.vmem %s5, %s549
      %s551 = smul.u32 2, %s26
      %s552 = smul.u32 2, %s26
      %p553 = scmp.lt.s32.totalorder %s552, 3
      %s554 = scalar_select %p553, %s552, 3
      %s555 = smul.addr %s554, 8
      %s556 = scalar_lea.vmem %s6, %s555
      %s557 = smul.u32 2, %s26
      %p558 = scmp.lt.s32.totalorder %s26, 1
      %s559 = scalar_select %p558, %s26, 1
      %s560 = smul.addr %s559, 8
      %s561 = scalar_lea.vmem %s7, %s560
      %p562 = scmp.lt.s32.totalorder %s26, 1
      %s563 = scalar_select %p562, %s26, 1
      %s564 = smul.addr %s563, 8
      %s565 = scalar_lea.vmem %s8, %s564
      %p566 = scmp.lt.s32.totalorder %s26, 1
      %s567 = scalar_select %p566, %s26, 1
      %s568 = smul.addr %s567, 8
      %s569 = scalar_lea.vmem %s9, %s568
      %p570 = scmp.lt.s32.totalorder %s25, 1
      %s571 = scalar_select %p570, %s25, 1
      %p572 = scmp.lt.s32.totalorder %s26, 1
      %s573 = scalar_select %p572, %s26, 1
      %s574 = smul.addr %s573, 2
      %s575 = smul.addr %s571, 4
      %s576 = sadd.s32 %s574, %s575
      %s577 = smul.addr %s576, 8
      %s578 = scalar_lea.vmem %s10, %s577
      %v579 = vld [vmem:[%s521] sm:$0xff]
      %v580 = vld [vmem:[%s521 + $0x8] sm:$0xff]
      %v581 = vld [vmem:[%s526] sm:$0xff]
      %v582 = vld [vmem:[%s526 + $0x8] sm:$0xff]
      %vm583 = vcmask 64512
      %v585 = vsel %vm583, %v581, 0
      %v588 = vsel %vm583, %v582, 0
      %590 = vmatprep.subr.mxu0 %v580
      %591 = vmatpush1.msra.mxu0 %v579
      %592 = vmatprep.subr.mxu0 0.0
      %593 = vmatpush1.msra.mxu0 0.0
      %594 = vmatprep.subr.mxu0 0.0
      %595 = vmatpush1.msra.mxu0 0.0
      %596 = vmatprep.subr.mxu0 0.0
      %597 = vmatpush1.msra.mxu0 0.0
      %598 = vmatprep.subr.mxu0 0.0
      %599 = vmatpush1.msra.mxu0 0.0
      %600 = vmatprep.subr.mxu0 0.0
      %601 = vmatpush1.msra.mxu0 0.0
      %602 = vmatprep.subr.mxu0 0.0
      %603 = vmatpush1.msra.mxu0 0.0
      %604 = vmatprep.subr.mxu0 0.0
      %605 = vmatpush1.msra.mxu0 0.0
      %606 = vmatprep.subr.mxu0 0.0
      %607 = vmatpush1.msra.mxu0 0.0
      %608 = vmatprep.subr.mxu0 0.0
      %609 = vmatpush1.msra.mxu0 0.0
      %610 = vmatprep.subr.mxu0 0.0
      %611 = vmatpush1.msra.mxu0 0.0
      %612 = vmatprep.subr.mxu0 0.0
      %613 = vmatpush1.msra.mxu0 0.0
      %614 = vmatprep.subr.mxu0 0.0
      %615 = vmatpush1.msra.mxu0 0.0
      %616 = vmatprep.subr.mxu0 0.0
      %617 = vmatpush1.msra.mxu0 0.0
      %618 = vmatprep.subr.mxu0 0.0
      %619 = vmatpush1.msra.mxu0 0.0
      %620 = vmatprep.subr.mxu0 0.0
      %621 = vmatpush1.msra.mxu0 0.0
      %622 = vmatprep.subr.mxu0 0.0
      %623 = vmatpush1.msra.mxu0 0.0
      %624 = vmatprep.subr.mxu0 0.0
      %625 = vmatpush1.msra.mxu0 0.0
      %626 = vmatprep.subr.mxu0 0.0
      %627 = vmatpush1.msra.mxu0 0.0
      %628 = vmatprep.subr.mxu0 0.0
      %629 = vmatpush1.msra.mxu0 0.0
      %630 = vmatprep.subr.mxu0 0.0
      %631 = vmatpush1.msra.mxu0 0.0
      %632 = vmatprep.subr.mxu0 0.0
      %633 = vmatpush1.msra.mxu0 0.0
      %634 = vmatprep.subr.mxu0 0.0
      %635 = vmatpush1.msra.mxu0 0.0
      %636 = vmatprep.subr.mxu0 0.0
      %637 = vmatpush1.msra.mxu0 0.0
      %638 = vmatprep.subr.mxu0 0.0
      %639 = vmatpush1.msra.mxu0 0.0
      %640 = vmatprep.subr.mxu0 0.0
      %641 = vmatpush1.msra.mxu0 0.0
      %642 = vmatprep.subr.mxu0 0.0
      %643 = vmatpush1.msra.mxu0 0.0
      %644 = vmatprep.subr.mxu0 0.0
      %645 = vmatpush1.msra.mxu0 0.0
      %646 = vmatprep.subr.mxu0 0.0
      %647 = vmatpush1.msra.mxu0 0.0
      %648 = vmatprep.subr.mxu0 0.0
      %649 = vmatpush1.msra.mxu0 0.0
      %650 = vmatprep.subr.mxu0 0.0
      %651 = vmatpush1.msra.mxu0 0.0
      %652 = vmatprep.subr.mxu0 0.0
      %653 = vmatpush1.msra.mxu0 0.0
      %654 = vmatprep.mubr.f32.mxu0 0.0
      %655 = vmatmul.mubr.f32.gmra.mrb[0].mxu0 %v585
      %v656 = vpop.f32.mrb[0].mxu0
      %v657 = vadd.f32 0.0, %v656
      %v658 = vpop.f32.mrb[0].mxu0
      %v659 = vadd.f32 0.0, %v658
      %660 = vmatprep.mubr.f32.mxu0 0.0
      %661 = vmatmul.mubr.f32.gmra.mrb[0].mxu0 %v588
      %v662 = vpop.f32.mrb[0].mxu0
      %v663 = vadd.f32 0.0, %v662
      %v664 = vpop.f32.mrb[0].mxu0
      %v665 = vadd.f32 0.0, %v664
      %666 = vdwg.mxu0
      %v667 = vld [vmem:[%s532] sm:$0xff]
      %v668 = vld [vmem:[%s532 + $0x8] sm:$0xff]
      %670 = vset.pattern.permute.xlu0 0
      %671 = vperm.xlu0 %670, %v667
      %v672 = vpop.permute.xlu0 %671
      %675 = vset.pattern.permute.xlu0 0
      %676 = vperm.xlu0 %675, %v668
      %v677 = vpop.permute.xlu0 %676
      %v679 = vmul.f32 %v657, %v672
      %v680 = vmul.f32 %v659, %v672
      %v681 = vmul.f32 %v663, %v677
      %v682 = vmul.f32 %v665, %v677
      %v683 = vld [vmem:[%s538] sm:$0xff]
      %v684 = vld [vmem:[%s538 + $0x8] sm:$0xff]
      %686 = vset.pattern.permute.xlu0 0
      %687 = vperm.xlu0 %686, %v683
      %v688 = vpop.permute.xlu0 %687
      %691 = vset.pattern.permute.xlu0 0
      %692 = vperm.xlu0 %691, %v684
      %v693 = vpop.permute.xlu0 %692
      %v695 = vadd.f32 %v679, %v688
      %v696 = vadd.f32 %v680, %v688
      %v697 = vadd.f32 %v681, %v693
      %v698 = vadd.f32 %v682, %v693
      %v699 = vxor.u32 %v695, 2147483648
      %v700 = vxor.u32 %v696, 2147483648
      %v701 = vxor.u32 %v697, 2147483648
      %v702 = vxor.u32 %v698, 2147483648
      %v703 = vmul.f32 %v699, 1.442695
      %v704 = vpow.pop %v703
      %v705 = vmul.f32 %v700, 1.442695
      %v706 = vpow.pop %v705
      %v707 = vmul.f32 %v701, 1.442695
      %v708 = vpow.pop %v707
      %v709 = vmul.f32 %v702, 1.442695
      %v710 = vpow.pop %v709
      %v711 = vadd.f32 %v704, 1.0
      %v712 = vadd.f32 %v706, 1.0
      %v713 = vadd.f32 %v708, 1.0
      %v714 = vadd.f32 %v710, 1.0
      %v715 = vrcp.pop %v711
      %v716 = vmul.f32 1.0, %v715
      %v717 = vrcp.pop %v712
      %v718 = vmul.f32 1.0, %v717
      %v719 = vrcp.pop %v713
      %v720 = vmul.f32 1.0, %v719
      %v721 = vrcp.pop %v714
      %v722 = vmul.f32 1.0, %v721
      %v723 = vmul.f32 %v695, %v716
      %v724 = vmul.f32 %v696, %v718
      %v725 = vmul.f32 %v697, %v720
      %v726 = vmul.f32 %v698, %v722
      %727 = vst [vmem:[#allocation2] sm:$0xff] 0.0
      %728 = vst [vmem:[#allocation2 + $0x20] sm:$0xff] 0.0
      %729 = vst [vmem:[#allocation2 + $0x18] sm:$0xff] 0.0
      %730 = vst [vmem:[#allocation2 + $0x38] sm:$0xff] 0.0
      %731 = vst [vmem:[#allocation2 + $0x8] sm:$0xff] %v723
      %732 = vst [vmem:[#allocation2 + $0x10] sm:$0xff] %v724
      %733 = vst [vmem:[#allocation2 + $0x28] sm:$0xff] %v725
      %734 = vst [vmem:[#allocation2 + $0x30] sm:$0xff] %v726
      %v735 = vlaneseq
      %v736 = vand.u32 %v735, 127
      %v737 = vadd.s32 %v736, 128
      %vm738 = vcmp.lt.s32.totalorder %v736, 0
      %v739 = vsub.s32 0, %v736
      %v740 = vsel %vm738, %v739, %v736
      %v741 = vshrl.u32 %v740, 4
      %v742 = vand.u32 %v740, 15
      %v743 = vsub.s32 0, %v742
      %v744 = vsel %vm738, %v743, %v742
      %vm745 = vcmp.lt.s32.totalorder %v737, 0
      %v746 = vsub.s32 0, %v737
      %v747 = vsel %vm745, %v746, %v737
      %v748 = vshrl.u32 %v747, 4
      %v749 = vand.u32 %v747, 15
      %v750 = vsub.s32 0, %v749
      %v751 = vsel %vm745, %v750, %v749
      %vm752 = vcmp.ne.s32.totalorder %v744, 0
      %vm753 = vcmp.ne.s32.totalorder %v751, 0
      %vm754 = vcmp.lt.s32.totalorder %v744, 0
      %vm755 = vcmp.lt.s32.totalorder %v751, 0
      %vm756 = vmand %vm754, %vm752
      %vm757 = vmand %vm755, %vm753
      %v758 = vadd.s32 %v744, 16
      %v759 = vadd.s32 %v751, 16
      %v760 = vsel %vm756, %v758, %v744
      %v761 = vsel %vm757, %v759, %v751
      %p762 = scmp.eq.s32.totalorder %s26, 0
      // Predicated region
      $region61: #{_lambda_.1} parent=59 // pred_check
        %p763 = pneg %p762
      $region62: #{_lambda_.1} parent=59 // pred_check_branch
        %765 = sbr.rel (%p763) target = $region64
      $region63: #{_lambda_.1} parent=59 // pred_region
        %v766 = vld [vmem:[#allocation2] sm:$0xff]
        %v767 = vld [vmem:[#allocation2 + $0x8] sm:$0xff]
        %v768 = vld [vmem:[#allocation2 + $0x10] sm:$0xff]
        %v769 = vld [vmem:[#allocation2 + $0x20] sm:$0xff]
        %v770 = vld [vmem:[#allocation2 + $0x28] sm:$0xff]
        %v771 = vld [vmem:[#allocation2 + $0x30] sm:$0xff]
        %v772 = vadd.s32 %v760, 4294967295
        %v773 = vadd.s32 %v761, 4294967295
        %vm774 = vcmp.ge.s32.totalorder %v772, 0
        %vm775 = vcmp.ge.s32.totalorder %v773, 0
        %vm776 = vcmp.lt.s32.totalorder %v772, 16
        %vm777 = vcmp.lt.s32.totalorder %v773, 16
        %vm778 = vmand %vm774, %vm776
        %vm779 = vmand %vm775, %vm777
        %v780 = vsel %vm778, 1, 0
        %v781 = vsel %vm779, 1, 0
        %vm782 = vcmp.eq.s32.totalorder %v780, 1
        %vm783 = vcmp.eq.s32.totalorder %v781, 1
        %790 = vrot.lane.b32.xlu0 %v766, 17
        %v791 = vpop.permute.xlu0 %790
        %792 = vrot.lane.b32.xlu0 %v767, 17
        %v793 = vpop.permute.xlu0 %792
        %794 = vrot.lane.b32.xlu0 %v768, 17
        %v795 = vpop.permute.xlu0 %794
        %796 = vrot.lane.b32.xlu0 %v769, 17
        %v797 = vpop.permute.xlu0 %796
        %798 = vrot.lane.b32.xlu0 %v770, 17
        %v799 = vpop.permute.xlu0 %798
        %800 = vrot.lane.b32.xlu0 %v771, 17
        %v801 = vpop.permute.xlu0 %800
        %vm802 = vcmask 138240
        %v803 = vsel %vm802, %v791, %v793
        %v804 = vsel %vm802, %v793, %v795
        %v805 = vsel %vm802, %v797, %v799
        %v806 = vsel %vm802, %v799, %v801
        %v811 = vsel %vm782, %v803, 0.0
        %v812 = vsel %vm783, %v804, 0.0
        %v813 = vsel %vm782, %v805, 0.0
        %v814 = vsel %vm783, %v806, 0.0
        %v815 = vld [vmem:[%s544] sm:$0xff]
        %v816 = vld [vmem:[%s544 + $0x8] sm:$0xff]
        %818 = vset.pattern.permute.xlu0 0
        %819 = vperm.xlu0 %818, %v815
        %v820 = vpop.permute.xlu0 %819
        %823 = vset.pattern.permute.xlu0 0
        %824 = vperm.xlu0 %823, %v816
        %v825 = vpop.permute.xlu0 %824
        %v827 = vmul.f32 %v811, %v820
        %v828 = vmul.f32 %v812, %v820
        %v829 = vmul.f32 %v813, %v825
        %v830 = vmul.f32 %v814, %v825
        %v831 = vadd.f32 %v827, 0.0
        %v832 = vadd.f32 %v828, 0.0
        %v833 = vadd.f32 %v829, 0.0
        %v834 = vadd.f32 %v830, 0.0
        %835 = vset.pattern.permute.xlu0 1
        %836 = vperm.xlu0 %835, %v815
        %v837 = vpop.permute.xlu0 %836
        %839 = vset.pattern.permute.xlu0 1
        %840 = vperm.xlu0 %839, %v816
        %v841 = vpop.permute.xlu0 %840
        %v843 = vmul.f32 %v766, %v837
        %v844 = vmul.f32 %v767, %v837
        %v845 = vmul.f32 %v768, %v837
        %v846 = vmul.f32 %v769, %v841
        %v847 = vmul.f32 %v770, %v841
        %v848 = vmul.f32 %v771, %v841
        %855 = vrot.lane.b32.xlu0 %v843, 16
        %v856 = vpop.permute.xlu0 %855
        %857 = vrot.lane.b32.xlu0 %v844, 16
        %v858 = vpop.permute.xlu0 %857
        %859 = vrot.lane.b32.xlu0 %v845, 16
        %v860 = vpop.permute.xlu0 %859
        %861 = vrot.lane.b32.xlu0 %v846, 16
        %v862 = vpop.permute.xlu0 %861
        %863 = vrot.lane.b32.xlu0 %v847, 16
        %v864 = vpop.permute.xlu0 %863
        %865 = vrot.lane.b32.xlu0 %v848, 16
        %v866 = vpop.permute.xlu0 %865
        %vm867 = vcmask 130048
        %v868 = vsel %vm867, %v856, %v858
        %v869 = vsel %vm867, %v858, %v860
        %v870 = vsel %vm867, %v862, %v864
        %v871 = vsel %vm867, %v864, %v866
        %v876 = vadd.f32 %v831, %v868
        %v877 = vadd.f32 %v832, %v869
        %v878 = vadd.f32 %v833, %v870
        %v879 = vadd.f32 %v834, %v871
        %v880 = vadd.s32 %v760, 1
        %v881 = vadd.s32 %v761, 1
        %vm882 = vcmp.ge.s32.totalorder %v880, 0
        %vm883 = vcmp.ge.s32.totalorder %v881, 0
        %vm884 = vcmp.lt.s32.totalorder %v880, 16
        %vm885 = vcmp.lt.s32.totalorder %v881, 16
        %vm886 = vmand %vm882, %vm884
        %vm887 = vmand %vm883, %vm885
        %v888 = vsel %vm886, 1, 0
        %v889 = vsel %vm887, 1, 0
        %vm890 = vcmp.eq.s32.totalorder %v888, 1
        %vm891 = vcmp.eq.s32.totalorder %v889, 1
        %892 = vrot.lane.b32.xlu0 %v766, 15
        %v893 = vpop.permute.xlu0 %892
        %894 = vrot.lane.b32.xlu0 %v767, 15
        %v895 = vpop.permute.xlu0 %894
        %896 = vrot.lane.b32.xlu0 %v768, 15
        %v897 = vpop.permute.xlu0 %896
        %898 = vrot.lane.b32.xlu0 %v769, 15
        %v899 = vpop.permute.xlu0 %898
        %900 = vrot.lane.b32.xlu0 %v770, 15
        %v901 = vpop.permute.xlu0 %900
        %902 = vrot.lane.b32.xlu0 %v771, 15
        %v903 = vpop.permute.xlu0 %902
        %vm904 = vcmask 121856
        %v905 = vsel %vm904, %v893, %v895
        %v906 = vsel %vm904, %v895, %v897
        %v907 = vsel %vm904, %v899, %v901
        %v908 = vsel %vm904, %v901, %v903
        %v913 = vsel %vm890, %v905, 0.0
        %v914 = vsel %vm891, %v906, 0.0
        %v915 = vsel %vm890, %v907, 0.0
        %v916 = vsel %vm891, %v908, 0.0
        %917 = vset.pattern.permute.xlu0 2
        %918 = vperm.xlu0 %917, %v815
        %v919 = vpop.permute.xlu0 %918
        %921 = vset.pattern.permute.xlu0 2
        %922 = vperm.xlu0 %921, %v816
        %v923 = vpop.permute.xlu0 %922
        %v925 = vmul.f32 %v913, %v919
        %v926 = vmul.f32 %v914, %v919
        %v927 = vmul.f32 %v915, %v923
        %v928 = vmul.f32 %v916, %v923
        %v929 = vadd.f32 %v876, %v925
        %v930 = vadd.f32 %v877, %v926
        %v931 = vadd.f32 %v878, %v927
        %v932 = vadd.f32 %v879, %v928
        %933 = vrot.lane.b32.xlu0 %v766, 1
        %v934 = vpop.permute.xlu0 %933
        %935 = vrot.lane.b32.xlu0 %v767, 1
        %v936 = vpop.permute.xlu0 %935
        %937 = vrot.lane.b32.xlu0 %v768, 1
        %v938 = vpop.permute.xlu0 %937
        %939 = vrot.lane.b32.xlu0 %v769, 1
        %v940 = vpop.permute.xlu0 %939
        %941 = vrot.lane.b32.xlu0 %v770, 1
        %v942 = vpop.permute.xlu0 %941
        %943 = vrot.lane.b32.xlu0 %v771, 1
        %v944 = vpop.permute.xlu0 %943
        %vm945 = vcmask 7168
        %v946 = vsel %vm945, %v934, %v936
        %v947 = vsel %vm945, %v936, %v938
        %v948 = vsel %vm945, %v940, %v942
        %v949 = vsel %vm945, %v942, %v944
        %v954 = vsel %vm782, %v946, 0.0
        %v955 = vsel %vm783, %v947, 0.0
        %v956 = vsel %vm782, %v948, 0.0
        %v957 = vsel %vm783, %v949, 0.0
        %958 = vset.pattern.permute.xlu0 3
        %959 = vperm.xlu0 %958, %v815
        %v960 = vpop.permute.xlu0 %959
        %962 = vset.pattern.permute.xlu0 3
        %963 = vperm.xlu0 %962, %v816
        %v964 = vpop.permute.xlu0 %963
        %v966 = vmul.f32 %v954, %v960
        %v967 = vmul.f32 %v955, %v960
        %v968 = vmul.f32 %v956, %v964
        %v969 = vmul.f32 %v957, %v964
        %v970 = vadd.f32 %v929, %v966
        %v971 = vadd.f32 %v930, %v967
        %v972 = vadd.f32 %v931, %v968
        %v973 = vadd.f32 %v932, %v969
        %974 = vset.pattern.permute.xlu0 4
        %975 = vperm.xlu0 %974, %v815
        %v976 = vpop.permute.xlu0 %975
        %978 = vset.pattern.permute.xlu0 4
        %979 = vperm.xlu0 %978, %v816
        %v980 = vpop.permute.xlu0 %979
        %v982 = vmul.f32 %v767, %v976
        %v983 = vmul.f32 %v768, %v976
        %v984 = vmul.f32 %v770, %v980
        %v985 = vmul.f32 %v771, %v980
        %v986 = vadd.f32 %v970, %v982
        %v987 = vadd.f32 %v971, %v983
        %v988 = vadd.f32 %v972, %v984
        %v989 = vadd.f32 %v973, %v985
        %v990 = vld [vmem:[#allocation2 + $0x8] sm:$0xff]
        %v991 = vld [vmem:[#allocation2 + $0x10] sm:$0xff]
        %v992 = vld [vmem:[#allocation2 + $0x18] sm:$0xff]
        %v993 = vld [vmem:[#allocation2 + $0x28] sm:$0xff]
        %v994 = vld [vmem:[#allocation2 + $0x30] sm:$0xff]
        %v995 = vld [vmem:[#allocation2 + $0x38] sm:$0xff]
        %1002 = vrot.lane.b32.xlu0 %v990, 127
        %v1003 = vpop.permute.xlu0 %1002
        %1004 = vrot.lane.b32.xlu0 %v991, 127
        %v1005 = vpop.permute.xlu0 %1004
        %1006 = vrot.lane.b32.xlu0 %v992, 127
        %v1007 = vpop.permute.xlu0 %1006
        %1008 = vrot.lane.b32.xlu0 %v993, 127
        %v1009 = vpop.permute.xlu0 %1008
        %1010 = vrot.lane.b32.xlu0 %v994, 127
        %v1011 = vpop.permute.xlu0 %1010
        %1012 = vrot.lane.b32.xlu0 %v995, 127
        %v1013 = vpop.permute.xlu0 %1012
        %vm1014 = vcmask 1039360
        %v1015 = vsel %vm1014, %v1003, %v1005
        %v1016 = vsel %vm1014, %v1005, %v1007
        %v1017 = vsel %vm1014, %v1009, %v1011
        %v1018 = vsel %vm1014, %v1011, %v1013
        %v1023 = vsel %vm890, %v1015, 0.0
        %v1024 = vsel %vm891, %v1016, 0.0
        %v1025 = vsel %vm890, %v1017, 0.0
        %v1026 = vsel %vm891, %v1018, 0.0
        %1027 = vset.pattern.permute.xlu0 5
        %1028 = vperm.xlu0 %1027, %v815
        %v1029 = vpop.permute.xlu0 %1028
        %1031 = vset.pattern.permute.xlu0 5
        %1032 = vperm.xlu0 %1031, %v816
        %v1033 = vpop.permute.xlu0 %1032
        %v1035 = vmul.f32 %v1023, %v1029
        %v1036 = vmul.f32 %v1024, %v1029
        %v1037 = vmul.f32 %v1025, %v1033
        %v1038 = vmul.f32 %v1026, %v1033
        %v1039 = vadd.f32 %v986, %v1035
        %v1040 = vadd.f32 %v987, %v1036
        %v1041 = vadd.f32 %v988, %v1037
        %v1042 = vadd.f32 %v989, %v1038
        %1043 = vrot.lane.b32.xlu0 %v990, 113
        %v1044 = vpop.permute.xlu0 %1043
        %1045 = vrot.lane.b32.xlu0 %v991, 113
        %v1046 = vpop.permute.xlu0 %1045
        %1047 = vrot.lane.b32.xlu0 %v992, 113
        %v1048 = vpop.permute.xlu0 %1047
        %1049 = vrot.lane.b32.xlu0 %v993, 113
        %v1050 = vpop.permute.xlu0 %1049
        %1051 = vrot.lane.b32.xlu0 %v994, 113
        %v1052 = vpop.permute.xlu0 %1051
        %1053 = vrot.lane.b32.xlu0 %v995, 113
        %v1054 = vpop.permute.xlu0 %1053
        %vm1055 = vcmask 924672
        %v1056 = vsel %vm1055, %v1044, %v1046
        %v1057 = vsel %vm1055, %v1046, %v1048
        %v1058 = vsel %vm1055, %v1050, %v1052
        %v1059 = vsel %vm1055, %v1052, %v1054
        %v1064 = vsel %vm782, %v1056, 0.0
        %v1065 = vsel %vm783, %v1057, 0.0
        %v1066 = vsel %vm782, %v1058, 0.0
        %v1067 = vsel %vm783, %v1059, 0.0
        %1068 = vset.pattern.permute.xlu0 6
        %1069 = vperm.xlu0 %1068, %v815
        %v1070 = vpop.permute.xlu0 %1069
        %1072 = vset.pattern.permute.xlu0 6
        %1073 = vperm.xlu0 %1072, %v816
        %v1074 = vpop.permute.xlu0 %1073
        %v1076 = vmul.f32 %v1064, %v1070
        %v1077 = vmul.f32 %v1065, %v1070
        %v1078 = vmul.f32 %v1066, %v1074
        %v1079 = vmul.f32 %v1067, %v1074
        %v1080 = vadd.f32 %v1039, %v1076
        %v1081 = vadd.f32 %v1040, %v1077
        %v1082 = vadd.f32 %v1041, %v1078
        %v1083 = vadd.f32 %v1042, %v1079
        %1084 = vset.pattern.permute.xlu0 7
        %1085 = vperm.xlu0 %1084, %v815
        %v1086 = vpop.permute.xlu0 %1085
        %1088 = vset.pattern.permute.xlu0 7
        %1089 = vperm.xlu0 %1088, %v816
        %v1090 = vpop.permute.xlu0 %1089
        %v1092 = vmul.f32 %v990, %v1086
        %v1093 = vmul.f32 %v991, %v1086
        %v1094 = vmul.f32 %v992, %v1086
        %v1095 = vmul.f32 %v993, %v1090
        %v1096 = vmul.f32 %v994, %v1090
        %v1097 = vmul.f32 %v995, %v1090
        %1104 = vrot.lane.b32.xlu0 %v1092, 112
        %v1105 = vpop.permute.xlu0 %1104
        %1106 = vrot.lane.b32.xlu0 %v1093, 112
        %v1107 = vpop.permute.xlu0 %1106
        %1108 = vrot.lane.b32.xlu0 %v1094, 112
        %v1109 = vpop.permute.xlu0 %1108
        %1110 = vrot.lane.b32.xlu0 %v1095, 112
        %v1111 = vpop.permute.xlu0 %1110
        %1112 = vrot.lane.b32.xlu0 %v1096, 112
        %v1113 = vpop.permute.xlu0 %1112
        %1114 = vrot.lane.b32.xlu0 %v1097, 112
        %v1115 = vpop.permute.xlu0 %1114
        %vm1116 = vcmask 916480
        %v1117 = vsel %vm1116, %v1105, %v1107
        %v1118 = vsel %vm1116, %v1107, %v1109
        %v1119 = vsel %vm1116, %v1111, %v1113
        %v1120 = vsel %vm1116, %v1113, %v1115
        %v1125 = vadd.f32 %v1080, %v1117
        %v1126 = vadd.f32 %v1081, %v1118
        %v1127 = vadd.f32 %v1082, %v1119
        %v1128 = vadd.f32 %v1083, %v1120
        %1129 = vrot.lane.b32.xlu0 %v990, 111
        %v1130 = vpop.permute.xlu0 %1129
        %1131 = vrot.lane.b32.xlu0 %v991, 111
        %v1132 = vpop.permute.xlu0 %1131
        %1133 = vrot.lane.b32.xlu0 %v992, 111
        %v1134 = vpop.permute.xlu0 %1133
        %1135 = vrot.lane.b32.xlu0 %v993, 111
        %v1136 = vpop.permute.xlu0 %1135
        %1137 = vrot.lane.b32.xlu0 %v994, 111
        %v1138 = vpop.permute.xlu0 %1137
        %1139 = vrot.lane.b32.xlu0 %v995, 111
        %v1140 = vpop.permute.xlu0 %1139
        %vm1141 = vcmask 908288
        %v1142 = vsel %vm1141, %v1130, %v1132
        %v1143 = vsel %vm1141, %v1132, %v1134
        %v1144 = vsel %vm1141, %v1136, %v1138
        %v1145 = vsel %vm1141, %v1138, %v1140
        %v1150 = vsel %vm890, %v1142, 0.0
        %v1151 = vsel %vm891, %v1143, 0.0
        %v1152 = vsel %vm890, %v1144, 0.0
        %v1153 = vsel %vm891, %v1145, 0.0
        %1154 = vset.pattern.permute.xlu0 8
        %1155 = vperm.xlu0 %1154, %v815
        %v1156 = vpop.permute.xlu0 %1155
        %1158 = vset.pattern.permute.xlu0 8
        %1159 = vperm.xlu0 %1158, %v816
        %v1160 = vpop.permute.xlu0 %1159
        %v1162 = vmul.f32 %v1150, %v1156
        %v1163 = vmul.f32 %v1151, %v1156
        %v1164 = vmul.f32 %v1152, %v1160
        %v1165 = vmul.f32 %v1153, %v1160
        %v1166 = vadd.f32 %v1125, %v1162
        %v1167 = vadd.f32 %v1126, %v1163
        %v1168 = vadd.f32 %v1127, %v1164
        %v1169 = vadd.f32 %v1128, %v1165
        %1170 = vst [vmem:[#allocation3] sm:$0xff] %v1166
        %1171 = vst [vmem:[#allocation3 + $0x8] sm:$0xff] %v1167
        %1172 = vst [vmem:[#allocation3 + $0x10] sm:$0xff] %v1168
        %1173 = vst [vmem:[#allocation3 + $0x18] sm:$0xff] %v1169
      $region64: #{_lambda_.1} parent=59 // pred_fallthru
        _
      %p1174 = scmp.eq.s32.totalorder %s26, 1
      // Predicated region
      $region65: #{_lambda_.1} parent=59 // pred_check
        %p1175 = pneg %p1174
      $region66: #{_lambda_.1} parent=59 // pred_check_branch
        %1177 = sbr.rel (%p1175) target = $region68
      $region67: #{_lambda_.1} parent=59 // pred_region
        %v1178 = vld [vmem:[#allocation2] sm:$0xff]
        %v1179 = vld [vmem:[#allocation2 + $0x8] sm:$0xff]
        %v1180 = vld [vmem:[#allocation2 + $0x10] sm:$0xff]
        %v1181 = vld [vmem:[#allocation2 + $0x20] sm:$0xff]
        %v1182 = vld [vmem:[#allocation2 + $0x28] sm:$0xff]
        %v1183 = vld [vmem:[#allocation2 + $0x30] sm:$0xff]
        %v1184 = vadd.s32 %v760, 4294967294
        %v1185 = vadd.s32 %v761, 4294967294
        %vm1186 = vcmp.ge.s32.totalorder %v1184, 0
        %vm1187 = vcmp.ge.s32.totalorder %v1185, 0
        %vm1188 = vcmp.lt.s32.totalorder %v1184, 16
        %vm1189 = vcmp.lt.s32.totalorder %v1185, 16
        %vm1190 = vmand %vm1186, %vm1188
        %vm1191 = vmand %vm1187, %vm1189
        %v1192 = vsel %vm1190, 1, 0
        %v1193 = vsel %vm1191, 1, 0
        %vm1194 = vcmp.eq.s32.totalorder %v1192, 1
        %vm1195 = vcmp.eq.s32.totalorder %v1193, 1
        %1202 = vrot.lane.b32.xlu0 %v1178, 34
        %v1203 = vpop.permute.xlu0 %1202
        %1204 = vrot.lane.b32.xlu0 %v1179, 34
        %v1205 = vpop.permute.xlu0 %1204
        %1206 = vrot.lane.b32.xlu0 %v1180, 34
        %v1207 = vpop.permute.xlu0 %1206
        %1208 = vrot.lane.b32.xlu0 %v1181, 34
        %v1209 = vpop.permute.xlu0 %1208
        %1210 = vrot.lane.b32.xlu0 %v1182, 34
        %v1211 = vpop.permute.xlu0 %1210
        %1212 = vrot.lane.b32.xlu0 %v1183, 34
        %v1213 = vpop.permute.xlu0 %1212
        %vm1214 = vcmask 277504
        %v1215 = vsel %vm1214, %v1203, %v1205
        %v1216 = vsel %vm1214, %v1205, %v1207
        %v1217 = vsel %vm1214, %v1209, %v1211
        %v1218 = vsel %vm1214, %v1211, %v1213
        %v1223 = vsel %vm1194, %v1215, 0.0
        %v1224 = vsel %vm1195, %v1216, 0.0
        %v1225 = vsel %vm1194, %v1217, 0.0
        %v1226 = vsel %vm1195, %v1218, 0.0
        %v1227 = vld [vmem:[%s544] sm:$0xff]
        %v1228 = vld [vmem:[%s544 + $0x8] sm:$0xff]
        %1230 = vset.pattern.permute.xlu0 0
        %1231 = vperm.xlu0 %1230, %v1227
        %v1232 = vpop.permute.xlu0 %1231
        %1235 = vset.pattern.permute.xlu0 0
        %1236 = vperm.xlu0 %1235, %v1228
        %v1237 = vpop.permute.xlu0 %1236
        %v1239 = vmul.f32 %v1223, %v1232
        %v1240 = vmul.f32 %v1224, %v1232
        %v1241 = vmul.f32 %v1225, %v1237
        %v1242 = vmul.f32 %v1226, %v1237
        %v1243 = vadd.f32 %v1239, 0.0
        %v1244 = vadd.f32 %v1240, 0.0
        %v1245 = vadd.f32 %v1241, 0.0
        %v1246 = vadd.f32 %v1242, 0.0
        %v1247 = vadd.s32 %v760, 4294967295
        %v1248 = vadd.s32 %v761, 4294967295
        %vm1249 = vcmp.ge.s32.totalorder %v1247, 0
        %vm1250 = vcmp.ge.s32.totalorder %v1248, 0
        %vm1251 = vcmp.lt.s32.totalorder %v1247, 16
        %vm1252 = vcmp.lt.s32.totalorder %v1248, 16
        %vm1253 = vmand %vm1249, %vm1251
        %vm1254 = vmand %vm1250, %vm1252
        %v1255 = vsel %vm1253, 1, 0
        %v1256 = vsel %vm1254, 1, 0
        %vm1257 = vcmp.eq.s32.totalorder %v1255, 1
        %vm1258 = vcmp.eq.s32.totalorder %v1256, 1
        %1259 = vrot.lane.b32.xlu0 %v1178, 33
        %v1260 = vpop.permute.xlu0 %1259
        %1261 = vrot.lane.b32.xlu0 %v1179, 33
        %v1262 = vpop.permute.xlu0 %1261
        %1263 = vrot.lane.b32.xlu0 %v1180, 33
        %v1264 = vpop.permute.xlu0 %1263
        %1265 = vrot.lane.b32.xlu0 %v1181, 33
        %v1266 = vpop.permute.xlu0 %1265
        %1267 = vrot.lane.b32.xlu0 %v1182, 33
        %v1268 = vpop.permute.xlu0 %1267
        %1269 = vrot.lane.b32.xlu0 %v1183, 33
        %v1270 = vpop.permute.xlu0 %1269
        %vm1271 = vcmask 269312
        %v1272 = vsel %vm1271, %v1260, %v1262
        %v1273 = vsel %vm1271, %v1262, %v1264
        %v1274 = vsel %vm1271, %v1266, %v1268
        %v1275 = vsel %vm1271, %v1268, %v1270
        %v1280 = vsel %vm1257, %v1272, 0.0
        %v1281 = vsel %vm1258, %v1273, 0.0
        %v1282 = vsel %vm1257, %v1274, 0.0
        %v1283 = vsel %vm1258, %v1275, 0.0
        %1284 = vset.pattern.permute.xlu0 1
        %1285 = vperm.xlu0 %1284, %v1227
        %v1286 = vpop.permute.xlu0 %1285
        %1288 = vset.pattern.permute.xlu0 1
        %1289 = vperm.xlu0 %1288, %v1228
        %v1290 = vpop.permute.xlu0 %1289
        %v1292 = vmul.f32 %v1280, %v1286
        %v1293 = vmul.f32 %v1281, %v1286
        %v1294 = vmul.f32 %v1282, %v1290
        %v1295 = vmul.f32 %v1283, %v1290
        %v1296 = vadd.f32 %v1243, %v1292
        %v1297 = vadd.f32 %v1244, %v1293
        %v1298 = vadd.f32 %v1245, %v1294
        %v1299 = vadd.f32 %v1246, %v1295
        %1300 = vset.pattern.permute.xlu0 2
        %1301 = vperm.xlu0 %1300, %v1227
        %v1302 = vpop.permute.xlu0 %1301
        %1304 = vset.pattern.permute.xlu0 2
        %1305 = vperm.xlu0 %1304, %v1228
        %v1306 = vpop.permute.xlu0 %1305
        %v1308 = vmul.f32 %v1178, %v1302
        %v1309 = vmul.f32 %v1179, %v1302
        %v1310 = vmul.f32 %v1180, %v1302
        %v1311 = vmul.f32 %v1181, %v1306
        %v1312 = vmul.f32 %v1182, %v1306
        %v1313 = vmul.f32 %v1183, %v1306
        %1320 = vrot.lane.b32.xlu0 %v1308, 32
        %v1321 = vpop.permute.xlu0 %1320
        %1322 = vrot.lane.b32.xlu0 %v1309, 32
        %v1323 = vpop.permute.xlu0 %1322
        %1324 = vrot.lane.b32.xlu0 %v1310, 32
        %v1325 = vpop.permute.xlu0 %1324
        %1326 = vrot.lane.b32.xlu0 %v1311, 32
        %v1327 = vpop.permute.xlu0 %1326
        %1328 = vrot.lane.b32.xlu0 %v1312, 32
        %v1329 = vpop.permute.xlu0 %1328
        %1330 = vrot.lane.b32.xlu0 %v1313, 32
        %v1331 = vpop.permute.xlu0 %1330
        %vm1332 = vcmask 261120
        %v1333 = vsel %vm1332, %v1321, %v1323
        %v1334 = vsel %vm1332, %v1323, %v1325
        %v1335 = vsel %vm1332, %v1327, %v1329
        %v1336 = vsel %vm1332, %v1329, %v1331
        %v1341 = vadd.f32 %v1296, %v1333
        %v1342 = vadd.f32 %v1297, %v1334
        %v1343 = vadd.f32 %v1298, %v1335
        %v1344 = vadd.f32 %v1299, %v1336
        %v1345 = vadd.s32 %v760, 1
        %v1346 = vadd.s32 %v761, 1
        %vm1347 = vcmp.ge.s32.totalorder %v1345, 0
        %vm1348 = vcmp.ge.s32.totalorder %v1346, 0
        %vm1349 = vcmp.lt.s32.totalorder %v1345, 16
        %vm1350 = vcmp.lt.s32.totalorder %v1346, 16
        %vm1351 = vmand %vm1347, %vm1349
        %vm1352 = vmand %vm1348, %vm1350
        %v1353 = vsel %vm1351, 1, 0
        %v1354 = vsel %vm1352, 1, 0
        %vm1355 = vcmp.eq.s32.totalorder %v1353, 1
        %vm1356 = vcmp.eq.s32.totalorder %v1354, 1
        %1357 = vrot.lane.b32.xlu0 %v1178, 31
        %v1358 = vpop.permute.xlu0 %1357
        %1359 = vrot.lane.b32.xlu0 %v1179, 31
        %v1360 = vpop.permute.xlu0 %1359
        %1361 = vrot.lane.b32.xlu0 %v1180, 31
        %v1362 = vpop.permute.xlu0 %1361
        %1363 = vrot.lane.b32.xlu0 %v1181, 31
        %v1364 = vpop.permute.xlu0 %1363
        %1365 = vrot.lane.b32.xlu0 %v1182, 31
        %v1366 = vpop.permute.xlu0 %1365
        %1367 = vrot.lane.b32.xlu0 %v1183, 31
        %v1368 = vpop.permute.xlu0 %1367
        %vm1369 = vcmask 252928
        %v1370 = vsel %vm1369, %v1358, %v1360
        %v1371 = vsel %vm1369, %v1360, %v1362
        %v1372 = vsel %vm1369, %v1364, %v1366
        %v1373 = vsel %vm1369, %v1366, %v1368
        %v1378 = vsel %vm1355, %v1370, 0.0
        %v1379 = vsel %vm1356, %v1371, 0.0
        %v1380 = vsel %vm1355, %v1372, 0.0
        %v1381 = vsel %vm1356, %v1373, 0.0
        %1382 = vset.pattern.permute.xlu0 3
        %1383 = vperm.xlu0 %1382, %v1227
        %v1384 = vpop.permute.xlu0 %1383
        %1386 = vset.pattern.permute.xlu0 3
        %1387 = vperm.xlu0 %1386, %v1228
        %v1388 = vpop.permute.xlu0 %1387
        %v1390 = vmul.f32 %v1378, %v1384
        %v1391 = vmul.f32 %v1379, %v1384
        %v1392 = vmul.f32 %v1380, %v1388
        %v1393 = vmul.f32 %v1381, %v1388
        %v1394 = vadd.f32 %v1341, %v1390
        %v1395 = vadd.f32 %v1342, %v1391
        %v1396 = vadd.f32 %v1343, %v1392
        %v1397 = vadd.f32 %v1344, %v1393
        %v1398 = vadd.s32 %v760, 2
        %v1399 = vadd.s32 %v761, 2
        %vm1400 = vcmp.ge.s32.totalorder %v1398, 0
        %vm1401 = vcmp.ge.s32.totalorder %v1399, 0
        %vm1402 = vcmp.lt.s32.totalorder %v1398, 16
        %vm1403 = vcmp.lt.s32.totalorder %v1399, 16
        %vm1404 = vmand %vm1400, %vm1402
        %vm1405 = vmand %vm1401, %vm1403
        %v1406 = vsel %vm1404, 1, 0
        %v1407 = vsel %vm1405, 1, 0
        %vm1408 = vcmp.eq.s32.totalorder %v1406, 1
        %vm1409 = vcmp.eq.s32.totalorder %v1407, 1
        %1410 = vrot.lane.b32.xlu0 %v1178, 30
        %v1411 = vpop.permute.xlu0 %1410
        %1412 = vrot.lane.b32.xlu0 %v1179, 30
        %v1413 = vpop.permute.xlu0 %1412
        %1414 = vrot.lane.b32.xlu0 %v1180, 30
        %v1415 = vpop.permute.xlu0 %1414
        %1416 = vrot.lane.b32.xlu0 %v1181, 30
        %v1417 = vpop.permute.xlu0 %1416
        %1418 = vrot.lane.b32.xlu0 %v1182, 30
        %v1419 = vpop.permute.xlu0 %1418
        %1420 = vrot.lane.b32.xlu0 %v1183, 30
        %v1421 = vpop.permute.xlu0 %1420
        %vm1422 = vcmask 244736
        %v1423 = vsel %vm1422, %v1411, %v1413
        %v1424 = vsel %vm1422, %v1413, %v1415
        %v1425 = vsel %vm1422, %v1417, %v1419
        %v1426 = vsel %vm1422, %v1419, %v1421
        %v1431 = vsel %vm1408, %v1423, 0.0
        %v1432 = vsel %vm1409, %v1424, 0.0
        %v1433 = vsel %vm1408, %v1425, 0.0
        %v1434 = vsel %vm1409, %v1426, 0.0
        %1435 = vset.pattern.permute.xlu0 4
        %1436 = vperm.xlu0 %1435, %v1227
        %v1437 = vpop.permute.xlu0 %1436
        %1439 = vset.pattern.permute.xlu0 4
        %1440 = vperm.xlu0 %1439, %v1228
        %v1441 = vpop.permute.xlu0 %1440
        %v1443 = vmul.f32 %v1431, %v1437
        %v1444 = vmul.f32 %v1432, %v1437
        %v1445 = vmul.f32 %v1433, %v1441
        %v1446 = vmul.f32 %v1434, %v1441
        %v1447 = vadd.f32 %v1394, %v1443
        %v1448 = vadd.f32 %v1395, %v1444
        %v1449 = vadd.f32 %v1396, %v1445
        %v1450 = vadd.f32 %v1397, %v1446
        %1451 = vrot.lane.b32.xlu0 %v1178, 18
        %v1452 = vpop.permute.xlu0 %1451
        %1453 = vrot.lane.b32.xlu0 %v1179, 18
        %v1454 = vpop.permute.xlu0 %1453
        %1455 = vrot.lane.b32.xlu0 %v1180, 18
        %v1456 = vpop.permute.xlu0 %1455
        %1457 = vrot.lane.b32.xlu0 %v1181, 18
        %v1458 = vpop.permute.xlu0 %1457
        %1459 = vrot.lane.b32.xlu0 %v1182, 18
        %v1460 = vpop.permute.xlu0 %1459
        %1461 = vrot.lane.b32.xlu0 %v1183, 18
        %v1462 = vpop.permute.xlu0 %1461
        %vm1463 = vcmask 146432
        %v1464 = vsel %vm1463, %v1452, %v1454
        %v1465 = vsel %vm1463, %v1454, %v1456
        %v1466 = vsel %vm1463, %v1458, %v1460
        %v1467 = vsel %vm1463, %v1460, %v1462
        %v1472 = vsel %vm1194, %v1464, 0.0
        %v1473 = vsel %vm1195, %v1465, 0.0
        %v1474 = vsel %vm1194, %v1466, 0.0
        %v1475 = vsel %vm1195, %v1467, 0.0
        %1476 = vset.pattern.permute.xlu0 5
        %1477 = vperm.xlu0 %1476, %v1227
        %v1478 = vpop.permute.xlu0 %1477
        %1480 = vset.pattern.permute.xlu0 5
        %1481 = vperm.xlu0 %1480, %v1228
        %v1482 = vpop.permute.xlu0 %1481
        %v1484 = vmul.f32 %v1472, %v1478
        %v1485 = vmul.f32 %v1473, %v1478
        %v1486 = vmul.f32 %v1474, %v1482
        %v1487 = vmul.f32 %v1475, %v1482
        %v1488 = vadd.f32 %v1447, %v1484
        %v1489 = vadd.f32 %v1448, %v1485
        %v1490 = vadd.f32 %v1449, %v1486
        %v1491 = vadd.f32 %v1450, %v1487
        %1492 = vrot.lane.b32.xlu0 %v1178, 17
        %v1493 = vpop.permute.xlu0 %1492
        %1494 = vrot.lane.b32.xlu0 %v1179, 17
        %v1495 = vpop.permute.xlu0 %1494
        %1496 = vrot.lane.b32.xlu0 %v1180, 17
        %v1497 = vpop.permute.xlu0 %1496
        %1498 = vrot.lane.b32.xlu0 %v1181, 17
        %v1499 = vpop.permute.xlu0 %1498
        %1500 = vrot.lane.b32.xlu0 %v1182, 17
        %v1501 = vpop.permute.xlu0 %1500
        %1502 = vrot.lane.b32.xlu0 %v1183, 17
        %v1503 = vpop.permute.xlu0 %1502
        %vm1504 = vcmask 138240
        %v1505 = vsel %vm1504, %v1493, %v1495
        %v1506 = vsel %vm1504, %v1495, %v1497
        %v1507 = vsel %vm1504, %v1499, %v1501
        %v1508 = vsel %vm1504, %v1501, %v1503
        %v1513 = vsel %vm1257, %v1505, 0.0
        %v1514 = vsel %vm1258, %v1506, 0.0
        %v1515 = vsel %vm1257, %v1507, 0.0
        %v1516 = vsel %vm1258, %v1508, 0.0
        %1517 = vset.pattern.permute.xlu0 6
        %1518 = vperm.xlu0 %1517, %v1227
        %v1519 = vpop.permute.xlu0 %1518
        %1521 = vset.pattern.permute.xlu0 6
        %1522 = vperm.xlu0 %1521, %v1228
        %v1523 = vpop.permute.xlu0 %1522
        %v1525 = vmul.f32 %v1513, %v1519
        %v1526 = vmul.f32 %v1514, %v1519
        %v1527 = vmul.f32 %v1515, %v1523
        %v1528 = vmul.f32 %v1516, %v1523
        %v1529 = vadd.f32 %v1488, %v1525
        %v1530 = vadd.f32 %v1489, %v1526
        %v1531 = vadd.f32 %v1490, %v1527
        %v1532 = vadd.f32 %v1491, %v1528
        %1533 = vset.pattern.permute.xlu0 7
        %1534 = vperm.xlu0 %1533, %v1227
        %v1535 = vpop.permute.xlu0 %1534
        %1537 = vset.pattern.permute.xlu0 7
        %1538 = vperm.xlu0 %1537, %v1228
        %v1539 = vpop.permute.xlu0 %1538
        %v1541 = vmul.f32 %v1178, %v1535
        %v1542 = vmul.f32 %v1179, %v1535
        %v1543 = vmul.f32 %v1180, %v1535
        %v1544 = vmul.f32 %v1181, %v1539
        %v1545 = vmul.f32 %v1182, %v1539
        %v1546 = vmul.f32 %v1183, %v1539
        %1553 = vrot.lane.b32.xlu0 %v1541, 16
        %v1554 = vpop.permute.xlu0 %1553
        %1555 = vrot.lane.b32.xlu0 %v1542, 16
        %v1556 = vpop.permute.xlu0 %1555
        %1557 = vrot.lane.b32.xlu0 %v1543, 16
        %v1558 = vpop.permute.xlu0 %1557
        %1559 = vrot.lane.b32.xlu0 %v1544, 16
        %v1560 = vpop.permute.xlu0 %1559
        %1561 = vrot.lane.b32.xlu0 %v1545, 16
        %v1562 = vpop.permute.xlu0 %1561
        %1563 = vrot.lane.b32.xlu0 %v1546, 16
        %v1564 = vpop.permute.xlu0 %1563
        %vm1565 = vcmask 130048
        %v1566 = vsel %vm1565, %v1554, %v1556
        %v1567 = vsel %vm1565, %v1556, %v1558
        %v1568 = vsel %vm1565, %v1560, %v1562
        %v1569 = vsel %vm1565, %v1562, %v1564
        %v1574 = vadd.f32 %v1529, %v1566
        %v1575 = vadd.f32 %v1530, %v1567
        %v1576 = vadd.f32 %v1531, %v1568
        %v1577 = vadd.f32 %v1532, %v1569
        %1578 = vrot.lane.b32.xlu0 %v1178, 15
        %v1579 = vpop.permute.xlu0 %1578
        %1580 = vrot.lane.b32.xlu0 %v1179, 15
        %v1581 = vpop.permute.xlu0 %1580
        %1582 = vrot.lane.b32.xlu0 %v1180, 15
        %v1583 = vpop.permute.xlu0 %1582
        %1584 = vrot.lane.b32.xlu0 %v1181, 15
        %v1585 = vpop.permute.xlu0 %1584
        %1586 = vrot.lane.b32.xlu0 %v1182, 15
        %v1587 = vpop.permute.xlu0 %1586
        %1588 = vrot.lane.b32.xlu0 %v1183, 15
        %v1589 = vpop.permute.xlu0 %1588
        %vm1590 = vcmask 121856
        %v1591 = vsel %vm1590, %v1579, %v1581
        %v1592 = vsel %vm1590, %v1581, %v1583
        %v1593 = vsel %vm1590, %v1585, %v1587
        %v1594 = vsel %vm1590, %v1587, %v1589
        %v1599 = vsel %vm1355, %v1591, 0.0
        %v1600 = vsel %vm1356, %v1592, 0.0
        %v1601 = vsel %vm1355, %v1593, 0.0
        %v1602 = vsel %vm1356, %v1594, 0.0
        %1603 = vset.pattern.permute.xlu0 8
        %1604 = vperm.xlu0 %1603, %v1227
        %v1605 = vpop.permute.xlu0 %1604
        %1607 = vset.pattern.permute.xlu0 8
        %1608 = vperm.xlu0 %1607, %v1228
        %v1609 = vpop.permute.xlu0 %1608
        %v1611 = vmul.f32 %v1599, %v1605
        %v1612 = vmul.f32 %v1600, %v1605
        %v1613 = vmul.f32 %v1601, %v1609
        %v1614 = vmul.f32 %v1602, %v1609
        %v1615 = vadd.f32 %v1574, %v1611
        %v1616 = vadd.f32 %v1575, %v1612
        %v1617 = vadd.f32 %v1576, %v1613
        %v1618 = vadd.f32 %v1577, %v1614
        %1619 = vrot.lane.b32.xlu0 %v1178, 14
        %v1620 = vpop.permute.xlu0 %1619
        %1621 = vrot.lane.b32.xlu0 %v1179, 14
        %v1622 = vpop.permute.xlu0 %1621
        %1623 = vrot.lane.b32.xlu0 %v1180, 14
        %v1624 = vpop.permute.xlu0 %1623
        %1625 = vrot.lane.b32.xlu0 %v1181, 14
        %v1626 = vpop.permute.xlu0 %1625
        %1627 = vrot.lane.b32.xlu0 %v1182, 14
        %v1628 = vpop.permute.xlu0 %1627
        %1629 = vrot.lane.b32.xlu0 %v1183, 14
        %v1630 = vpop.permute.xlu0 %1629
        %vm1631 = vcmask 113664
        %v1632 = vsel %vm1631, %v1620, %v1622
        %v1633 = vsel %vm1631, %v1622, %v1624
        %v1634 = vsel %vm1631, %v1626, %v1628
        %v1635 = vsel %vm1631, %v1628, %v1630
        %v1640 = vsel %vm1408, %v1632, 0.0
        %v1641 = vsel %vm1409, %v1633, 0.0
        %v1642 = vsel %vm1408, %v1634, 0.0
        %v1643 = vsel %vm1409, %v1635, 0.0
        %1644 = vset.pattern.permute.xlu0 9
        %1645 = vperm.xlu0 %1644, %v1227
        %v1646 = vpop.permute.xlu0 %1645
        %1648 = vset.pattern.permute.xlu0 9
        %1649 = vperm.xlu0 %1648, %v1228
        %v1650 = vpop.permute.xlu0 %1649
        %v1652 = vmul.f32 %v1640, %v1646
        %v1653 = vmul.f32 %v1641, %v1646
        %v1654 = vmul.f32 %v1642, %v1650
        %v1655 = vmul.f32 %v1643, %v1650
        %v1656 = vadd.f32 %v1615, %v1652
        %v1657 = vadd.f32 %v1616, %v1653
        %v1658 = vadd.f32 %v1617, %v1654
        %v1659 = vadd.f32 %v1618, %v1655
        %1660 = vrot.lane.b32.xlu0 %v1178, 2
        %v1661 = vpop.permute.xlu0 %1660
        %1662 = vrot.lane.b32.xlu0 %v1179, 2
        %v1663 = vpop.permute.xlu0 %1662
        %1664 = vrot.lane.b32.xlu0 %v1180, 2
        %v1665 = vpop.permute.xlu0 %1664
        %1666 = vrot.lane.b32.xlu0 %v1181, 2
        %v1667 = vpop.permute.xlu0 %1666
        %1668 = vrot.lane.b32.xlu0 %v1182, 2
        %v1669 = vpop.permute.xlu0 %1668
        %1670 = vrot.lane.b32.xlu0 %v1183, 2
        %v1671 = vpop.permute.xlu0 %1670
        %vm1672 = vcmask 15360
        %v1673 = vsel %vm1672, %v1661, %v1663
        %v1674 = vsel %vm1672, %v1663, %v1665
        %v1675 = vsel %vm1672, %v1667, %v1669
        %v1676 = vsel %vm1672, %v1669, %v1671
        %v1681 = vsel %vm1194, %v1673, 0.0
        %v1682 = vsel %vm1195, %v1674, 0.0
        %v1683 = vsel %vm1194, %v1675, 0.0
        %v1684 = vsel %vm1195, %v1676, 0.0
        %1685 = vset.pattern.permute.xlu0 10
        %1686 = vperm.xlu0 %1685, %v1227
        %v1687 = vpop.permute.xlu0 %1686
        %1689 = vset.pattern.permute.xlu0 10
        %1690 = vperm.xlu0 %1689, %v1228
        %v1691 = vpop.permute.xlu0 %1690
        %v1693 = vmul.f32 %v1681, %v1687
        %v1694 = vmul.f32 %v1682, %v1687
        %v1695 = vmul.f32 %v1683, %v1691
        %v1696 = vmul.f32 %v1684, %v1691
        %v1697 = vadd.f32 %v1656, %v1693
        %v1698 = vadd.f32 %v1657, %v1694
        %v1699 = vadd.f32 %v1658, %v1695
        %v1700 = vadd.f32 %v1659, %v1696
        %1701 = vrot.lane.b32.xlu0 %v1178, 1
        %v1702 = vpop.permute.xlu0 %1701
        %1703 = vrot.lane.b32.xlu0 %v1179, 1
        %v1704 = vpop.permute.xlu0 %1703
        %1705 = vrot.lane.b32.xlu0 %v1180, 1
        %v1706 = vpop.permute.xlu0 %1705
        %1707 = vrot.lane.b32.xlu0 %v1181, 1
        %v1708 = vpop.permute.xlu0 %1707
        %1709 = vrot.lane.b32.xlu0 %v1182, 1
        %v1710 = vpop.permute.xlu0 %1709
        %1711 = vrot.lane.b32.xlu0 %v1183, 1
        %v1712 = vpop.permute.xlu0 %1711
        %vm1713 = vcmask 7168
        %v1714 = vsel %vm1713, %v1702, %v1704
        %v1715 = vsel %vm1713, %v1704, %v1706
        %v1716 = vsel %vm1713, %v1708, %v1710
        %v1717 = vsel %vm1713, %v1710, %v1712
        %v1722 = vsel %vm1257, %v1714, 0.0
        %v1723 = vsel %vm1258, %v1715, 0.0
        %v1724 = vsel %vm1257, %v1716, 0.0
        %v1725 = vsel %vm1258, %v1717, 0.0
        %1726 = vset.pattern.permute.xlu0 11
        %1727 = vperm.xlu0 %1726, %v1227
        %v1728 = vpop.permute.xlu0 %1727
        %1730 = vset.pattern.permute.xlu0 11
        %1731 = vperm.xlu0 %1730, %v1228
        %v1732 = vpop.permute.xlu0 %1731
        %v1734 = vmul.f32 %v1722, %v1728
        %v1735 = vmul.f32 %v1723, %v1728
        %v1736 = vmul.f32 %v1724, %v1732
        %v1737 = vmul.f32 %v1725, %v1732
        %v1738 = vadd.f32 %v1697, %v1734
        %v1739 = vadd.f32 %v1698, %v1735
        %v1740 = vadd.f32 %v1699, %v1736
        %v1741 = vadd.f32 %v1700, %v1737
        %1742 = vset.pattern.permute.xlu0 12
        %1743 = vperm.xlu0 %1742, %v1227
        %v1744 = vpop.permute.xlu0 %1743
        %1746 = vset.pattern.permute.xlu0 12
        %1747 = vperm.xlu0 %1746, %v1228
        %v1748 = vpop.permute.xlu0 %1747
        %v1750 = vmul.f32 %v1179, %v1744
        %v1751 = vmul.f32 %v1180, %v1744
        %v1752 = vmul.f32 %v1182, %v1748
        %v1753 = vmul.f32 %v1183, %v1748
        %v1754 = vadd.f32 %v1738, %v1750
        %v1755 = vadd.f32 %v1739, %v1751
        %v1756 = vadd.f32 %v1740, %v1752
        %v1757 = vadd.f32 %v1741, %v1753
        %v1758 = vld [vmem:[#allocation2 + $0x8] sm:$0xff]
        %v1759 = vld [vmem:[#allocation2 + $0x10] sm:$0xff]
        %v1760 = vld [vmem:[#allocation2 + $0x18] sm:$0xff]
        %v1761 = vld [vmem:[#allocation2 + $0x28] sm:$0xff]
        %v1762 = vld [vmem:[#allocation2 + $0x30] sm:$0xff]
        %v1763 = vld [vmem:[#allocation2 + $0x38] sm:$0xff]
        %1770 = vrot.lane.b32.xlu0 %v1758, 127
        %v1771 = vpop.permute.xlu0 %1770
        %1772 = vrot.lane.b32.xlu0 %v1759, 127
        %v1773 = vpop.permute.xlu0 %1772
        %1774 = vrot.lane.b32.xlu0 %v1760, 127
        %v1775 = vpop.permute.xlu0 %1774
        %1776 = vrot.lane.b32.xlu0 %v1761, 127
        %v1777 = vpop.permute.xlu0 %1776
        %1778 = vrot.lane.b32.xlu0 %v1762, 127
        %v1779 = vpop.permute.xlu0 %1778
        %1780 = vrot.lane.b32.xlu0 %v1763, 127
        %v1781 = vpop.permute.xlu0 %1780
        %vm1782 = vcmask 1039360
        %v1783 = vsel %vm1782, %v1771, %v1773
        %v1784 = vsel %vm1782, %v1773, %v1775
        %v1785 = vsel %vm1782, %v1777, %v1779
        %v1786 = vsel %vm1782, %v1779, %v1781
        %v1791 = vsel %vm1355, %v1783, 0.0
        %v1792 = vsel %vm1356, %v1784, 0.0
        %v1793 = vsel %vm1355, %v1785, 0.0
        %v1794 = vsel %vm1356, %v1786, 0.0
        %1795 = vset.pattern.permute.xlu0 13
        %1796 = vperm.xlu0 %1795, %v1227
        %v1797 = vpop.permute.xlu0 %1796
        %1799 = vset.pattern.permute.xlu0 13
        %1800 = vperm.xlu0 %1799, %v1228
        %v1801 = vpop.permute.xlu0 %1800
        %v1803 = vmul.f32 %v1791, %v1797
        %v1804 = vmul.f32 %v1792, %v1797
        %v1805 = vmul.f32 %v1793, %v1801
        %v1806 = vmul.f32 %v1794, %v1801
        %v1807 = vadd.f32 %v1754, %v1803
        %v1808 = vadd.f32 %v1755, %v1804
        %v1809 = vadd.f32 %v1756, %v1805
        %v1810 = vadd.f32 %v1757, %v1806
        %1811 = vrot.lane.b32.xlu0 %v1758, 126
        %v1812 = vpop.permute.xlu0 %1811
        %1813 = vrot.lane.b32.xlu0 %v1759, 126
        %v1814 = vpop.permute.xlu0 %1813
        %1815 = vrot.lane.b32.xlu0 %v1760, 126
        %v1816 = vpop.permute.xlu0 %1815
        %1817 = vrot.lane.b32.xlu0 %v1761, 126
        %v1818 = vpop.permute.xlu0 %1817
        %1819 = vrot.lane.b32.xlu0 %v1762, 126
        %v1820 = vpop.permute.xlu0 %1819
        %1821 = vrot.lane.b32.xlu0 %v1763, 126
        %v1822 = vpop.permute.xlu0 %1821
        %vm1823 = vcmask 1031168
        %v1824 = vsel %vm1823, %v1812, %v1814
        %v1825 = vsel %vm1823, %v1814, %v1816
        %v1826 = vsel %vm1823, %v1818, %v1820
        %v1827 = vsel %vm1823, %v1820, %v1822
        %v1832 = vsel %vm1408, %v1824, 0.0
        %v1833 = vsel %vm1409, %v1825, 0.0
        %v1834 = vsel %vm1408, %v1826, 0.0
        %v1835 = vsel %vm1409, %v1827, 0.0
        %1836 = vset.pattern.permute.xlu0 14
        %1837 = vperm.xlu0 %1836, %v1227
        %v1838 = vpop.permute.xlu0 %1837
        %1840 = vset.pattern.permute.xlu0 14
        %1841 = vperm.xlu0 %1840, %v1228
        %v1842 = vpop.permute.xlu0 %1841
        %v1844 = vmul.f32 %v1832, %v1838
        %v1845 = vmul.f32 %v1833, %v1838
        %v1846 = vmul.f32 %v1834, %v1842
        %v1847 = vmul.f32 %v1835, %v1842
        %v1848 = vadd.f32 %v1807, %v1844
        %v1849 = vadd.f32 %v1808, %v1845
        %v1850 = vadd.f32 %v1809, %v1846
        %v1851 = vadd.f32 %v1810, %v1847
        %1852 = vrot.lane.b32.xlu0 %v1758, 114
        %v1853 = vpop.permute.xlu0 %1852
        %1854 = vrot.lane.b32.xlu0 %v1759, 114
        %v1855 = vpop.permute.xlu0 %1854
        %1856 = vrot.lane.b32.xlu0 %v1760, 114
        %v1857 = vpop.permute.xlu0 %1856
        %1858 = vrot.lane.b32.xlu0 %v1761, 114
        %v1859 = vpop.permute.xlu0 %1858
        %1860 = vrot.lane.b32.xlu0 %v1762, 114
        %v1861 = vpop.permute.xlu0 %1860
        %1862 = vrot.lane.b32.xlu0 %v1763, 114
        %v1863 = vpop.permute.xlu0 %1862
        %vm1864 = vcmask 932864
        %v1865 = vsel %vm1864, %v1853, %v1855
        %v1866 = vsel %vm1864, %v1855, %v1857
        %v1867 = vsel %vm1864, %v1859, %v1861
        %v1868 = vsel %vm1864, %v1861, %v1863
        %v1873 = vsel %vm1194, %v1865, 0.0
        %v1874 = vsel %vm1195, %v1866, 0.0
        %v1875 = vsel %vm1194, %v1867, 0.0
        %v1876 = vsel %vm1195, %v1868, 0.0
        %1877 = vset.pattern.permute.xlu0 15
        %1878 = vperm.xlu0 %1877, %v1227
        %v1879 = vpop.permute.xlu0 %1878
        %1881 = vset.pattern.permute.xlu0 15
        %1882 = vperm.xlu0 %1881, %v1228
        %v1883 = vpop.permute.xlu0 %1882
        %v1885 = vmul.f32 %v1873, %v1879
        %v1886 = vmul.f32 %v1874, %v1879
        %v1887 = vmul.f32 %v1875, %v1883
        %v1888 = vmul.f32 %v1876, %v1883
        %v1889 = vadd.f32 %v1848, %v1885
        %v1890 = vadd.f32 %v1849, %v1886
        %v1891 = vadd.f32 %v1850, %v1887
        %v1892 = vadd.f32 %v1851, %v1888
        %1893 = vrot.lane.b32.xlu0 %v1758, 113
        %v1894 = vpop.permute.xlu0 %1893
        %1895 = vrot.lane.b32.xlu0 %v1759, 113
        %v1896 = vpop.permute.xlu0 %1895
        %1897 = vrot.lane.b32.xlu0 %v1760, 113
        %v1898 = vpop.permute.xlu0 %1897
        %1899 = vrot.lane.b32.xlu0 %v1761, 113
        %v1900 = vpop.permute.xlu0 %1899
        %1901 = vrot.lane.b32.xlu0 %v1762, 113
        %v1902 = vpop.permute.xlu0 %1901
        %1903 = vrot.lane.b32.xlu0 %v1763, 113
        %v1904 = vpop.permute.xlu0 %1903
        %vm1905 = vcmask 924672
        %v1906 = vsel %vm1905, %v1894, %v1896
        %v1907 = vsel %vm1905, %v1896, %v1898
        %v1908 = vsel %vm1905, %v1900, %v1902
        %v1909 = vsel %vm1905, %v1902, %v1904
        %v1914 = vsel %vm1257, %v1906, 0.0
        %v1915 = vsel %vm1258, %v1907, 0.0
        %v1916 = vsel %vm1257, %v1908, 0.0
        %v1917 = vsel %vm1258, %v1909, 0.0
        %1918 = vset.pattern.permute.xlu0 16
        %1919 = vperm.xlu0 %1918, %v1227
        %v1920 = vpop.permute.xlu0 %1919
        %1922 = vset.pattern.permute.xlu0 16
        %1923 = vperm.xlu0 %1922, %v1228
        %v1924 = vpop.permute.xlu0 %1923
        %v1926 = vmul.f32 %v1914, %v1920
        %v1927 = vmul.f32 %v1915, %v1920
        %v1928 = vmul.f32 %v1916, %v1924
        %v1929 = vmul.f32 %v1917, %v1924
        %v1930 = vadd.f32 %v1889, %v1926
        %v1931 = vadd.f32 %v1890, %v1927
        %v1932 = vadd.f32 %v1891, %v1928
        %v1933 = vadd.f32 %v1892, %v1929
        %1934 = vset.pattern.permute.xlu0 17
        %1935 = vperm.xlu0 %1934, %v1227
        %v1936 = vpop.permute.xlu0 %1935
        %1938 = vset.pattern.permute.xlu0 17
        %1939 = vperm.xlu0 %1938, %v1228
        %v1940 = vpop.permute.xlu0 %1939
        %v1942 = vmul.f32 %v1758, %v1936
        %v1943 = vmul.f32 %v1759, %v1936
        %v1944 = vmul.f32 %v1760, %v1936
        %v1945 = vmul.f32 %v1761, %v1940
        %v1946 = vmul.f32 %v1762, %v1940
        %v1947 = vmul.f32 %v1763, %v1940
        %1954 = vrot.lane.b32.xlu0 %v1942, 112
        %v1955 = vpop.permute.xlu0 %1954
        %1956 = vrot.lane.b32.xlu0 %v1943, 112
        %v1957 = vpop.permute.xlu0 %1956
        %1958 = vrot.lane.b32.xlu0 %v1944, 112
        %v1959 = vpop.permute.xlu0 %1958
        %1960 = vrot.lane.b32.xlu0 %v1945, 112
        %v1961 = vpop.permute.xlu0 %1960
        %1962 = vrot.lane.b32.xlu0 %v1946, 112
        %v1963 = vpop.permute.xlu0 %1962
        %1964 = vrot.lane.b32.xlu0 %v1947, 112
        %v1965 = vpop.permute.xlu0 %1964
        %vm1966 = vcmask 916480
        %v1967 = vsel %vm1966, %v1955, %v1957
        %v1968 = vsel %vm1966, %v1957, %v1959
        %v1969 = vsel %vm1966, %v1961, %v1963
        %v1970 = vsel %vm1966, %v1963, %v1965
        %v1975 = vadd.f32 %v1930, %v1967
        %v1976 = vadd.f32 %v1931, %v1968
        %v1977 = vadd.f32 %v1932, %v1969
        %v1978 = vadd.f32 %v1933, %v1970
        %1979 = vrot.lane.b32.xlu0 %v1758, 111
        %v1980 = vpop.permute.xlu0 %1979
        %1981 = vrot.lane.b32.xlu0 %v1759, 111
        %v1982 = vpop.permute.xlu0 %1981
        %1983 = vrot.lane.b32.xlu0 %v1760, 111
        %v1984 = vpop.permute.xlu0 %1983
        %1985 = vrot.lane.b32.xlu0 %v1761, 111
        %v1986 = vpop.permute.xlu0 %1985
        %1987 = vrot.lane.b32.xlu0 %v1762, 111
        %v1988 = vpop.permute.xlu0 %1987
        %1989 = vrot.lane.b32.xlu0 %v1763, 111
        %v1990 = vpop.permute.xlu0 %1989
        %vm1991 = vcmask 908288
        %v1992 = vsel %vm1991, %v1980, %v1982
        %v1993 = vsel %vm1991, %v1982, %v1984
        %v1994 = vsel %vm1991, %v1986, %v1988
        %v1995 = vsel %vm1991, %v1988, %v1990
        %v2000 = vsel %vm1355, %v1992, 0.0
        %v2001 = vsel %vm1356, %v1993, 0.0
        %v2002 = vsel %vm1355, %v1994, 0.0
        %v2003 = vsel %vm1356, %v1995, 0.0
        %2004 = vset.pattern.permute.xlu0 18
        %2005 = vperm.xlu0 %2004, %v1227
        %v2006 = vpop.permute.xlu0 %2005
        %2008 = vset.pattern.permute.xlu0 18
        %2009 = vperm.xlu0 %2008, %v1228
        %v2010 = vpop.permute.xlu0 %2009
        %v2012 = vmul.f32 %v2000, %v2006
        %v2013 = vmul.f32 %v2001, %v2006
        %v2014 = vmul.f32 %v2002, %v2010
        %v2015 = vmul.f32 %v2003, %v2010
        %v2016 = vadd.f32 %v1975, %v2012
        %v2017 = vadd.f32 %v1976, %v2013
        %v2018 = vadd.f32 %v1977, %v2014
        %v2019 = vadd.f32 %v1978, %v2015
        %2020 = vrot.lane.b32.xlu0 %v1758, 110
        %v2021 = vpop.permute.xlu0 %2020
        %2022 = vrot.lane.b32.xlu0 %v1759, 110
        %v2023 = vpop.permute.xlu0 %2022
        %2024 = vrot.lane.b32.xlu0 %v1760, 110
        %v2025 = vpop.permute.xlu0 %2024
        %2026 = vrot.lane.b32.xlu0 %v1761, 110
        %v2027 = vpop.permute.xlu0 %2026
        %2028 = vrot.lane.b32.xlu0 %v1762, 110
        %v2029 = vpop.permute.xlu0 %2028
        %2030 = vrot.lane.b32.xlu0 %v1763, 110
        %v2031 = vpop.permute.xlu0 %2030
        %vm2032 = vcmask 900096
        %v2033 = vsel %vm2032, %v2021, %v2023
        %v2034 = vsel %vm2032, %v2023, %v2025
        %v2035 = vsel %vm2032, %v2027, %v2029
        %v2036 = vsel %vm2032, %v2029, %v2031
        %v2041 = vsel %vm1408, %v2033, 0.0
        %v2042 = vsel %vm1409, %v2034, 0.0
        %v2043 = vsel %vm1408, %v2035, 0.0
        %v2044 = vsel %vm1409, %v2036, 0.0
        %2045 = vset.pattern.permute.xlu0 19
        %2046 = vperm.xlu0 %2045, %v1227
        %v2047 = vpop.permute.xlu0 %2046
        %2049 = vset.pattern.permute.xlu0 19
        %2050 = vperm.xlu0 %2049, %v1228
        %v2051 = vpop.permute.xlu0 %2050
        %v2053 = vmul.f32 %v2041, %v2047
        %v2054 = vmul.f32 %v2042, %v2047
        %v2055 = vmul.f32 %v2043, %v2051
        %v2056 = vmul.f32 %v2044, %v2051
        %v2057 = vadd.f32 %v2016, %v2053
        %v2058 = vadd.f32 %v2017, %v2054
        %v2059 = vadd.f32 %v2018, %v2055
        %v2060 = vadd.f32 %v2019, %v2056
        %2061 = vrot.lane.b32.xlu0 %v1758, 98
        %v2062 = vpop.permute.xlu0 %2061
        %2063 = vrot.lane.b32.xlu0 %v1759, 98
        %v2064 = vpop.permute.xlu0 %2063
        %2065 = vrot.lane.b32.xlu0 %v1760, 98
        %v2066 = vpop.permute.xlu0 %2065
        %2067 = vrot.lane.b32.xlu0 %v1761, 98
        %v2068 = vpop.permute.xlu0 %2067
        %2069 = vrot.lane.b32.xlu0 %v1762, 98
        %v2070 = vpop.permute.xlu0 %2069
        %2071 = vrot.lane.b32.xlu0 %v1763, 98
        %v2072 = vpop.permute.xlu0 %2071
        %vm2073 = vcmask 801792
        %v2074 = vsel %vm2073, %v2062, %v2064
        %v2075 = vsel %vm2073, %v2064, %v2066
        %v2076 = vsel %vm2073, %v2068, %v2070
        %v2077 = vsel %vm2073, %v2070, %v2072
        %v2082 = vsel %vm1194, %v2074, 0.0
        %v2083 = vsel %vm1195, %v2075, 0.0
        %v2084 = vsel %vm1194, %v2076, 0.0
        %v2085 = vsel %vm1195, %v2077, 0.0
        %2086 = vset.pattern.permute.xlu0 20
        %2087 = vperm.xlu0 %2086, %v1227
        %v2088 = vpop.permute.xlu0 %2087
        %2090 = vset.pattern.permute.xlu0 20
        %2091 = vperm.xlu0 %2090, %v1228
        %v2092 = vpop.permute.xlu0 %2091
        %v2094 = vmul.f32 %v2082, %v2088
        %v2095 = vmul.f32 %v2083, %v2088
        %v2096 = vmul.f32 %v2084, %v2092
        %v2097 = vmul.f32 %v2085, %v2092
        %v2098 = vadd.f32 %v2057, %v2094
        %v2099 = vadd.f32 %v2058, %v2095
        %v2100 = vadd.f32 %v2059, %v2096
        %v2101 = vadd.f32 %v2060, %v2097
        %2102 = vrot.lane.b32.xlu0 %v1758, 97
        %v2103 = vpop.permute.xlu0 %2102
        %2104 = vrot.lane.b32.xlu0 %v1759, 97
        %v2105 = vpop.permute.xlu0 %2104
        %2106 = vrot.lane.b32.xlu0 %v1760, 97
        %v2107 = vpop.permute.xlu0 %2106
        %2108 = vrot.lane.b32.xlu0 %v1761, 97
        %v2109 = vpop.permute.xlu0 %2108
        %2110 = vrot.lane.b32.xlu0 %v1762, 97
        %v2111 = vpop.permute.xlu0 %2110
        %2112 = vrot.lane.b32.xlu0 %v1763, 97
        %v2113 = vpop.permute.xlu0 %2112
        %vm2114 = vcmask 793600
        %v2115 = vsel %vm2114, %v2103, %v2105
        %v2116 = vsel %vm2114, %v2105, %v2107
        %v2117 = vsel %vm2114, %v2109, %v2111
        %v2118 = vsel %vm2114, %v2111, %v2113
        %v2123 = vsel %vm1257, %v2115, 0.0
        %v2124 = vsel %vm1258, %v2116, 0.0
        %v2125 = vsel %vm1257, %v2117, 0.0
        %v2126 = vsel %vm1258, %v2118, 0.0
        %2127 = vset.pattern.permute.xlu0 21
        %2128 = vperm.xlu0 %2127, %v1227
        %v2129 = vpop.permute.xlu0 %2128
        %2131 = vset.pattern.permute.xlu0 21
        %2132 = vperm.xlu0 %2131, %v1228
        %v2133 = vpop.permute.xlu0 %2132
        %v2135 = vmul.f32 %v2123, %v2129
        %v2136 = vmul.f32 %v2124, %v2129
        %v2137 = vmul.f32 %v2125, %v2133
        %v2138 = vmul.f32 %v2126, %v2133
        %v2139 = vadd.f32 %v2098, %v2135
        %v2140 = vadd.f32 %v2099, %v2136
        %v2141 = vadd.f32 %v2100, %v2137
        %v2142 = vadd.f32 %v2101, %v2138
        %2143 = vset.pattern.permute.xlu0 22
        %2144 = vperm.xlu0 %2143, %v1227
        %v2145 = vpop.permute.xlu0 %2144
        %2147 = vset.pattern.permute.xlu0 22
        %2148 = vperm.xlu0 %2147, %v1228
        %v2149 = vpop.permute.xlu0 %2148
        %v2151 = vmul.f32 %v1758, %v2145
        %v2152 = vmul.f32 %v1759, %v2145
        %v2153 = vmul.f32 %v1760, %v2145
        %v2154 = vmul.f32 %v1761, %v2149
        %v2155 = vmul.f32 %v1762, %v2149
        %v2156 = vmul.f32 %v1763, %v2149
        %2163 = vrot.lane.b32.xlu0 %v2151, 96
        %v2164 = vpop.permute.xlu0 %2163
        %2165 = vrot.lane.b32.xlu0 %v2152, 96
        %v2166 = vpop.permute.xlu0 %2165
        %2167 = vrot.lane.b32.xlu0 %v2153, 96
        %v2168 = vpop.permute.xlu0 %2167
        %2169 = vrot.lane.b32.xlu0 %v2154, 96
        %v2170 = vpop.permute.xlu0 %2169
        %2171 = vrot.lane.b32.xlu0 %v2155, 96
        %v2172 = vpop.permute.xlu0 %2171
        %2173 = vrot.lane.b32.xlu0 %v2156, 96
        %v2174 = vpop.permute.xlu0 %2173
        %vm2175 = vcmask 785408
        %v2176 = vsel %vm2175, %v2164, %v2166
        %v2177 = vsel %vm2175, %v2166, %v2168
        %v2178 = vsel %vm2175, %v2170, %v2172
        %v2179 = vsel %vm2175, %v2172, %v2174
        %v2184 = vadd.f32 %v2139, %v2176
        %v2185 = vadd.f32 %v2140, %v2177
        %v2186 = vadd.f32 %v2141, %v2178
        %v2187 = vadd.f32 %v2142, %v2179
        %2188 = vrot.lane.b32.xlu0 %v1758, 95
        %v2189 = vpop.permute.xlu0 %2188
        %2190 = vrot.lane.b32.xlu0 %v1759, 95
        %v2191 = vpop.permute.xlu0 %2190
        %2192 = vrot.lane.b32.xlu0 %v1760, 95
        %v2193 = vpop.permute.xlu0 %2192
        %2194 = vrot.lane.b32.xlu0 %v1761, 95
        %v2195 = vpop.permute.xlu0 %2194
        %2196 = vrot.lane.b32.xlu0 %v1762, 95
        %v2197 = vpop.permute.xlu0 %2196
        %2198 = vrot.lane.b32.xlu0 %v1763, 95
        %v2199 = vpop.permute.xlu0 %2198
        %vm2200 = vcmask 777216
        %v2201 = vsel %vm2200, %v2189, %v2191
        %v2202 = vsel %vm2200, %v2191, %v2193
        %v2203 = vsel %vm2200, %v2195, %v2197
        %v2204 = vsel %vm2200, %v2197, %v2199
        %v2209 = vsel %vm1355, %v2201, 0.0
        %v2210 = vsel %vm1356, %v2202, 0.0
        %v2211 = vsel %vm1355, %v2203, 0.0
        %v2212 = vsel %vm1356, %v2204, 0.0
        %2213 = vset.pattern.permute.xlu0 23
        %2214 = vperm.xlu0 %2213, %v1227
        %v2215 = vpop.permute.xlu0 %2214
        %2217 = vset.pattern.permute.xlu0 23
        %2218 = vperm.xlu0 %2217, %v1228
        %v2219 = vpop.permute.xlu0 %2218
        %v2221 = vmul.f32 %v2209, %v2215
        %v2222 = vmul.f32 %v2210, %v2215
        %v2223 = vmul.f32 %v2211, %v2219
        %v2224 = vmul.f32 %v2212, %v2219
        %v2225 = vadd.f32 %v2184, %v2221
        %v2226 = vadd.f32 %v2185, %v2222
        %v2227 = vadd.f32 %v2186, %v2223
        %v2228 = vadd.f32 %v2187, %v2224
        %2229 = vrot.lane.b32.xlu0 %v1758, 94
        %v2230 = vpop.permute.xlu0 %2229
        %2231 = vrot.lane.b32.xlu0 %v1759, 94
        %v2232 = vpop.permute.xlu0 %2231
        %2233 = vrot.lane.b32.xlu0 %v1760, 94
        %v2234 = vpop.permute.xlu0 %2233
        %2235 = vrot.lane.b32.xlu0 %v1761, 94
        %v2236 = vpop.permute.xlu0 %2235
        %2237 = vrot.lane.b32.xlu0 %v1762, 94
        %v2238 = vpop.permute.xlu0 %2237
        %2239 = vrot.lane.b32.xlu0 %v1763, 94
        %v2240 = vpop.permute.xlu0 %2239
        %vm2241 = vcmask 769024
        %v2242 = vsel %vm2241, %v2230, %v2232
        %v2243 = vsel %vm2241, %v2232, %v2234
        %v2244 = vsel %vm2241, %v2236, %v2238
        %v2245 = vsel %vm2241, %v2238, %v2240
        %v2250 = vsel %vm1408, %v2242, 0.0
        %v2251 = vsel %vm1409, %v2243, 0.0
        %v2252 = vsel %vm1408, %v2244, 0.0
        %v2253 = vsel %vm1409, %v2245, 0.0
        %2254 = vset.pattern.permute.xlu0 24
        %2255 = vperm.xlu0 %2254, %v1227
        %v2256 = vpop.permute.xlu0 %2255
        %2258 = vset.pattern.permute.xlu0 24
        %2259 = vperm.xlu0 %2258, %v1228
        %v2260 = vpop.permute.xlu0 %2259
        %v2262 = vmul.f32 %v2250, %v2256
        %v2263 = vmul.f32 %v2251, %v2256
        %v2264 = vmul.f32 %v2252, %v2260
        %v2265 = vmul.f32 %v2253, %v2260
        %v2266 = vadd.f32 %v2225, %v2262
        %v2267 = vadd.f32 %v2226, %v2263
        %v2268 = vadd.f32 %v2227, %v2264
        %v2269 = vadd.f32 %v2228, %v2265
        %2270 = vst [vmem:[#allocation3] sm:$0xff] %v2266
        %2271 = vst [vmem:[#allocation3 + $0x8] sm:$0xff] %v2267
        %2272 = vst [vmem:[#allocation3 + $0x10] sm:$0xff] %v2268
        %2273 = vst [vmem:[#allocation3 + $0x18] sm:$0xff] %v2269
      $region68: #{_lambda_.1} parent=59 // pred_fallthru
        _
      %v2274 = vld [vmem:[#allocation3] sm:$0xff]
      %v2275 = vld [vmem:[#allocation3 + $0x8] sm:$0xff]
      %v2276 = vld [vmem:[#allocation3 + $0x10] sm:$0xff]
      %v2277 = vld [vmem:[#allocation3 + $0x18] sm:$0xff]
      %v2278 = vld [vmem:[%s550] sm:$0xff]
      %v2279 = vld [vmem:[%s550 + $0x8] sm:$0xff]
      %2281 = vset.pattern.permute.xlu0 0
      %2282 = vperm.xlu0 %2281, %v2278
      %v2283 = vpop.permute.xlu0 %2282
      %2286 = vset.pattern.permute.xlu0 0
      %2287 = vperm.xlu0 %2286, %v2279
      %v2288 = vpop.permute.xlu0 %2287
      %v2290 = vmul.f32 %v2274, %v2283
      %v2291 = vmul.f32 %v2275, %v2283
      %v2292 = vmul.f32 %v2276, %v2288
      %v2293 = vmul.f32 %v2277, %v2288
      %v2294 = vld [vmem:[%s556] sm:$0xff]
      %v2295 = vld [vmem:[%s556 + $0x8] sm:$0xff]
      %2297 = vset.pattern.permute.xlu0 0
      %2298 = vperm.xlu0 %2297, %v2294
      %v2299 = vpop.permute.xlu0 %2298
      %2302 = vset.pattern.permute.xlu0 0
      %2303 = vperm.xlu0 %2302, %v2295
      %v2304 = vpop.permute.xlu0 %2303
      %v2306 = vadd.f32 %v2290, %v2299
      %v2307 = vadd.f32 %v2291, %v2299
      %v2308 = vadd.f32 %v2292, %v2304
      %v2309 = vadd.f32 %v2293, %v2304
      %v2310 = vxor.u32 %v2306, 2147483648
      %v2311 = vxor.u32 %v2307, 2147483648
      %v2312 = vxor.u32 %v2308, 2147483648
      %v2313 = vxor.u32 %v2309, 2147483648
      %v2314 = vmul.f32 %v2310, 1.442695
      %v2315 = vpow.pop %v2314
      %v2316 = vmul.f32 %v2311, 1.442695
      %v2317 = vpow.pop %v2316
      %v2318 = vmul.f32 %v2312, 1.442695
      %v2319 = vpow.pop %v2318
      %v2320 = vmul.f32 %v2313, 1.442695
      %v2321 = vpow.pop %v2320
      %v2322 = vadd.f32 %v2315, 1.0
      %v2323 = vadd.f32 %v2317, 1.0
      %v2324 = vadd.f32 %v2319, 1.0
      %v2325 = vadd.f32 %v2321, 1.0
      %v2326 = vrcp.pop %v2322
      %v2327 = vmul.f32 1.0, %v2326
      %v2328 = vrcp.pop %v2323
      %v2329 = vmul.f32 1.0, %v2328
      %v2330 = vrcp.pop %v2324
      %v2331 = vmul.f32 1.0, %v2330
      %v2332 = vrcp.pop %v2325
      %v2333 = vmul.f32 1.0, %v2332
      %v2334 = vmul.f32 %v2306, %v2327
      %v2335 = vmul.f32 %v2307, %v2329
      %v2336 = vmul.f32 %v2308, %v2331
      %v2337 = vmul.f32 %v2309, %v2333
      %v2338 = vadd.f32 %v2334, %v2335
      %2339 = vadd.xlane.f32.xlu0 %v2338
      %v2340 = vpop.xlane.xlu0 %2339
      %v2341 = vadd.f32 %v2336, %v2337
      %2342 = vadd.xlane.f32.xlu0 %v2341
      %v2343 = vpop.xlane.xlu0 %2342
      %v2344 = vrcp.pop 256.0
      %v2345 = vmul.f32 %v2340, %v2344
      %v2346 = vmul.f32 %v2343, %v2344
      %v2347 = vmul.f32 %v2334, %v2345
      %v2348 = vmul.f32 %v2335, %v2345
      %v2349 = vmul.f32 %v2336, %v2346
      %v2350 = vmul.f32 %v2337, %v2346
      %v2351 = vld [vmem:[%s561] sm:$0xff]
      %vm2352 = vcmask 130048
      %v2354 = vsel %vm2352, %v2351, 0
      %2356 = vmatprep.subr.mxu0 %v2348
      %2357 = vmatpush1.msra.mxu0 %v2347
      %2358 = vmatprep.subr.mxu0 %v2350
      %2359 = vmatpush1.msra.mxu0 %v2349
      %2360 = vmatprep.subr.mxu0 0.0
      %2361 = vmatpush1.msra.mxu0 0.0
      %2362 = vmatprep.subr.mxu0 0.0
      %2363 = vmatpush1.msra.mxu0 0.0
      %2364 = vmatprep.subr.mxu0 0.0
      %2365 = vmatpush1.msra.mxu0 0.0
      %2366 = vmatprep.subr.mxu0 0.0
      %2367 = vmatpush1.msra.mxu0 0.0
      %2368 = vmatprep.subr.mxu0 0.0
      %2369 = vmatpush1.msra.mxu0 0.0
      %2370 = vmatprep.subr.mxu0 0.0
      %2371 = vmatpush1.msra.mxu0 0.0
      %2372 = vmatprep.subr.mxu0 0.0
      %2373 = vmatpush1.msra.mxu0 0.0
      %2374 = vmatprep.subr.mxu0 0.0
      %2375 = vmatpush1.msra.mxu0 0.0
      %2376 = vmatprep.subr.mxu0 0.0
      %2377 = vmatpush1.msra.mxu0 0.0
      %2378 = vmatprep.subr.mxu0 0.0
      %2379 = vmatpush1.msra.mxu0 0.0
      %2380 = vmatprep.subr.mxu0 0.0
      %2381 = vmatpush1.msra.mxu0 0.0
      %2382 = vmatprep.subr.mxu0 0.0
      %2383 = vmatpush1.msra.mxu0 0.0
      %2384 = vmatprep.subr.mxu0 0.0
      %2385 = vmatpush1.msra.mxu0 0.0
      %2386 = vmatprep.subr.mxu0 0.0
      %2387 = vmatpush1.msra.mxu0 0.0
      %2388 = vmatprep.subr.mxu0 0.0
      %2389 = vmatpush1.msra.mxu0 0.0
      %2390 = vmatprep.subr.mxu0 0.0
      %2391 = vmatpush1.msra.mxu0 0.0
      %2392 = vmatprep.subr.mxu0 0.0
      %2393 = vmatpush1.msra.mxu0 0.0
      %2394 = vmatprep.subr.mxu0 0.0
      %2395 = vmatpush1.msra.mxu0 0.0
      %2396 = vmatprep.subr.mxu0 0.0
      %2397 = vmatpush1.msra.mxu0 0.0
      %2398 = vmatprep.subr.mxu0 0.0
      %2399 = vmatpush1.msra.mxu0 0.0
      %2400 = vmatprep.subr.mxu0 0.0
      %2401 = vmatpush1.msra.mxu0 0.0
      %2402 = vmatprep.subr.mxu0 0.0
      %2403 = vmatpush1.msra.mxu0 0.0
      %2404 = vmatprep.subr.mxu0 0.0
      %2405 = vmatpush1.msra.mxu0 0.0
      %2406 = vmatprep.subr.mxu0 0.0
      %2407 = vmatpush1.msra.mxu0 0.0
      %2408 = vmatprep.subr.mxu0 0.0
      %2409 = vmatpush1.msra.mxu0 0.0
      %2410 = vmatprep.subr.mxu0 0.0
      %2411 = vmatpush1.msra.mxu0 0.0
      %2412 = vmatprep.subr.mxu0 0.0
      %2413 = vmatpush1.msra.mxu0 0.0
      %2414 = vmatprep.subr.mxu0 0.0
      %2415 = vmatpush1.msra.mxu0 0.0
      %2416 = vmatprep.subr.mxu0 0.0
      %2417 = vmatpush1.msra.mxu0 0.0
      %2418 = vmatprep.subr.mxu0 0.0
      %2419 = vmatpush1.msra.mxu0 0.0
      %2420 = vmatprep.mubr.f32.mxu0 0.0
      %2421 = vmatmul.mubr.f32.gmra.mrb[0].mxu0 %v2354
      %v2422 = vpop.f32.mrb[0].mxu0
      %v2423 = vadd.f32 0.0, %v2422
      %v2424 = vpop.f32.mrb[0].mxu0
      %v2425 = vadd.f32 0.0, %v2424
      %2426 = vdwg.mxu0
      %v2427 = vld [vmem:[%s565] sm:$0xff]
      %2429 = vset.pattern.permute.xlu0 0
      %2430 = vperm.xlu0 %2429, %v2427
      %v2431 = vpop.permute.xlu0 %2430
      %v2433 = vmul.f32 %v2423, %v2431
      %v2434 = vmul.f32 %v2425, %v2431
      %v2435 = vld [vmem:[%s569] sm:$0xff]
      %2437 = vset.pattern.permute.xlu0 0
      %2438 = vperm.xlu0 %2437, %v2435
      %v2439 = vpop.permute.xlu0 %2438
      %v2441 = vadd.f32 %v2433, %v2439
      %v2442 = vadd.f32 %v2434, %v2439
      %v2443 = vadd.f32 %v2441, %v579
      %v2444 = vadd.f32 %v2442, %v580
      %2445 = vst [vmem:[%s578] sm:$0xff] %v2443
      %2446 = vst [vmem:[%s578 + $0x8] sm:$0xff] %v2444
      %p2447 = scmp.lt.s32.totalorder %s25, 1
      %s2448 = scalar_select %p2447, %s25, 1
      %p2449 = scmp.lt.s32.totalorder %s26, 1
      %s2450 = scalar_select %p2449, %s26, 1
      %s2451 = smul.addr %s2450, 2
      %s2452 = smul.addr %s2448, 4
      %s2453 = sadd.s32 %s2451, %s2452
      %s2454 = smul.addr %s2453, 8
      %s2455 = scalar_lea.vmem %s10, %s2454
      // Predicated region
      $region69: #{_lambda_.1} parent=59 // pred_check
        %p2456 = pneg %p315
      $region70: #{_lambda_.1} parent=59 // pred_check_branch
        %2458 = sbr.rel (%p2456) target = $region72
      $region71: #{_lambda_.1} parent=59 // pred_region
        _
      $region72: #{_lambda_.1} parent=59 // pred_fallthru
        _
    $region60: #{_lambda_.1} parent=5 // pred_fallthru
      _
    %p2459 = scmp.le.s32.totalorder 2, %s16
    // Predicated region
    $region73: #{_lambda_.1} parent=5 // pred_check
      %p2460 = pneg %p2459
    $region74: #{_lambda_.1} parent=5 // pred_check_branch
      %2462 = sbr.rel (%p2460) target = $region76
    $region75: #{_lambda_.1} parent=5 // pred_region
      %s2463 = ssub.s32 %s16, 2
      // Predicated region
      $region77: #{_lambda_.1} parent=75 // pred_check
        %p2464 = pneg %p321
      $region78: #{_lambda_.1} parent=75 // pred_check_branch
        %2466 = sbr.rel (%p2464) target = $region80
      $region79: #{_lambda_.1} parent=75 // pred_region
        %p2467 = scmp.lt.s32.totalorder %s27, 1
        %s2468 = scalar_select %p2467, %s27, 1
        %p2469 = scmp.lt.s32.totalorder %s28, 1
        %s2470 = scalar_select %p2469, %s28, 1
        %s2471 = smul.addr %s2470, 2
        %s2472 = smul.addr %s2468, 4
        %s2473 = sadd.s32 %s2471, %s2472
        %s2474 = smul.addr %s2473, 8
        %s2475 = scalar_lea.vmem %s10, %s2474
      $region80: #{_lambda_.1} parent=75 // pred_fallthru
        _
    $region76: #{_lambda_.1} parent=5 // pred_fallthru
      _
  $region6: #{_lambda_.1} parent=0 // loop_footer
    %s20 = sadd.s32 1, %s16
  $region7: #{_lambda_.1} parent=0 // loop_footer_branch
    %15 = sbr.rel target = $region3
  $region8: #{_lambda_.1} parent=0 // loop_exit
    _

</llo_original>
